<compile_context>
chip_gen: v5e
topology: v5e:2x2
jax: 0.10.0
libtpu: 0.0.40
codegen_flags: <defaults>
</compile_context>

<pallas_src>
import math
from functools import partial

import jax
import jax.numpy as jnp
from jax import lax
from jax.experimental import pallas as pl
from jax.experimental.pallas import tpu as pltpu

EPS = 1e-6  # matches torchvision ViT: partial(nn.LayerNorm, eps=1e-6)


def _layernorm(v, w, b):
    # PyTorch LayerNorm: biased variance, eps inside rsqrt.
    mu = jnp.mean(v, axis=-1, keepdims=True)
    var = jnp.mean((v - mu) ** 2, axis=-1, keepdims=True)
    return (v - mu) * lax.rsqrt(var + EPS) * w + b


def _gelu_exact(x):
    # nn.GELU() default: exact erf-based GELU.
    return 0.5 * x * (1.0 + lax.erf(x / math.sqrt(2.0)))


def encoder_block_kernel(
    x_ref,                       # (1, TQ, D) fp32  query tile of the raw input
    k_ref, v_ref,                # (1, H, S_pad, dh) bf16, head-split K / V
    ln1w_ref, ln1b_ref,          # (1, D) fp32
    wq_ref, bq_ref,              # (D, D) bf16 (scale folded), (1, D) fp32
    wo_ref, bo_ref,              # (D, D) bf16, (1, D) fp32
    ln2w_ref, ln2b_ref,          # (1, D) fp32
    w1_ref, b1_ref,              # (D, M) bf16, (1, M) fp32
    w2_ref, b2_ref,              # (M, D) bf16, (1, D) fp32
    o_ref,                       # (1, TQ, D) fp32
    *,
    num_heads: int,
    seq_len: int,                # un-padded sequence length (for key masking)
):
    H = num_heads
    TQ, D = x_ref.shape[1], x_ref.shape[2]
    dh = D // H
    S = k_ref.shape[2]           # padded key length

    # ---- query path: LN1 + Q projection (1/sqrt(dh) folded into wq/bq) ----
    x_q = x_ref[0]                                                  # (TQ, D) fp32
    xq_n = _layernorm(x_q, ln1w_ref[...], ln1b_ref[...]).astype(jnp.bfloat16)
    q = jnp.dot(xq_n, wq_ref[...], preferred_element_type=jnp.float32) + bq_ref[...]
    q_h = q.astype(jnp.bfloat16).reshape(TQ, H, dh).transpose(1, 0, 2)  # (H, TQ, dh)

    # K / V already head-split by the wrapper: no per-tile relayout.
    k_h = k_ref[0]                                                  # (H, S, dh) bf16
    v_h = v_ref[0]                                                  # (H, S, dh) bf16

    # ---- batched-head attention ----
    s = jnp.einsum("hqd,hkd->hqk", q_h, k_h,
                   preferred_element_type=jnp.float32)              # (H, TQ, S) fp32
    if S > seq_len:  # static: mask padded keys out of the softmax
        key_idx = lax.broadcasted_iota(jnp.int32, (1, 1, S), 2)
        s = jnp.where(key_idx < seq_len, s, -1e30)
    s = s - jnp.max(s, axis=-1, keepdims=True)
    p = jnp.exp(s)
    l_inv = pl.reciprocal(jnp.sum(p, axis=-1, keepdims=True), approx=True)
    o_h = jnp.einsum("hqk,hkd->hqd", p.astype(jnp.bfloat16), v_h,
                     preferred_element_type=jnp.float32)            # (H, TQ, dh)
    o_h = o_h * l_inv                                               # fold 1/sum after PV

    attn = o_h.transpose(1, 0, 2).reshape(TQ, D).astype(jnp.bfloat16)
    attn = jnp.dot(attn, wo_ref[...], preferred_element_type=jnp.float32) + bo_ref[...]

    # TODO(synk): dropout / attention-dropout / MLP dropouts are identity (eval mode).
    x_res = attn + x_q                                              # residual 1, fp32

    # ---- MLP ----
    y = _layernorm(x_res, ln2w_ref[...], ln2b_ref[...]).astype(jnp.bfloat16)
    h1 = jnp.dot(y, w1_ref[...], preferred_element_type=jnp.float32) + b1_ref[...]
    h1 = _gelu_exact(h1).astype(jnp.bfloat16)
    y2 = jnp.dot(h1, w2_ref[...], preferred_element_type=jnp.float32) + b2_ref[...]

    o_ref[0] = (x_res + y2).astype(o_ref.dtype)


def _choose_tiles(S, H, *, max_tq=512, score_budget=8 * 1024 * 1024):
    """Pad the sequence to a sublane/lane-friendly length and pick a query tile
    such that the live fp32 score tensor H*TQ*S_pad*4 stays within budget."""
    if S >= 128:
        s_pad = pl.cdiv(S, 128) * 128
    else:
        s_pad = pl.cdiv(S, 8) * 8
    tq = None
    t = min(s_pad, max_tq)
    while t >= 8:
        if s_pad % t == 0 and H * t * s_pad * 4 <= score_budget:
            tq = t
            break
        t -= 8
    if tq is None:
        tq = 8 if s_pad % 8 == 0 else s_pad
    return s_pad, tq


def _vmem_limit_bytes():
    """~85% of physical VMEM (headroom for compiler scratch + per-step blocks):
    ~54 MiB on v7x (64 MiB parts), ~108 MiB on v5e/v6e (128 MiB parts)."""
    try:
        cap = int(pltpu.get_tpu_info().vmem_capacity_bytes)
    except Exception:
        return 64 * 1024 * 1024
    return int(min(cap - 8 * 1024 * 1024, cap * 85 // 100))


def encoder_block(x, params, num_heads):
    """x: (B, S, D) float32; params in PyTorch layout (see encoder_block_ref)."""
    (ln1w, ln1b, wqkv, bqkv, wo, bo, ln2w, ln2b, w1, b1, w2, b2) = params
    B, S, D = x.shape
    M = w1.shape[0]
    H = num_heads
    dh = D // H
    scale = 1.0 / math.sqrt(dh)

    S_pad, TQ = _choose_tiles(S, H)
    n_q = S_pad // TQ
    x_in = jnp.pad(x, ((0, 0), (0, S_pad - S), (0, 0))) if S_pad != S else x

    wdt = jnp.bfloat16
    # Pre-split q/k/v and pre-transpose every weight so the kernel does x @ w
    # in the MXU-natural layout; matmul weights stored bf16.  The softmax scale
    # 1/sqrt(dh) is folded into the Q projection.
    wq_t = (wqkv[:D].T * scale).astype(wdt)
    wk_t = wqkv[D:2 * D].T.astype(wdt)
    wv_t = wqkv[2 * D:].T.astype(wdt)
    bq = bqkv[:, :D] * scale
    bk, bv = bqkv[:, D:2 * D], bqkv[:, 2 * D:]
    wo_t = wo.T.astype(wdt)
    w1_t = w1.T.astype(wdt)
    w2_t = w2.T.astype(wdt)

    # K / V projection hoisted out of the kernel (one fused XLA matmul over the
    # whole batch), pre-split by head -> (B, H, S_pad, dh) bf16.  This removes
    # the in-kernel per-batch-row bubble / scratch carry and lets both grid
    # axes be megacore-parallel.
    xn = _layernorm(x_in, ln1w, ln1b).astype(wdt)
    k = jnp.einsum("bsd,de->bse", xn, wk_t, preferred_element_type=jnp.float32) + bk
    v = jnp.einsum("bsd,de->bse", xn, wv_t, preferred_element_type=jnp.float32) + bv
    k_bh = k.reshape(B, S_pad, H, dh).transpose(0, 2, 1, 3).astype(wdt)
    v_bh = v.reshape(B, S_pad, H, dh).transpose(0, 2, 1, 3).astype(wdt)

    kparams = [ln1w, ln1b, wq_t, bq, wo_t, bo, ln2w, ln2b, w1_t, b1, w2_t, b2]
    kernel = partial(encoder_block_kernel, num_heads=H, seq_len=S)

    flops = int(2 * B * S_pad * D * (2 * D + 2 * M) + 4 * B * S_pad * S_pad * D)
    transcendentals = int(B * S_pad * (H * S_pad + M))
    bytes_accessed = int(2 * B * S_pad * D * 4 + 2 * B * S_pad * D * 2
                         + sum(int(p.size) * p.dtype.itemsize for p in kparams))

    def run(single_buffer: bool):
        def sb_spec(shape, imap):
            # Blocks whose index never changes per step: single-buffer them.
            if single_buffer:
                return pl.BlockSpec(shape, imap, pipeline_mode=pl.Buffered(1))
            return pl.BlockSpec(shape, imap)

        in_specs = [
            pl.BlockSpec((1, TQ, D), lambda b, q: (b, q, 0)),          # x tile (pipelined)
            sb_spec((1, H, S_pad, dh), lambda b, q: (b, 0, 0, 0)),     # K (per batch row)
            sb_spec((1, H, S_pad, dh), lambda b, q: (b, 0, 0, 0)),     # V (per batch row)
        ]
        for p in kparams:
            in_specs.append(sb_spec(p.shape, lambda b, q, n=p.ndim: (0,) * n))

        return pl.pallas_call(
            kernel,
            out_shape=jax.ShapeDtypeStruct((B, S_pad, D), x.dtype),
            grid_spec=pltpu.PrefetchScalarGridSpec(
                num_scalar_prefetch=0,
                grid=(B, n_q),
                in_specs=in_specs,
                out_specs=pl.BlockSpec((1, TQ, D), lambda b, q: (b, q, 0)),
            ),
            compiler_params=pltpu.CompilerParams(
                dimension_semantics=("parallel", "parallel"),
                vmem_limit_bytes=_vmem_limit_bytes(),
            ),
            cost_estimate=pl.CostEstimate(
                flops=flops,
                transcendentals=transcendentals,
                bytes_accessed=bytes_accessed,
            ),
        )(x_in, k_bh, v_bh, *kparams)

    try:
        out = run(True)
    except Exception:
        # TODO(synk): pipeline_mode=pl.Buffered(1) not supported on this JAX
        # build; fall back to default double-buffering (correctness identical).
        out = run(False)

    return out[:, :S, :] if S_pad != S else out


# ---------------- pure-JAX reference (fp32, for correctness check) ----------------
def encoder_block_ref(x, params, num_heads):
    (ln1w, ln1b, wqkv, bqkv, wo, bo, ln2w, ln2b, w1, b1, w2, b2) = params
    B, S, D = x.shape
    dh = D // num_heads

    xn = _layernorm(x, ln1w, ln1b)
    qkv = jnp.einsum("bsd,ed->bse", xn, wqkv) + bqkv
    q, k, v = qkv[..., :D], qkv[..., D:2 * D], qkv[..., 2 * D:]

    def heads(t):
        return t.reshape(B, S, num_heads, dh).transpose(0, 2, 1, 3)

    qh, kh, vh = heads(q), heads(k), heads(v)
    s = jnp.einsum("bhqd,bhkd->bhqk", qh, kh) / math.sqrt(dh)
    p = jax.nn.softmax(s, axis=-1)
    o = jnp.einsum("bhqk,bhkd->bhqd", p, vh).transpose(0, 2, 1, 3).reshape(B, S, D)
    attn = jnp.einsum("bsd,ed->bse", o, wo) + bo
    xr = attn + x
    y = _layernorm(xr, ln2w, ln2b)
    h1 = _gelu_exact(jnp.einsum("bsd,md->bsm", y, w1) + b1)
    y2 = jnp.einsum("bsm,dm->bsd", h1, w2) + b2
    return xr + y2


if __name__ == "__main__":
    # Small synthetic shapes consistent with the module.
    B, S, D, H, M = 2, 8, 32, 4, 64

    key = jax.random.PRNGKey(0)
    ks = jax.random.split(key, 16)

    def rnd(k, shape, scale=0.1):
        return (scale * jax.random.normal(k, shape)).astype(jnp.float32)

    x = rnd(ks[0], (B, S, D), scale=1.0)

    params = [
        jnp.ones((1, D), jnp.float32),          # ln_1 weight
        jnp.zeros((1, D), jnp.float32),         # ln_1 bias
        rnd(ks[1], (3 * D, D)),                 # in_proj_weight
        rnd(ks[2], (1, 3 * D), 0.01),           # in_proj_bias
        rnd(ks[3], (D, D)),                     # out_proj.weight
        rnd(ks[4], (1, D), 0.01),               # out_proj.bias
        jnp.ones((1, D), jnp.float32),          # ln_2 weight
        jnp.zeros((1, D), jnp.float32),         # ln_2 bias
        rnd(ks[5], (M, D)),                     # mlp.linear_1.weight
        rnd(ks[6], (1, M), 1e-6),               # mlp.linear_1.bias
        rnd(ks[7], (D, M)),                     # mlp.linear_2.weight
        rnd(ks[8], (1, D), 1e-6),               # mlp.linear_2.bias
    ]

    out = jax.block_until_ready(encoder_block(x, params, num_heads=H))
    ref = encoder_block_ref(x, params, num_heads=H)
    assert out.shape == (B, S, D)
    err = float(jnp.max(jnp.abs(out - ref)))
    # bf16 matmul operands + approx softmax reciprocal -> loosened tolerance.
    assert err < 3e-2, f"mismatch vs fp32 reference: {err}"

    # Exercise the padded / masked-key path (S not a multiple of 8, e.g. ViT S=197).
    S2 = 10
    x2 = rnd(ks[9], (B, S2, D), scale=1.0)
    out2 = jax.block_until_ready(encoder_block(x2, params, num_heads=H))
    ref2 = encoder_block_ref(x2, params, num_heads=H)
    assert out2.shape == (B, S2, D)
    err2 = float(jnp.max(jnp.abs(out2 - ref2)))
    assert err2 < 3e-2, f"padded-path mismatch vs fp32 reference: {err2}"

    print("KERNEL_OK")
</pallas_src>

<mosaic_0001>
module attributes {stable_mosaic.version = 11 : i64} {
  func.func @encoder_block_kernel(%arg0: i32, %arg1: i32, %arg2: memref<1x8x32xf32, #tpu.memory_space<vmem>>, %arg3: memref<1x4x8x8xbf16, #tpu.memory_space<vmem>>, %arg4: memref<1x4x8x8xbf16, #tpu.memory_space<vmem>>, %arg5: memref<1x32xf32, #tpu.memory_space<vmem>>, %arg6: memref<1x32xf32, #tpu.memory_space<vmem>>, %arg7: memref<32x32xbf16, #tpu.memory_space<vmem>>, %arg8: memref<1x32xf32, #tpu.memory_space<vmem>>, %arg9: memref<32x32xbf16, #tpu.memory_space<vmem>>, %arg10: memref<1x32xf32, #tpu.memory_space<vmem>>, %arg11: memref<1x32xf32, #tpu.memory_space<vmem>>, %arg12: memref<1x32xf32, #tpu.memory_space<vmem>>, %arg13: memref<32x64xbf16, #tpu.memory_space<vmem>>, %arg14: memref<1x64xf32, #tpu.memory_space<vmem>>, %arg15: memref<64x32xbf16, #tpu.memory_space<vmem>>, %arg16: memref<1x32xf32, #tpu.memory_space<vmem>>, %arg17: memref<1x8x32xf32, #tpu.memory_space<vmem>>) attributes {dimension_semantics = [#tpu.dimension_semantics<parallel>, #tpu.dimension_semantics<parallel>], iteration_bounds = array<i64: 2, 1>, scalar_prefetch = 0 : i64, scratch_operands = 0 : i64, tpu.core_type = #tpu.core_type<tc>, window_params = [{transform_indices = @transform_0, window_bounds = array<i64: 1, 8, 32>}, {pipeline_mode = #tpu.pipeline_mode<synchronous>, transform_indices = @transform_1, window_bounds = array<i64: 1, 4, 8, 8>}, {pipeline_mode = #tpu.pipeline_mode<synchronous>, transform_indices = @transform_2, window_bounds = array<i64: 1, 4, 8, 8>}, {pipeline_mode = #tpu.pipeline_mode<synchronous>, transform_indices = @transform_3, window_bounds = array<i64: 1, 32>}, {pipeline_mode = #tpu.pipeline_mode<synchronous>, transform_indices = @transform_4, window_bounds = array<i64: 1, 32>}, {pipeline_mode = #tpu.pipeline_mode<synchronous>, transform_indices = @transform_5, window_bounds = array<i64: 32, 32>}, {pipeline_mode = #tpu.pipeline_mode<synchronous>, transform_indices = @transform_6, window_bounds = array<i64: 1, 32>}, {pipeline_mode = #tpu.pipeline_mode<synchronous>, transform_indices = @transform_7, window_bounds = array<i64: 32, 32>}, {pipeline_mode = #tpu.pipeline_mode<synchronous>, transform_indices = @transform_8, window_bounds = array<i64: 1, 32>}, {pipeline_mode = #tpu.pipeline_mode<synchronous>, transform_indices = @transform_9, window_bounds = array<i64: 1, 32>}, {pipeline_mode = #tpu.pipeline_mode<synchronous>, transform_indices = @transform_10, window_bounds = array<i64: 1, 32>}, {pipeline_mode = #tpu.pipeline_mode<synchronous>, transform_indices = @transform_11, window_bounds = array<i64: 32, 64>}, {pipeline_mode = #tpu.pipeline_mode<synchronous>, transform_indices = @transform_12, window_bounds = array<i64: 1, 64>}, {pipeline_mode = #tpu.pipeline_mode<synchronous>, transform_indices = @transform_13, window_bounds = array<i64: 64, 32>}, {pipeline_mode = #tpu.pipeline_mode<synchronous>, transform_indices = @transform_14, window_bounds = array<i64: 1, 32>}, {transform_indices = @transform_15, window_bounds = array<i64: 1, 8, 32>}]} {
    %c0 = arith.constant 0 : index
    %c0_0 = arith.constant 0 : index
    %c0_1 = arith.constant 0 : index
    %0 = vector.load %arg2[%c0, %c0_0, %c0_1] : memref<1x8x32xf32, #tpu.memory_space<vmem>>, vector<1x8x32xf32>
    %1 = vector.shape_cast %0 : vector<1x8x32xf32> to vector<8x32xf32>
    %c0_2 = arith.constant 0 : index
    %c0_3 = arith.constant 0 : index
    %2 = vector.load %arg5[%c0_2, %c0_3] : memref<1x32xf32, #tpu.memory_space<vmem>>, vector<1x32xf32>
    %c0_4 = arith.constant 0 : index
    %c0_5 = arith.constant 0 : index
    %3 = vector.load %arg6[%c0_4, %c0_5] : memref<1x32xf32, #tpu.memory_space<vmem>>, vector<1x32xf32>
    %cst = arith.constant dense<0.000000e+00> : vector<8xf32>
    %4 = vector.multi_reduction <add>, %1, %cst [1] : vector<8x32xf32> to vector<8xf32>
    %5 = vector.shape_cast %4 : vector<8xf32> to vector<8x1xf32>
    %cst_6 = arith.constant 3.200000e+01 : f32
    %6 = vector.broadcast %cst_6 : f32 to vector<8x1xf32>
    %7 = arith.divf %5, %6 : vector<8x1xf32>
    %8 = vector.broadcast %7 : vector<8x1xf32> to vector<8x32xf32>
    %9 = arith.subf %1, %8 : vector<8x32xf32>
    %10 = arith.mulf %9, %9 : vector<8x32xf32>
    %cst_7 = arith.constant dense<0.000000e+00> : vector<8xf32>
    %11 = vector.multi_reduction <add>, %10, %cst_7 [1] : vector<8x32xf32> to vector<8xf32>
    %12 = vector.shape_cast %11 : vector<8xf32> to vector<8x1xf32>
    %cst_8 = arith.constant 3.200000e+01 : f32
    %13 = vector.broadcast %cst_8 : f32 to vector<8x1xf32>
    %14 = arith.divf %12, %13 : vector<8x1xf32>
    %15 = vector.broadcast %7 : vector<8x1xf32> to vector<8x32xf32>
    %16 = arith.subf %1, %15 : vector<8x32xf32>
    %cst_9 = arith.constant 9.99999997E-7 : f32
    %17 = vector.broadcast %cst_9 : f32 to vector<8x1xf32>
    %18 = arith.addf %14, %17 : vector<8x1xf32>
    %19 = math.rsqrt %18 : vector<8x1xf32>
    %20 = vector.broadcast %19 : vector<8x1xf32> to vector<8x32xf32>
    %21 = arith.mulf %16, %20 : vector<8x32xf32>
    %22 = vector.broadcast %2 : vector<1x32xf32> to vector<8x32xf32>
    %23 = arith.mulf %21, %22 : vector<8x32xf32>
    %24 = vector.broadcast %3 : vector<1x32xf32> to vector<8x32xf32>
    %25 = arith.addf %23, %24 : vector<8x32xf32>
    %26 = arith.truncf %25 : vector<8x32xf32> to vector<8x32xbf16>
    %c0_10 = arith.constant 0 : index
    %c0_11 = arith.constant 0 : index
    %27 = vector.load %arg7[%c0_10, %c0_11] : memref<32x32xbf16, #tpu.memory_space<vmem>>, vector<32x32xbf16>
    %cst_12 = arith.constant dense<0.000000e+00> : vector<8x32xf32>
    %28 = tpu.matmul %26, %27, %cst_12 {dimension_numbers = #tpu.dot_dimension_numbers<[1], [0], [0], [1], [0, 0, 1, 1], [], []>} : vector<8x32xbf16>, vector<32x32xbf16>, vector<8x32xf32> -> vector<8x32xf32>
    %c0_13 = arith.constant 0 : index
    %c0_14 = arith.constant 0 : index
    %29 = vector.load %arg8[%c0_13, %c0_14] : memref<1x32xf32, #tpu.memory_space<vmem>>, vector<1x32xf32>
    %30 = vector.broadcast %29 : vector<1x32xf32> to vector<8x32xf32>
    %31 = arith.addf %28, %30 : vector<8x32xf32>
    %32 = arith.truncf %31 : vector<8x32xf32> to vector<8x32xbf16>
    %33 = vector.shape_cast %32 : vector<8x32xbf16> to vector<8x4x8xbf16>
    %34 = tpu.transpose %33, [1, 0, 2] : vector<8x4x8xbf16> -> vector<4x8x8xbf16>
    %c0_15 = arith.constant 0 : index
    %c0_16 = arith.constant 0 : index
    %c0_17 = arith.constant 0 : index
    %c0_18 = arith.constant 0 : index
    %35 = vector.load %arg3[%c0_15, %c0_16, %c0_17, %c0_18] : memref<1x4x8x8xbf16, #tpu.memory_space<vmem>>, vector<1x4x8x8xbf16>
    %36 = vector.shape_cast %35 : vector<1x4x8x8xbf16> to vector<4x8x8xbf16>
    %c0_19 = arith.constant 0 : index
    %c0_20 = arith.constant 0 : index
    %c0_21 = arith.constant 0 : index
    %c0_22 = arith.constant 0 : index
    %37 = vector.load %arg4[%c0_19, %c0_20, %c0_21, %c0_22] : memref<1x4x8x8xbf16, #tpu.memory_space<vmem>>, vector<1x4x8x8xbf16>
    %38 = vector.shape_cast %37 : vector<1x4x8x8xbf16> to vector<4x8x8xbf16>
    "tpu.trace_start"() <{level = 10 : i32, message = "hqd,hkd->hqk"}> : () -> ()
    %cst_23 = arith.constant dense<0.000000e+00> : vector<4x8x8xf32>
    %39 = tpu.matmul %34, %36, %cst_23 {dimension_numbers = #tpu.dot_dimension_numbers<[2], [2], [1], [1], [0, 0, 0, 1, 1, 1], [0], [0]>} : vector<4x8x8xbf16>, vector<4x8x8xbf16>, vector<4x8x8xf32> -> vector<4x8x8xf32>
    "tpu.trace_stop"() : () -> ()
    %cst_24 = arith.constant dense<0xFF800000> : vector<4x8xf32>
    %40 = vector.multi_reduction <maximumf>, %39, %cst_24 [2] : vector<4x8x8xf32> to vector<4x8xf32>
    %41 = vector.shape_cast %40 : vector<4x8xf32> to vector<4x8x1xf32>
    %42 = vector.broadcast %41 : vector<4x8x1xf32> to vector<4x8x8xf32>
    %43 = arith.subf %39, %42 : vector<4x8x8xf32>
    %44 = math.exp %43 : vector<4x8x8xf32>
    %cst_25 = arith.constant dense<0.000000e+00> : vector<4x8xf32>
    %45 = vector.multi_reduction <add>, %44, %cst_25 [2] : vector<4x8x8xf32> to vector<4x8xf32>
    %46 = vector.shape_cast %45 : vector<4x8xf32> to vector<4x8x1xf32>
    %47 = tpu.reciprocal %46 {approx = true} : vector<4x8x1xf32> -> vector<4x8x1xf32>
    %48 = arith.truncf %44 : vector<4x8x8xf32> to vector<4x8x8xbf16>
    "tpu.trace_start"() <{level = 10 : i32, message = "hqk,hkd->hqd"}> : () -> ()
    %cst_26 = arith.constant dense<0.000000e+00> : vector<4x8x8xf32>
    %49 = tpu.matmul %48, %38, %cst_26 {dimension_numbers = #tpu.dot_dimension_numbers<[2], [1], [1], [2], [0, 0, 0, 1, 1, 2], [0], [0]>} : vector<4x8x8xbf16>, vector<4x8x8xbf16>, vector<4x8x8xf32> -> vector<4x8x8xf32>
    "tpu.trace_stop"() : () -> ()
    %50 = vector.broadcast %47 : vector<4x8x1xf32> to vector<4x8x8xf32>
    %51 = arith.mulf %49, %50 : vector<4x8x8xf32>
    %52 = tpu.transpose %51, [1, 0, 2] : vector<4x8x8xf32> -> vector<8x4x8xf32>
    %53 = vector.shape_cast %52 : vector<8x4x8xf32> to vector<8x32xf32>
    %54 = arith.truncf %53 : vector<8x32xf32> to vector<8x32xbf16>
    %c0_27 = arith.constant 0 : index
    %c0_28 = arith.constant 0 : index
    %55 = vector.load %arg9[%c0_27, %c0_28] : memref<32x32xbf16, #tpu.memory_space<vmem>>, vector<32x32xbf16>
    %cst_29 = arith.constant dense<0.000000e+00> : vector<8x32xf32>
    %56 = tpu.matmul %54, %55, %cst_29 {dimension_numbers = #tpu.dot_dimension_numbers<[1], [0], [0], [1], [0, 0, 1, 1], [], []>} : vector<8x32xbf16>, vector<32x32xbf16>, vector<8x32xf32> -> vector<8x32xf32>
    %c0_30 = arith.constant 0 : index
    %c0_31 = arith.constant 0 : index
    %57 = vector.load %arg10[%c0_30, %c0_31] : memref<1x32xf32, #tpu.memory_space<vmem>>, vector<1x32xf32>
    %58 = vector.broadcast %57 : vector<1x32xf32> to vector<8x32xf32>
    %59 = arith.addf %56, %58 : vector<8x32xf32>
    %60 = arith.addf %59, %1 : vector<8x32xf32>
    %c0_32 = arith.constant 0 : index
    %c0_33 = arith.constant 0 : index
    %61 = vector.load %arg11[%c0_32, %c0_33] : memref<1x32xf32, #tpu.memory_space<vmem>>, vector<1x32xf32>
    %c0_34 = arith.constant 0 : index
    %c0_35 = arith.constant 0 : index
    %62 = vector.load %arg12[%c0_34, %c0_35] : memref<1x32xf32, #tpu.memory_space<vmem>>, vector<1x32xf32>
    %cst_36 = arith.constant dense<0.000000e+00> : vector<8xf32>
    %63 = vector.multi_reduction <add>, %60, %cst_36 [1] : vector<8x32xf32> to vector<8xf32>
    %64 = vector.shape_cast %63 : vector<8xf32> to vector<8x1xf32>
    %cst_37 = arith.constant 3.200000e+01 : f32
    %65 = vector.broadcast %cst_37 : f32 to vector<8x1xf32>
    %66 = arith.divf %64, %65 : vector<8x1xf32>
    %67 = vector.broadcast %66 : vector<8x1xf32> to vector<8x32xf32>
    %68 = arith.subf %60, %67 : vector<8x32xf32>
    %69 = arith.mulf %68, %68 : vector<8x32xf32>
    %cst_38 = arith.constant dense<0.000000e+00> : vector<8xf32>
    %70 = vector.multi_reduction <add>, %69, %cst_38 [1] : vector<8x32xf32> to vector<8xf32>
    %71 = vector.shape_cast %70 : vector<8xf32> to vector<8x1xf32>
    %cst_39 = arith.constant 3.200000e+01 : f32
    %72 = vector.broadcast %cst_39 : f32 to vector<8x1xf32>
    %73 = arith.divf %71, %72 : vector<8x1xf32>
    %74 = vector.broadcast %66 : vector<8x1xf32> to vector<8x32xf32>
    %75 = arith.subf %60, %74 : vector<8x32xf32>
    %cst_40 = arith.constant 9.99999997E-7 : f32
    %76 = vector.broadcast %cst_40 : f32 to vector<8x1xf32>
    %77 = arith.addf %73, %76 : vector<8x1xf32>
    %78 = math.rsqrt %77 : vector<8x1xf32>
    %79 = vector.broadcast %78 : vector<8x1xf32> to vector<8x32xf32>
    %80 = arith.mulf %75, %79 : vector<8x32xf32>
    %81 = vector.broadcast %61 : vector<1x32xf32> to vector<8x32xf32>
    %82 = arith.mulf %80, %81 : vector<8x32xf32>
    %83 = vector.broadcast %62 : vector<1x32xf32> to vector<8x32xf32>
    %84 = arith.addf %82, %83 : vector<8x32xf32>
    %85 = arith.truncf %84 : vector<8x32xf32> to vector<8x32xbf16>
    %c0_41 = arith.constant 0 : index
    %c0_42 = arith.constant 0 : index
    %86 = vector.load %arg13[%c0_41, %c0_42] : memref<32x64xbf16, #tpu.memory_space<vmem>>, vector<32x64xbf16>
    %cst_43 = arith.constant dense<0.000000e+00> : vector<8x64xf32>
    %87 = tpu.matmul %85, %86, %cst_43 {dimension_numbers = #tpu.dot_dimension_numbers<[1], [0], [0], [1], [0, 0, 1, 1], [], []>} : vector<8x32xbf16>, vector<32x64xbf16>, vector<8x64xf32> -> vector<8x64xf32>
    %c0_44 = arith.constant 0 : index
    %c0_45 = arith.constant 0 : index
    %88 = vector.load %arg14[%c0_44, %c0_45] : memref<1x64xf32, #tpu.memory_space<vmem>>, vector<1x64xf32>
    %89 = vector.broadcast %88 : vector<1x64xf32> to vector<8x64xf32>
    %90 = arith.addf %87, %89 : vector<8x64xf32>
    %cst_46 = arith.constant 5.000000e-01 : f32
    %91 = vector.broadcast %cst_46 : f32 to vector<8x64xf32>
    %92 = arith.mulf %91, %90 : vector<8x64xf32>
    %cst_47 = arith.constant 1.41421354 : f32
    %93 = vector.broadcast %cst_47 : f32 to vector<8x64xf32>
    %94 = arith.divf %90, %93 : vector<8x64xf32>
    %95 = math.erf %94 : vector<8x64xf32>
    %cst_48 = arith.constant 1.000000e+00 : f32
    %96 = vector.broadcast %cst_48 : f32 to vector<8x64xf32>
    %97 = arith.addf %96, %95 : vector<8x64xf32>
    %98 = arith.mulf %92, %97 : vector<8x64xf32>
    %99 = arith.truncf %98 : vector<8x64xf32> to vector<8x64xbf16>
    %c0_49 = arith.constant 0 : index
    %c0_50 = arith.constant 0 : index
    %100 = vector.load %arg15[%c0_49, %c0_50] : memref<64x32xbf16, #tpu.memory_space<vmem>>, vector<64x32xbf16>
    %cst_51 = arith.constant dense<0.000000e+00> : vector<8x32xf32>
    %101 = tpu.matmul %99, %100, %cst_51 {dimension_numbers = #tpu.dot_dimension_numbers<[1], [0], [0], [1], [0, 0, 1, 1], [], []>} : vector<8x64xbf16>, vector<64x32xbf16>, vector<8x32xf32> -> vector<8x32xf32>
    %c0_52 = arith.constant 0 : index
    %c0_53 = arith.constant 0 : index
    %102 = vector.load %arg16[%c0_52, %c0_53] : memref<1x32xf32, #tpu.memory_space<vmem>>, vector<1x32xf32>
    %103 = vector.broadcast %102 : vector<1x32xf32> to vector<8x32xf32>
    %104 = arith.addf %101, %103 : vector<8x32xf32>
    %105 = arith.addf %60, %104 : vector<8x32xf32>
    %c0_54 = arith.constant 0 : index
    %c0_55 = arith.constant 0 : index
    %c0_56 = arith.constant 0 : index
    %106 = vector.load %arg17[%c0_54, %c0_55, %c0_56] : memref<1x8x32xf32, #tpu.memory_space<vmem>>, vector<1x8x32xf32>
    %107 = vector.shape_cast %106 : vector<1x8x32xf32> to vector<8x32xf32>
    %108 = vector.shape_cast %105 : vector<8x32xf32> to vector<1x8x32xf32>
    tpu.vector_store %arg17[%c0_54, %c0_55, %c0_56], %108 {strides = array<i32>} : memref<1x8x32xf32, #tpu.memory_space<vmem>>, vector<1x8x32xf32>,
    return
  }
  func.func @transform_0(%arg0: i32, %arg1: i32) -> (i32, i32, i32) {
    %c0_i32 = arith.constant 0 : i32
    %c0_i32_0 = arith.constant 0 : i32
    return %arg0, %arg1, %c0_i32 : i32, i32, i32
  }
  func.func @transform_1(%arg0: i32, %arg1: i32) -> (i32, i32, i32, i32) {
    %c0_i32 = arith.constant 0 : i32
    %c0_i32_0 = arith.constant 0 : i32
    %c0_i32_1 = arith.constant 0 : i32
    %c0_i32_2 = arith.constant 0 : i32
    return %arg0, %c0_i32, %c0_i32_0, %c0_i32_1 : i32, i32, i32, i32
  }
  func.func @transform_2(%arg0: i32, %arg1: i32) -> (i32, i32, i32, i32) {
    %c0_i32 = arith.constant 0 : i32
    %c0_i32_0 = arith.constant 0 : i32
    %c0_i32_1 = arith.constant 0 : i32
    %c0_i32_2 = arith.constant 0 : i32
    return %arg0, %c0_i32, %c0_i32_0, %c0_i32_1 : i32, i32, i32, i32
  }
  func.func @transform_3(%arg0: i32, %arg1: i32) -> (i32, i32) {
    %c0_i32 = arith.constant 0 : i32
    %c0_i32_0 = arith.constant 0 : i32
    %c0_i32_1 = arith.constant 0 : i32
    return %c0_i32, %c0_i32_0 : i32, i32
  }
  func.func @transform_4(%arg0: i32, %arg1: i32) -> (i32, i32) {
    %c0_i32 = arith.constant 0 : i32
    %c0_i32_0 = arith.constant 0 : i32
    %c0_i32_1 = arith.constant 0 : i32
    return %c0_i32, %c0_i32_0 : i32, i32
  }
  func.func @transform_5(%arg0: i32, %arg1: i32) -> (i32, i32) {
    %c0_i32 = arith.constant 0 : i32
    %c0_i32_0 = arith.constant 0 : i32
    %c0_i32_1 = arith.constant 0 : i32
    return %c0_i32, %c0_i32_0 : i32, i32
  }
  func.func @transform_6(%arg0: i32, %arg1: i32) -> (i32, i32) {
    %c0_i32 = arith.constant 0 : i32
    %c0_i32_0 = arith.constant 0 : i32
    %c0_i32_1 = arith.constant 0 : i32
    return %c0_i32, %c0_i32_0 : i32, i32
  }
  func.func @transform_7(%arg0: i32, %arg1: i32) -> (i32, i32) {
    %c0_i32 = arith.constant 0 : i32
    %c0_i32_0 = arith.constant 0 : i32
    %c0_i32_1 = arith.constant 0 : i32
    return %c0_i32, %c0_i32_0 : i32, i32
  }
  func.func @transform_8(%arg0: i32, %arg1: i32) -> (i32, i32) {
    %c0_i32 = arith.constant 0 : i32
    %c0_i32_0 = arith.constant 0 : i32
    %c0_i32_1 = arith.constant 0 : i32
    return %c0_i32, %c0_i32_0 : i32, i32
  }
  func.func @transform_9(%arg0: i32, %arg1: i32) -> (i32, i32) {
    %c0_i32 = arith.constant 0 : i32
    %c0_i32_0 = arith.constant 0 : i32
    %c0_i32_1 = arith.constant 0 : i32
    return %c0_i32, %c0_i32_0 : i32, i32
  }
  func.func @transform_10(%arg0: i32, %arg1: i32) -> (i32, i32) {
    %c0_i32 = arith.constant 0 : i32
    %c0_i32_0 = arith.constant 0 : i32
    %c0_i32_1 = arith.constant 0 : i32
    return %c0_i32, %c0_i32_0 : i32, i32
  }
  func.func @transform_11(%arg0: i32, %arg1: i32) -> (i32, i32) {
    %c0_i32 = arith.constant 0 : i32
    %c0_i32_0 = arith.constant 0 : i32
    %c0_i32_1 = arith.constant 0 : i32
    return %c0_i32, %c0_i32_0 : i32, i32
  }
  func.func @transform_12(%arg0: i32, %arg1: i32) -> (i32, i32) {
    %c0_i32 = arith.constant 0 : i32
    %c0_i32_0 = arith.constant 0 : i32
    %c0_i32_1 = arith.constant 0 : i32
    return %c0_i32, %c0_i32_0 : i32, i32
  }
  func.func @transform_13(%arg0: i32, %arg1: i32) -> (i32, i32) {
    %c0_i32 = arith.constant 0 : i32
    %c0_i32_0 = arith.constant 0 : i32
    %c0_i32_1 = arith.constant 0 : i32
    return %c0_i32, %c0_i32_0 : i32, i32
  }
  func.func @transform_14(%arg0: i32, %arg1: i32) -> (i32, i32) {
    %c0_i32 = arith.constant 0 : i32
    %c0_i32_0 = arith.constant 0 : i32
    %c0_i32_1 = arith.constant 0 : i32
    return %c0_i32, %c0_i32_0 : i32, i32
  }
  func.func @transform_15(%arg0: i32, %arg1: i32) -> (i32, i32, i32) {
    %c0_i32 = arith.constant 0 : i32
    %c0_i32_0 = arith.constant 0 : i32
    return %arg0, %arg1, %c0_i32 : i32, i32, i32
  }
}

module attributes {stable_mosaic.version = 11 : i64} {
  func.func @encoder_block_kernel(%arg0: i32, %arg1: i32, %arg2: memref<1x8x32xf32, #tpu.memory_space<vmem>>, %arg3: memref<1x4x8x8xbf16, #tpu.memory_space<vmem>>, %arg4: memref<1x4x8x8xbf16, #tpu.memory_space<vmem>>, %arg5: memref<1x32xf32, #tpu.memory_space<vmem>>, %arg6: memref<1x32xf32, #tpu.memory_space<vmem>>, %arg7: memref<32x32xbf16, #tpu.memory_space<vmem>>, %arg8: memref<1x32xf32, #tpu.memory_space<vmem>>, %arg9: memref<32x32xbf16, #tpu.memory_space<vmem>>, %arg10: memref<1x32xf32, #tpu.memory_space<vmem>>, %arg11: memref<1x32xf32, #tpu.memory_space<vmem>>, %arg12: memref<1x32xf32, #tpu.memory_space<vmem>>, %arg13: memref<32x64xbf16, #tpu.memory_space<vmem>>, %arg14: memref<1x64xf32, #tpu.memory_space<vmem>>, %arg15: memref<64x32xbf16, #tpu.memory_space<vmem>>, %arg16: memref<1x32xf32, #tpu.memory_space<vmem>>, %arg17: memref<1x8x32xf32, #tpu.memory_space<vmem>>) attributes {dimension_semantics = [#tpu.dimension_semantics<parallel>, #tpu.dimension_semantics<parallel>], iteration_bounds = array<i64: 2, 1>, scalar_prefetch = 0 : i64, scratch_operands = 0 : i64, tpu.core_type = #tpu.core_type<tc>, window_params = [{transform_indices = @transform_0, window_bounds = array<i64: 1, 8, 32>}, {transform_indices = @transform_1, window_bounds = array<i64: 1, 4, 8, 8>}, {transform_indices = @transform_2, window_bounds = array<i64: 1, 4, 8, 8>}, {pipeline_mode = #tpu.pipeline_mode<synchronous>, transform_indices = @transform_3, window_bounds = array<i64: 1, 32>}, {pipeline_mode = #tpu.pipeline_mode<synchronous>, transform_indices = @transform_4, window_bounds = array<i64: 1, 32>}, {pipeline_mode = #tpu.pipeline_mode<synchronous>, transform_indices = @transform_5, window_bounds = array<i64: 32, 32>}, {pipeline_mode = #tpu.pipeline_mode<synchronous>, transform_indices = @transform_6, window_bounds = array<i64: 1, 32>}, {pipeline_mode = #tpu.pipeline_mode<synchronous>, transform_indices = @transform_7, window_bounds = array<i64: 32, 32>}, {pipeline_mode = #tpu.pipeline_mode<synchronous>, transform_indices = @transform_8, window_bounds = array<i64: 1, 32>}, {pipeline_mode = #tpu.pipeline_mode<synchronous>, transform_indices = @transform_9, window_bounds = array<i64: 1, 32>}, {pipeline_mode = #tpu.pipeline_mode<synchronous>, transform_indices = @transform_10, window_bounds = array<i64: 1, 32>}, {pipeline_mode = #tpu.pipeline_mode<synchronous>, transform_indices = @transform_11, window_bounds = array<i64: 32, 64>}, {pipeline_mode = #tpu.pipeline_mode<synchronous>, transform_indices = @transform_12, window_bounds = array<i64: 1, 64>}, {pipeline_mode = #tpu.pipeline_mode<synchronous>, transform_indices = @transform_13, window_bounds = array<i64: 64, 32>}, {pipeline_mode = #tpu.pipeline_mode<synchronous>, transform_indices = @transform_14, window_bounds = array<i64: 1, 32>}, {transform_indices = @transform_15, window_bounds = array<i64: 1, 8, 32>}]} {
    %c0 = arith.constant 0 : index
    %c0_0 = arith.constant 0 : index
    %c0_1 = arith.constant 0 : index
    %0 = vector.load %arg2[%c0, %c0_0, %c0_1] : memref<1x8x32xf32, #tpu.memory_space<vmem>>, vector<1x8x32xf32>
    %1 = vector.shape_cast %0 : vector<1x8x32xf32> to vector<8x32xf32>
    %c0_2 = arith.constant 0 : index
    %c0_3 = arith.constant 0 : index
    %2 = vector.load %arg5[%c0_2, %c0_3] : memref<1x32xf32, #tpu.memory_space<vmem>>, vector<1x32xf32>
    %c0_4 = arith.constant 0 : index
    %c0_5 = arith.constant 0 : index
    %3 = vector.load %arg6[%c0_4, %c0_5] : memref<1x32xf32, #tpu.memory_space<vmem>>, vector<1x32xf32>
    %cst = arith.constant dense<0.000000e+00> : vector<8xf32>
    %4 = vector.multi_reduction <add>, %1, %cst [1] : vector<8x32xf32> to vector<8xf32>
    %5 = vector.shape_cast %4 : vector<8xf32> to vector<8x1xf32>
    %cst_6 = arith.constant 3.200000e+01 : f32
    %6 = vector.broadcast %cst_6 : f32 to vector<8x1xf32>
    %7 = arith.divf %5, %6 : vector<8x1xf32>
    %8 = vector.broadcast %7 : vector<8x1xf32> to vector<8x32xf32>
    %9 = arith.subf %1, %8 : vector<8x32xf32>
    %10 = arith.mulf %9, %9 : vector<8x32xf32>
    %cst_7 = arith.constant dense<0.000000e+00> : vector<8xf32>
    %11 = vector.multi_reduction <add>, %10, %cst_7 [1] : vector<8x32xf32> to vector<8xf32>
    %12 = vector.shape_cast %11 : vector<8xf32> to vector<8x1xf32>
    %cst_8 = arith.constant 3.200000e+01 : f32
    %13 = vector.broadcast %cst_8 : f32 to vector<8x1xf32>
    %14 = arith.divf %12, %13 : vector<8x1xf32>
    %15 = vector.broadcast %7 : vector<8x1xf32> to vector<8x32xf32>
    %16 = arith.subf %1, %15 : vector<8x32xf32>
    %cst_9 = arith.constant 9.99999997E-7 : f32
    %17 = vector.broadcast %cst_9 : f32 to vector<8x1xf32>
    %18 = arith.addf %14, %17 : vector<8x1xf32>
    %19 = math.rsqrt %18 : vector<8x1xf32>
    %20 = vector.broadcast %19 : vector<8x1xf32> to vector<8x32xf32>
    %21 = arith.mulf %16, %20 : vector<8x32xf32>
    %22 = vector.broadcast %2 : vector<1x32xf32> to vector<8x32xf32>
    %23 = arith.mulf %21, %22 : vector<8x32xf32>
    %24 = vector.broadcast %3 : vector<1x32xf32> to vector<8x32xf32>
    %25 = arith.addf %23, %24 : vector<8x32xf32>
    %26 = arith.truncf %25 : vector<8x32xf32> to vector<8x32xbf16>
    %c0_10 = arith.constant 0 : index
    %c0_11 = arith.constant 0 : index
    %27 = vector.load %arg7[%c0_10, %c0_11] : memref<32x32xbf16, #tpu.memory_space<vmem>>, vector<32x32xbf16>
    %cst_12 = arith.constant dense<0.000000e+00> : vector<8x32xf32>
    %28 = tpu.matmul %26, %27, %cst_12 {dimension_numbers = #tpu.dot_dimension_numbers<[1], [0], [0], [1], [0, 0, 1, 1], [], []>} : vector<8x32xbf16>, vector<32x32xbf16>, vector<8x32xf32> -> vector<8x32xf32>
    %c0_13 = arith.constant 0 : index
    %c0_14 = arith.constant 0 : index
    %29 = vector.load %arg8[%c0_13, %c0_14] : memref<1x32xf32, #tpu.memory_space<vmem>>, vector<1x32xf32>
    %30 = vector.broadcast %29 : vector<1x32xf32> to vector<8x32xf32>
    %31 = arith.addf %28, %30 : vector<8x32xf32>
    %32 = arith.truncf %31 : vector<8x32xf32> to vector<8x32xbf16>
    %33 = vector.shape_cast %32 : vector<8x32xbf16> to vector<8x4x8xbf16>
    %34 = tpu.transpose %33, [1, 0, 2] : vector<8x4x8xbf16> -> vector<4x8x8xbf16>
    %c0_15 = arith.constant 0 : index
    %c0_16 = arith.constant 0 : index
    %c0_17 = arith.constant 0 : index
    %c0_18 = arith.constant 0 : index
    %35 = vector.load %arg3[%c0_15, %c0_16, %c0_17, %c0_18] : memref<1x4x8x8xbf16, #tpu.memory_space<vmem>>, vector<1x4x8x8xbf16>
    %36 = vector.shape_cast %35 : vector<1x4x8x8xbf16> to vector<4x8x8xbf16>
    %c0_19 = arith.constant 0 : index
    %c0_20 = arith.constant 0 : index
    %c0_21 = arith.constant 0 : index
    %c0_22 = arith.constant 0 : index
    %37 = vector.load %arg4[%c0_19, %c0_20, %c0_21, %c0_22] : memref<1x4x8x8xbf16, #tpu.memory_space<vmem>>, vector<1x4x8x8xbf16>
    %38 = vector.shape_cast %37 : vector<1x4x8x8xbf16> to vector<4x8x8xbf16>
    "tpu.trace_start"() <{level = 10 : i32, message = "hqd,hkd->hqk"}> : () -> ()
    %cst_23 = arith.constant dense<0.000000e+00> : vector<4x8x8xf32>
    %39 = tpu.matmul %34, %36, %cst_23 {dimension_numbers = #tpu.dot_dimension_numbers<[2], [2], [1], [1], [0, 0, 0, 1, 1, 1], [0], [0]>} : vector<4x8x8xbf16>, vector<4x8x8xbf16>, vector<4x8x8xf32> -> vector<4x8x8xf32>
    "tpu.trace_stop"() : () -> ()
    %cst_24 = arith.constant dense<0xFF800000> : vector<4x8xf32>
    %40 = vector.multi_reduction <maximumf>, %39, %cst_24 [2] : vector<4x8x8xf32> to vector<4x8xf32>
    %41 = vector.shape_cast %40 : vector<4x8xf32> to vector<4x8x1xf32>
    %42 = vector.broadcast %41 : vector<4x8x1xf32> to vector<4x8x8xf32>
    %43 = arith.subf %39, %42 : vector<4x8x8xf32>
    %44 = math.exp %43 : vector<4x8x8xf32>
    %cst_25 = arith.constant dense<0.000000e+00> : vector<4x8xf32>
    %45 = vector.multi_reduction <add>, %44, %cst_25 [2] : vector<4x8x8xf32> to vector<4x8xf32>
    %46 = vector.shape_cast %45 : vector<4x8xf32> to vector<4x8x1xf32>
    %47 = tpu.reciprocal %46 {approx = true} : vector<4x8x1xf32> -> vector<4x8x1xf32>
    %48 = arith.truncf %44 : vector<4x8x8xf32> to vector<4x8x8xbf16>
    "tpu.trace_start"() <{level = 10 : i32, message = "hqk,hkd->hqd"}> : () -> ()
    %cst_26 = arith.constant dense<0.000000e+00> : vector<4x8x8xf32>
    %49 = tpu.matmul %48, %38, %cst_26 {dimension_numbers = #tpu.dot_dimension_numbers<[2], [1], [1], [2], [0, 0, 0, 1, 1, 2], [0], [0]>} : vector<4x8x8xbf16>, vector<4x8x8xbf16>, vector<4x8x8xf32> -> vector<4x8x8xf32>
    "tpu.trace_stop"() : () -> ()
    %50 = vector.broadcast %47 : vector<4x8x1xf32> to vector<4x8x8xf32>
    %51 = arith.mulf %49, %50 : vector<4x8x8xf32>
    %52 = tpu.transpose %51, [1, 0, 2] : vector<4x8x8xf32> -> vector<8x4x8xf32>
    %53 = vector.shape_cast %52 : vector<8x4x8xf32> to vector<8x32xf32>
    %54 = arith.truncf %53 : vector<8x32xf32> to vector<8x32xbf16>
    %c0_27 = arith.constant 0 : index
    %c0_28 = arith.constant 0 : index
    %55 = vector.load %arg9[%c0_27, %c0_28] : memref<32x32xbf16, #tpu.memory_space<vmem>>, vector<32x32xbf16>
    %cst_29 = arith.constant dense<0.000000e+00> : vector<8x32xf32>
    %56 = tpu.matmul %54, %55, %cst_29 {dimension_numbers = #tpu.dot_dimension_numbers<[1], [0], [0], [1], [0, 0, 1, 1], [], []>} : vector<8x32xbf16>, vector<32x32xbf16>, vector<8x32xf32> -> vector<8x32xf32>
    %c0_30 = arith.constant 0 : index
    %c0_31 = arith.constant 0 : index
    %57 = vector.load %arg10[%c0_30, %c0_31] : memref<1x32xf32, #tpu.memory_space<vmem>>, vector<1x32xf32>
    %58 = vector.broadcast %57 : vector<1x32xf32> to vector<8x32xf32>
    %59 = arith.addf %56, %58 : vector<8x32xf32>
    %60 = arith.addf %59, %1 : vector<8x32xf32>
    %c0_32 = arith.constant 0 : index
    %c0_33 = arith.constant 0 : index
    %61 = vector.load %arg11[%c0_32, %c0_33] : memref<1x32xf32, #tpu.memory_space<vmem>>, vector<1x32xf32>
    %c0_34 = arith.constant 0 : index
    %c0_35 = arith.constant 0 : index
    %62 = vector.load %arg12[%c0_34, %c0_35] : memref<1x32xf32, #tpu.memory_space<vmem>>, vector<1x32xf32>
    %cst_36 = arith.constant dense<0.000000e+00> : vector<8xf32>
    %63 = vector.multi_reduction <add>, %60, %cst_36 [1] : vector<8x32xf32> to vector<8xf32>
    %64 = vector.shape_cast %63 : vector<8xf32> to vector<8x1xf32>
    %cst_37 = arith.constant 3.200000e+01 : f32
    %65 = vector.broadcast %cst_37 : f32 to vector<8x1xf32>
    %66 = arith.divf %64, %65 : vector<8x1xf32>
    %67 = vector.broadcast %66 : vector<8x1xf32> to vector<8x32xf32>
    %68 = arith.subf %60, %67 : vector<8x32xf32>
    %69 = arith.mulf %68, %68 : vector<8x32xf32>
    %cst_38 = arith.constant dense<0.000000e+00> : vector<8xf32>
    %70 = vector.multi_reduction <add>, %69, %cst_38 [1] : vector<8x32xf32> to vector<8xf32>
    %71 = vector.shape_cast %70 : vector<8xf32> to vector<8x1xf32>
    %cst_39 = arith.constant 3.200000e+01 : f32
    %72 = vector.broadcast %cst_39 : f32 to vector<8x1xf32>
    %73 = arith.divf %71, %72 : vector<8x1xf32>
    %74 = vector.broadcast %66 : vector<8x1xf32> to vector<8x32xf32>
    %75 = arith.subf %60, %74 : vector<8x32xf32>
    %cst_40 = arith.constant 9.99999997E-7 : f32
    %76 = vector.broadcast %cst_40 : f32 to vector<8x1xf32>
    %77 = arith.addf %73, %76 : vector<8x1xf32>
    %78 = math.rsqrt %77 : vector<8x1xf32>
    %79 = vector.broadcast %78 : vector<8x1xf32> to vector<8x32xf32>
    %80 = arith.mulf %75, %79 : vector<8x32xf32>
    %81 = vector.broadcast %61 : vector<1x32xf32> to vector<8x32xf32>
    %82 = arith.mulf %80, %81 : vector<8x32xf32>
    %83 = vector.broadcast %62 : vector<1x32xf32> to vector<8x32xf32>
    %84 = arith.addf %82, %83 : vector<8x32xf32>
    %85 = arith.truncf %84 : vector<8x32xf32> to vector<8x32xbf16>
    %c0_41 = arith.constant 0 : index
    %c0_42 = arith.constant 0 : index
    %86 = vector.load %arg13[%c0_41, %c0_42] : memref<32x64xbf16, #tpu.memory_space<vmem>>, vector<32x64xbf16>
    %cst_43 = arith.constant dense<0.000000e+00> : vector<8x64xf32>
    %87 = tpu.matmul %85, %86, %cst_43 {dimension_numbers = #tpu.dot_dimension_numbers<[1], [0], [0], [1], [0, 0, 1, 1], [], []>} : vector<8x32xbf16>, vector<32x64xbf16>, vector<8x64xf32> -> vector<8x64xf32>
    %c0_44 = arith.constant 0 : index
    %c0_45 = arith.constant 0 : index
    %88 = vector.load %arg14[%c0_44, %c0_45] : memref<1x64xf32, #tpu.memory_space<vmem>>, vector<1x64xf32>
    %89 = vector.broadcast %88 : vector<1x64xf32> to vector<8x64xf32>
    %90 = arith.addf %87, %89 : vector<8x64xf32>
    %cst_46 = arith.constant 5.000000e-01 : f32
    %91 = vector.broadcast %cst_46 : f32 to vector<8x64xf32>
    %92 = arith.mulf %91, %90 : vector<8x64xf32>
    %cst_47 = arith.constant 1.41421354 : f32
    %93 = vector.broadcast %cst_47 : f32 to vector<8x64xf32>
    %94 = arith.divf %90, %93 : vector<8x64xf32>
    %95 = math.erf %94 : vector<8x64xf32>
    %cst_48 = arith.constant 1.000000e+00 : f32
    %96 = vector.broadcast %cst_48 : f32 to vector<8x64xf32>
    %97 = arith.addf %96, %95 : vector<8x64xf32>
    %98 = arith.mulf %92, %97 : vector<8x64xf32>
    %99 = arith.truncf %98 : vector<8x64xf32> to vector<8x64xbf16>
    %c0_49 = arith.constant 0 : index
    %c0_50 = arith.constant 0 : index
    %100 = vector.load %arg15[%c0_49, %c0_50] : memref<64x32xbf16, #tpu.memory_space<vmem>>, vector<64x32xbf16>
    %cst_51 = arith.constant dense<0.000000e+00> : vector<8x32xf32>
    %101 = tpu.matmul %99, %100, %cst_51 {dimension_numbers = #tpu.dot_dimension_numbers<[1], [0], [0], [1], [0, 0, 1, 1], [], []>} : vector<8x64xbf16>, vector<64x32xbf16>, vector<8x32xf32> -> vector<8x32xf32>
    %c0_52 = arith.constant 0 : index
    %c0_53 = arith.constant 0 : index
    %102 = vector.load %arg16[%c0_52, %c0_53] : memref<1x32xf32, #tpu.memory_space<vmem>>, vector<1x32xf32>
    %103 = vector.broadcast %102 : vector<1x32xf32> to vector<8x32xf32>
    %104 = arith.addf %101, %103 : vector<8x32xf32>
    %105 = arith.addf %60, %104 : vector<8x32xf32>
    %c0_54 = arith.constant 0 : index
    %c0_55 = arith.constant 0 : index
    %c0_56 = arith.constant 0 : index
    %106 = vector.load %arg17[%c0_54, %c0_55, %c0_56] : memref<1x8x32xf32, #tpu.memory_space<vmem>>, vector<1x8x32xf32>
    %107 = vector.shape_cast %106 : vector<1x8x32xf32> to vector<8x32xf32>
    %108 = vector.shape_cast %105 : vector<8x32xf32> to vector<1x8x32xf32>
    tpu.vector_store %arg17[%c0_54, %c0_55, %c0_56], %108 {strides = array<i32>} : memref<1x8x32xf32, #tpu.memory_space<vmem>>, vector<1x8x32xf32>,
    return
  }
  func.func @transform_0(%arg0: i32, %arg1: i32) -> (i32, i32, i32) {
    %c0_i32 = arith.constant 0 : i32
    %c0_i32_0 = arith.constant 0 : i32
    return %arg0, %arg1, %c0_i32 : i32, i32, i32
  }
  func.func @transform_1(%arg0: i32, %arg1: i32) -> (i32, i32, i32, i32) {
    %c0_i32 = arith.constant 0 : i32
    %c0_i32_0 = arith.constant 0 : i32
    %c0_i32_1 = arith.constant 0 : i32
    %c0_i32_2 = arith.constant 0 : i32
    return %arg0, %c0_i32, %c0_i32_0, %c0_i32_1 : i32, i32, i32, i32
  }
  func.func @transform_2(%arg0: i32, %arg1: i32) -> (i32, i32, i32, i32) {
    %c0_i32 = arith.constant 0 : i32
    %c0_i32_0 = arith.constant 0 : i32
    %c0_i32_1 = arith.constant 0 : i32
    %c0_i32_2 = arith.constant 0 : i32
    return %arg0, %c0_i32, %c0_i32_0, %c0_i32_1 : i32, i32, i32, i32
  }
  func.func @transform_3(%arg0: i32, %arg1: i32) -> (i32, i32) {
    %c0_i32 = arith.constant 0 : i32
    %c0_i32_0 = arith.constant 0 : i32
    %c0_i32_1 = arith.constant 0 : i32
    return %c0_i32, %c0_i32_0 : i32, i32
  }
  func.func @transform_4(%arg0: i32, %arg1: i32) -> (i32, i32) {
    %c0_i32 = arith.constant 0 : i32
    %c0_i32_0 = arith.constant 0 : i32
    %c0_i32_1 = arith.constant 0 : i32
    return %c0_i32, %c0_i32_0 : i32, i32
  }
  func.func @transform_5(%arg0: i32, %arg1: i32) -> (i32, i32) {
    %c0_i32 = arith.constant 0 : i32
    %c0_i32_0 = arith.constant 0 : i32
    %c0_i32_1 = arith.constant 0 : i32
    return %c0_i32, %c0_i32_0 : i32, i32
  }
  func.func @transform_6(%arg0: i32, %arg1: i32) -> (i32, i32) {
    %c0_i32 = arith.constant 0 : i32
    %c0_i32_0 = arith.constant 0 : i32
    %c0_i32_1 = arith.constant 0 : i32
    return %c0_i32, %c0_i32_0 : i32, i32
  }
  func.func @transform_7(%arg0: i32, %arg1: i32) -> (i32, i32) {
    %c0_i32 = arith.constant 0 : i32
    %c0_i32_0 = arith.constant 0 : i32
    %c0_i32_1 = arith.constant 0 : i32
    return %c0_i32, %c0_i32_0 : i32, i32
  }
  func.func @transform_8(%arg0: i32, %arg1: i32) -> (i32, i32) {
    %c0_i32 = arith.constant 0 : i32
    %c0_i32_0 = arith.constant 0 : i32
    %c0_i32_1 = arith.constant 0 : i32
    return %c0_i32, %c0_i32_0 : i32, i32
  }
  func.func @transform_9(%arg0: i32, %arg1: i32) -> (i32, i32) {
    %c0_i32 = arith.constant 0 : i32
    %c0_i32_0 = arith.constant 0 : i32
    %c0_i32_1 = arith.constant 0 : i32
    return %c0_i32, %c0_i32_0 : i32, i32
  }
  func.func @transform_10(%arg0: i32, %arg1: i32) -> (i32, i32) {
    %c0_i32 = arith.constant 0 : i32
    %c0_i32_0 = arith.constant 0 : i32
    %c0_i32_1 = arith.constant 0 : i32
    return %c0_i32, %c0_i32_0 : i32, i32
  }
  func.func @transform_11(%arg0: i32, %arg1: i32) -> (i32, i32) {
    %c0_i32 = arith.constant 0 : i32
    %c0_i32_0 = arith.constant 0 : i32
    %c0_i32_1 = arith.constant 0 : i32
    return %c0_i32, %c0_i32_0 : i32, i32
  }
  func.func @transform_12(%arg0: i32, %arg1: i32) -> (i32, i32) {
    %c0_i32 = arith.constant 0 : i32
    %c0_i32_0 = arith.constant 0 : i32
    %c0_i32_1 = arith.constant 0 : i32
    return %c0_i32, %c0_i32_0 : i32, i32
  }
  func.func @transform_13(%arg0: i32, %arg1: i32) -> (i32, i32) {
    %c0_i32 = arith.constant 0 : i32
    %c0_i32_0 = arith.constant 0 : i32
    %c0_i32_1 = arith.constant 0 : i32
    return %c0_i32, %c0_i32_0 : i32, i32
  }
  func.func @transform_14(%arg0: i32, %arg1: i32) -> (i32, i32) {
    %c0_i32 = arith.constant 0 : i32
    %c0_i32_0 = arith.constant 0 : i32
    %c0_i32_1 = arith.constant 0 : i32
    return %c0_i32, %c0_i32_0 : i32, i32
  }
  func.func @transform_15(%arg0: i32, %arg1: i32) -> (i32, i32, i32) {
    %c0_i32 = arith.constant 0 : i32
    %c0_i32_0 = arith.constant 0 : i32
    return %arg0, %arg1, %c0_i32 : i32, i32, i32
  }
}

</mosaic_0001>

<llo_original>
// kernel: tpu_custom_call.1
$region0: #{tpu_custom_call.1}
  #allocation0 [shape = 'u32[]', space=smem, size = 0x4, offset = 0x4, fixed_abs, tag = 'smem constant byte address 0x4 - core index']
  #allocation1 [shape = 'u32[72,128]{1,0:T(1,128)}', space=vmem, size = 0x9000, scoped, tag = 'internal scratch']
  %s0 = inlined_call_operand.vmem [shape: f32[2,8,32], index: 0, kind: input, shape index: {}]
  %s1 = inlined_call_operand.vmem [shape: bf16[2,4,8,8], index: 1, kind: input, shape index: {}]
  %s2 = inlined_call_operand.hbm [shape: bf16[2,4,8,8], index: 2, kind: input, shape index: {}]
  %s3 = inlined_call_operand.vmem [shape: f32[1,32], index: 3, kind: input, shape index: {}]
  %s4 = inlined_call_operand.vmem [shape: f32[1,32], index: 4, kind: input, shape index: {}]
  %s5 = inlined_call_operand.hbm [shape: bf16[32,32], index: 5, kind: input, shape index: {}]
  %s6 = inlined_call_operand.vmem [shape: f32[1,32], index: 6, kind: input, shape index: {}]
  %s7 = inlined_call_operand.hbm [shape: bf16[32,32], index: 7, kind: input, shape index: {}]
  %s8 = inlined_call_operand.vmem [shape: f32[1,32], index: 8, kind: input, shape index: {}]
  %s9 = inlined_call_operand.vmem [shape: f32[1,32], index: 9, kind: input, shape index: {}]
  %s10 = inlined_call_operand.vmem [shape: f32[1,32], index: 10, kind: input, shape index: {}]
  %s11 = inlined_call_operand.hbm [shape: bf16[32,64], index: 11, kind: input, shape index: {}]
  %s12 = inlined_call_operand.vmem [shape: f32[1,64], index: 12, kind: input, shape index: {}]
  %s13 = inlined_call_operand.vmem [shape: bf16[64,32], index: 13, kind: input, shape index: {}]
  %s14 = inlined_call_operand.vmem [shape: f32[1,32], index: 14, kind: input, shape index: {}]
  %s15 = inlined_call_operand.hbm [shape: f32[2,8,32], index: 15, kind: output, shape index: {}]
  %s16 = sld [smem:[#allocation0]]
  $region109: #{tpu_custom_call.1} parent=0
    _
  %s18 = ssub.s32 1, %s16
  %s19 = scalar_select 0, %s18, %s16
  $region1: #{tpu_custom_call.1} parent=0
    #allocation2 [shape = 'u8[8192]{0}', space=vmem, size = 0x2000, scoped, tag = 'input window, operand 2, single buffered']
    #allocation3 [shape = 's32[2]{0}', space=sflag, size = 0x8, scoped, tag = 'scoped memory for tpu_custom_call.1']
    #allocation4 [shape = 's32[2]{0}', space=sflag, size = 0x8, scoped, tag = 'scoped memory for tpu_custom_call.1']
    #allocation5 [shape = 'u8[8192]{0}', space=vmem, size = 0x2000, scoped, tag = 'input window, operand 5, single buffered']
    #allocation6 [shape = 's32[1]{0}', space=sflag, size = 0x4, scoped, tag = 'scoped memory for tpu_custom_call.1']
    #allocation7 [shape = 'u8[8192]{0}', space=vmem, size = 0x2000, scoped, tag = 'input window, operand 7, single buffered']
    #allocation8 [shape = 'u8[8192]{0}', space=vmem, size = 0x2000, scoped, tag = 'input window, operand 11, single buffered']
    #allocation9 [shape = 's32[1]{0}', space=sflag, size = 0x4, scoped, tag = 'scoped memory for tpu_custom_call.1']
    #allocation10 [shape = 'u8[8192]{0}', space=vmem, size = 0x2000, scoped, tag = 'output window, operand 0']
    %20 = vsyncpa [#allocation3], 0
    %21 = vsyncpa [#allocation6], 0
    %22 = vsyncpa [#allocation9], 0
    %23 = vsyncpa [#allocation4], 0
    %s24 = scalar_lea.sflag [#allocation4], 1
    %25 = vsyncpa %s24, 0
    loop: start=0, step=1, limit=4
    $region2: #{tpu_custom_call.1} parent=1 // loop_pre_header
      _
    $region3: #{tpu_custom_call.1} parent=1 // loop_header
      %s27 = sphi 0, %s31
      %p28 = scmp.ge.s32.totalorder %s27, 4
      %s34 = sphi 0, %s46
      %s35 = sphi 0, %s42
      %s36 = sphi 0, %s34
      %s37 = sphi 0, %s35
      %s38 = sphi 0, %s36
      %s39 = sphi 0, %s37
      %s51 = sphi 0, %s53
      %s54 = sphi 0, %s51
      %s55 = sphi 0, %s54
      %s71 = sphi 0, %s55
      %s77 = sphi 0, %s79
      %s80 = sphi 0, %s77
      %s81 = sphi 0, %s80
      %s97 = sphi 0, %s81
      %s103 = sphi 0, %s105
      %s106 = sphi 0, %s103
      %s107 = sphi 0, %s106
      %s123 = sphi 0, %s107
      %s127 = sphi 0, %s127
      %s129 = sphi 0, %s127
      %s130 = sphi 0, %s129
      %s144 = sphi 0, %s130
      %s148 = sphi 0, %s148
      %s150 = sphi 0, %s148
      %s151 = sphi 0, %s150
      %s165 = sphi 0, %s151
      %s169 = sphi 0, %s169
      %s171 = sphi 0, %s169
      %s172 = sphi 0, %s171
      %s186 = sphi 0, %s172
      %s190 = sphi 0, %s190
      %s192 = sphi 0, %s190
      %s193 = sphi 0, %s192
      %s207 = sphi 0, %s193
      %s211 = sphi 0, %s211
      %s213 = sphi 0, %s211
      %s214 = sphi 0, %s213
      %s228 = sphi 0, %s214
      %s232 = sphi 0, %s232
      %s234 = sphi 0, %s232
      %s235 = sphi 0, %s234
      %s249 = sphi 0, %s235
      %s253 = sphi 0, %s253
      %s255 = sphi 0, %s253
      %s256 = sphi 0, %s255
      %s270 = sphi 0, %s256
      %s274 = sphi 0, %s274
      %s276 = sphi 0, %s274
      %s277 = sphi 0, %s276
      %s291 = sphi 0, %s277
      %s295 = sphi 0, %s295
      %s297 = sphi 0, %s295
      %s298 = sphi 0, %s297
      %s312 = sphi 0, %s298
      %s316 = sphi 0, %s316
      %s318 = sphi 0, %s316
      %s319 = sphi 0, %s318
      %s333 = sphi 0, %s319
      %s337 = sphi 0, %s337
      %s339 = sphi 0, %s337
      %s340 = sphi 0, %s339
      %s354 = sphi 0, %s340
      %s358 = sphi 0, %s358
      %s360 = sphi 0, %s358
      %s361 = sphi 0, %s360
      %s375 = sphi 0, %s361
      %s383 = sphi 0, %s385
      %s386 = sphi 0, %s383
      %s387 = sphi 0, %s386
      %s403 = sphi 0, %s387
    $region4: #{tpu_custom_call.1} parent=1 // loop_header_branch
      %30 = sbr.rel (%p28) target = $region8
    $region5: #{tpu_custom_call.1} parent=1 // loop_body
      %s32 = ssub.s32 %s27, 1
      %s33 = ssub.s32 %s27, 2
      %s40 = sadd.s32 1, %s35
      %p41 = scmp.ge.s32.totalorder %s40, 1
      %s42 = scalar_select %p41, 0, %s40
      %s43 = sadd.s32 1, %s34
      %s44 = scalar_select %p41, %s43, %s34
      %p45 = scmp.ge.s32.totalorder %s44, 2
      %s46 = scalar_select %p45, 0, %s44
      %s47 = ssub.s32 %s34, %s46
      %s48 = ssub.s32 %s35, %s42
      %s49 = sor.u32 %s47, %s48
      %p50 = scmp.eq.s32.totalorder %s49, 0
      %s52 = sadd.s32 %s51, 1
      %s53 = scalar_select %p50, %s51, %s52
      %p56 = pneg %p50
      %p57 = scmp.eq.s32.totalorder %s27, 1
      %p58 = por %p56, %p57
      %p59 = scmp.ne.s32.totalorder %s51, %s54
      %p60 = scmp.eq.s32.totalorder %s27, 0
      %p61 = por %p59, %p60
      %p62 = scmp.ne.s32.totalorder %s51, %s54
      %p63 = scmp.eq.s32.totalorder %s32, 1
      %p64 = por %p62, %p63
      %p65 = scmp.ne.s32.totalorder %s54, %s55
      %p66 = scmp.eq.s32.totalorder %s32, 0
      %p67 = por %p65, %p66
      %p68 = scmp.ne.s32.totalorder %s54, %s55
      %p69 = scmp.eq.s32.totalorder %s33, 1
      %p70 = por %p68, %p69
      %p72 = scmp.ne.s32.totalorder %s55, %s71
      %p73 = scmp.eq.s32.totalorder %s33, 0
      %p74 = por %p72, %p73
      %s75 = ssub.s32 %s34, %s46
      %p76 = scmp.eq.s32.totalorder %s75, 0
      %s78 = sadd.s32 %s77, 1
      %s79 = scalar_select %p76, %s77, %s78
      %p82 = pneg %p76
      %p83 = scmp.eq.s32.totalorder %s27, 1
      %p84 = por %p82, %p83
      %p85 = scmp.ne.s32.totalorder %s77, %s80
      %p86 = scmp.eq.s32.totalorder %s27, 0
      %p87 = por %p85, %p86
      %p88 = scmp.ne.s32.totalorder %s77, %s80
      %p89 = scmp.eq.s32.totalorder %s32, 1
      %p90 = por %p88, %p89
      %p91 = scmp.ne.s32.totalorder %s80, %s81
      %p92 = scmp.eq.s32.totalorder %s32, 0
      %p93 = por %p91, %p92
      %p94 = scmp.ne.s32.totalorder %s80, %s81
      %p95 = scmp.eq.s32.totalorder %s33, 1
      %p96 = por %p94, %p95
      %p98 = scmp.ne.s32.totalorder %s81, %s97
      %p99 = scmp.eq.s32.totalorder %s33, 0
      %p100 = por %p98, %p99
      %s101 = ssub.s32 %s34, %s46
      %p102 = scmp.eq.s32.totalorder %s101, 0
      %s104 = sadd.s32 %s103, 1
      %s105 = scalar_select %p102, %s103, %s104
      %p108 = pneg %p102
      %p109 = scmp.eq.s32.totalorder %s27, 1
      %p110 = por %p108, %p109
      %p111 = scmp.ne.s32.totalorder %s103, %s106
      %p112 = scmp.eq.s32.totalorder %s27, 0
      %p113 = por %p111, %p112
      %p114 = scmp.ne.s32.totalorder %s103, %s106
      %p115 = scmp.eq.s32.totalorder %s32, 1
      %p116 = por %p114, %p115
      %p117 = scmp.ne.s32.totalorder %s106, %s107
      %p118 = scmp.eq.s32.totalorder %s32, 0
      %p119 = por %p117, %p118
      %p120 = scmp.ne.s32.totalorder %s106, %s107
      %p121 = scmp.eq.s32.totalorder %s33, 1
      %p122 = por %p120, %p121
      %p124 = scmp.ne.s32.totalorder %s107, %s123
      %p125 = scmp.eq.s32.totalorder %s33, 0
      %p126 = por %p124, %p125
      %s128 = sadd.s32 %s127, 1
      %p131 = scmp.eq.s32.totalorder %s27, 1
      %p132 = scmp.ne.s32.totalorder %s127, %s129
      %p133 = scmp.eq.s32.totalorder %s27, 0
      %p134 = por %p132, %p133
      %p135 = scmp.ne.s32.totalorder %s127, %s129
      %p136 = scmp.eq.s32.totalorder %s32, 1
      %p137 = por %p135, %p136
      %p138 = scmp.ne.s32.totalorder %s129, %s130
      %p139 = scmp.eq.s32.totalorder %s32, 0
      %p140 = por %p138, %p139
      %p141 = scmp.ne.s32.totalorder %s129, %s130
      %p142 = scmp.eq.s32.totalorder %s33, 1
      %p143 = por %p141, %p142
      %p145 = scmp.ne.s32.totalorder %s130, %s144
      %p146 = scmp.eq.s32.totalorder %s33, 0
      %p147 = por %p145, %p146
      %s149 = sadd.s32 %s148, 1
      %p152 = scmp.eq.s32.totalorder %s27, 1
      %p153 = scmp.ne.s32.totalorder %s148, %s150
      %p154 = scmp.eq.s32.totalorder %s27, 0
      %p155 = por %p153, %p154
      %p156 = scmp.ne.s32.totalorder %s148, %s150
      %p157 = scmp.eq.s32.totalorder %s32, 1
      %p158 = por %p156, %p157
      %p159 = scmp.ne.s32.totalorder %s150, %s151
      %p160 = scmp.eq.s32.totalorder %s32, 0
      %p161 = por %p159, %p160
      %p162 = scmp.ne.s32.totalorder %s150, %s151
      %p163 = scmp.eq.s32.totalorder %s33, 1
      %p164 = por %p162, %p163
      %p166 = scmp.ne.s32.totalorder %s151, %s165
      %p167 = scmp.eq.s32.totalorder %s33, 0
      %p168 = por %p166, %p167
      %s170 = sadd.s32 %s169, 1
      %p173 = scmp.eq.s32.totalorder %s27, 1
      %p174 = scmp.ne.s32.totalorder %s169, %s171
      %p175 = scmp.eq.s32.totalorder %s27, 0
      %p176 = por %p174, %p175
      %p177 = scmp.ne.s32.totalorder %s169, %s171
      %p178 = scmp.eq.s32.totalorder %s32, 1
      %p179 = por %p177, %p178
      %p180 = scmp.ne.s32.totalorder %s171, %s172
      %p181 = scmp.eq.s32.totalorder %s32, 0
      %p182 = por %p180, %p181
      %p183 = scmp.ne.s32.totalorder %s171, %s172
      %p184 = scmp.eq.s32.totalorder %s33, 1
      %p185 = por %p183, %p184
      %p187 = scmp.ne.s32.totalorder %s172, %s186
      %p188 = scmp.eq.s32.totalorder %s33, 0
      %p189 = por %p187, %p188
      %s191 = sadd.s32 %s190, 1
      %p194 = scmp.eq.s32.totalorder %s27, 1
      %p195 = scmp.ne.s32.totalorder %s190, %s192
      %p196 = scmp.eq.s32.totalorder %s27, 0
      %p197 = por %p195, %p196
      %p198 = scmp.ne.s32.totalorder %s190, %s192
      %p199 = scmp.eq.s32.totalorder %s32, 1
      %p200 = por %p198, %p199
      %p201 = scmp.ne.s32.totalorder %s192, %s193
      %p202 = scmp.eq.s32.totalorder %s32, 0
      %p203 = por %p201, %p202
      %p204 = scmp.ne.s32.totalorder %s192, %s193
      %p205 = scmp.eq.s32.totalorder %s33, 1
      %p206 = por %p204, %p205
      %p208 = scmp.ne.s32.totalorder %s193, %s207
      %p209 = scmp.eq.s32.totalorder %s33, 0
      %p210 = por %p208, %p209
      %s212 = sadd.s32 %s211, 1
      %p215 = scmp.eq.s32.totalorder %s27, 1
      %p216 = scmp.ne.s32.totalorder %s211, %s213
      %p217 = scmp.eq.s32.totalorder %s27, 0
      %p218 = por %p216, %p217
      %p219 = scmp.ne.s32.totalorder %s211, %s213
      %p220 = scmp.eq.s32.totalorder %s32, 1
      %p221 = por %p219, %p220
      %p222 = scmp.ne.s32.totalorder %s213, %s214
      %p223 = scmp.eq.s32.totalorder %s32, 0
      %p224 = por %p222, %p223
      %p225 = scmp.ne.s32.totalorder %s213, %s214
      %p226 = scmp.eq.s32.totalorder %s33, 1
      %p227 = por %p225, %p226
      %p229 = scmp.ne.s32.totalorder %s214, %s228
      %p230 = scmp.eq.s32.totalorder %s33, 0
      %p231 = por %p229, %p230
      %s233 = sadd.s32 %s232, 1
      %p236 = scmp.eq.s32.totalorder %s27, 1
      %p237 = scmp.ne.s32.totalorder %s232, %s234
      %p238 = scmp.eq.s32.totalorder %s27, 0
      %p239 = por %p237, %p238
      %p240 = scmp.ne.s32.totalorder %s232, %s234
      %p241 = scmp.eq.s32.totalorder %s32, 1
      %p242 = por %p240, %p241
      %p243 = scmp.ne.s32.totalorder %s234, %s235
      %p244 = scmp.eq.s32.totalorder %s32, 0
      %p245 = por %p243, %p244
      %p246 = scmp.ne.s32.totalorder %s234, %s235
      %p247 = scmp.eq.s32.totalorder %s33, 1
      %p248 = por %p246, %p247
      %p250 = scmp.ne.s32.totalorder %s235, %s249
      %p251 = scmp.eq.s32.totalorder %s33, 0
      %p252 = por %p250, %p251
      %s254 = sadd.s32 %s253, 1
      %p257 = scmp.eq.s32.totalorder %s27, 1
      %p258 = scmp.ne.s32.totalorder %s253, %s255
      %p259 = scmp.eq.s32.totalorder %s27, 0
      %p260 = por %p258, %p259
      %p261 = scmp.ne.s32.totalorder %s253, %s255
      %p262 = scmp.eq.s32.totalorder %s32, 1
      %p263 = por %p261, %p262
      %p264 = scmp.ne.s32.totalorder %s255, %s256
      %p265 = scmp.eq.s32.totalorder %s32, 0
      %p266 = por %p264, %p265
      %p267 = scmp.ne.s32.totalorder %s255, %s256
      %p268 = scmp.eq.s32.totalorder %s33, 1
      %p269 = por %p267, %p268
      %p271 = scmp.ne.s32.totalorder %s256, %s270
      %p272 = scmp.eq.s32.totalorder %s33, 0
      %p273 = por %p271, %p272
      %s275 = sadd.s32 %s274, 1
      %p278 = scmp.eq.s32.totalorder %s27, 1
      %p279 = scmp.ne.s32.totalorder %s274, %s276
      %p280 = scmp.eq.s32.totalorder %s27, 0
      %p281 = por %p279, %p280
      %p282 = scmp.ne.s32.totalorder %s274, %s276
      %p283 = scmp.eq.s32.totalorder %s32, 1
      %p284 = por %p282, %p283
      %p285 = scmp.ne.s32.totalorder %s276, %s277
      %p286 = scmp.eq.s32.totalorder %s32, 0
      %p287 = por %p285, %p286
      %p288 = scmp.ne.s32.totalorder %s276, %s277
      %p289 = scmp.eq.s32.totalorder %s33, 1
      %p290 = por %p288, %p289
      %p292 = scmp.ne.s32.totalorder %s277, %s291
      %p293 = scmp.eq.s32.totalorder %s33, 0
      %p294 = por %p292, %p293
      %s296 = sadd.s32 %s295, 1
      %p299 = scmp.eq.s32.totalorder %s27, 1
      %p300 = scmp.ne.s32.totalorder %s295, %s297
      %p301 = scmp.eq.s32.totalorder %s27, 0
      %p302 = por %p300, %p301
      %p303 = scmp.ne.s32.totalorder %s295, %s297
      %p304 = scmp.eq.s32.totalorder %s32, 1
      %p305 = por %p303, %p304
      %p306 = scmp.ne.s32.totalorder %s297, %s298
      %p307 = scmp.eq.s32.totalorder %s32, 0
      %p308 = por %p306, %p307
      %p309 = scmp.ne.s32.totalorder %s297, %s298
      %p310 = scmp.eq.s32.totalorder %s33, 1
      %p311 = por %p309, %p310
      %p313 = scmp.ne.s32.totalorder %s298, %s312
      %p314 = scmp.eq.s32.totalorder %s33, 0
      %p315 = por %p313, %p314
      %s317 = sadd.s32 %s316, 1
      %p320 = scmp.eq.s32.totalorder %s27, 1
      %p321 = scmp.ne.s32.totalorder %s316, %s318
      %p322 = scmp.eq.s32.totalorder %s27, 0
      %p323 = por %p321, %p322
      %p324 = scmp.ne.s32.totalorder %s316, %s318
      %p325 = scmp.eq.s32.totalorder %s32, 1
      %p326 = por %p324, %p325
      %p327 = scmp.ne.s32.totalorder %s318, %s319
      %p328 = scmp.eq.s32.totalorder %s32, 0
      %p329 = por %p327, %p328
      %p330 = scmp.ne.s32.totalorder %s318, %s319
      %p331 = scmp.eq.s32.totalorder %s33, 1
      %p332 = por %p330, %p331
      %p334 = scmp.ne.s32.totalorder %s319, %s333
      %p335 = scmp.eq.s32.totalorder %s33, 0
      %p336 = por %p334, %p335
      %s338 = sadd.s32 %s337, 1
      %p341 = scmp.eq.s32.totalorder %s27, 1
      %p342 = scmp.ne.s32.totalorder %s337, %s339
      %p343 = scmp.eq.s32.totalorder %s27, 0
      %p344 = por %p342, %p343
      %p345 = scmp.ne.s32.totalorder %s337, %s339
      %p346 = scmp.eq.s32.totalorder %s32, 1
      %p347 = por %p345, %p346
      %p348 = scmp.ne.s32.totalorder %s339, %s340
      %p349 = scmp.eq.s32.totalorder %s32, 0
      %p350 = por %p348, %p349
      %p351 = scmp.ne.s32.totalorder %s339, %s340
      %p352 = scmp.eq.s32.totalorder %s33, 1
      %p353 = por %p351, %p352
      %p355 = scmp.ne.s32.totalorder %s340, %s354
      %p356 = scmp.eq.s32.totalorder %s33, 0
      %p357 = por %p355, %p356
      %s359 = sadd.s32 %s358, 1
      %p362 = scmp.eq.s32.totalorder %s27, 1
      %p363 = scmp.ne.s32.totalorder %s358, %s360
      %p364 = scmp.eq.s32.totalorder %s27, 0
      %p365 = por %p363, %p364
      %p366 = scmp.ne.s32.totalorder %s358, %s360
      %p367 = scmp.eq.s32.totalorder %s32, 1
      %p368 = por %p366, %p367
      %p369 = scmp.ne.s32.totalorder %s360, %s361
      %p370 = scmp.eq.s32.totalorder %s32, 0
      %p371 = por %p369, %p370
      %p372 = scmp.ne.s32.totalorder %s360, %s361
      %p373 = scmp.eq.s32.totalorder %s33, 1
      %p374 = por %p372, %p373
      %p376 = scmp.ne.s32.totalorder %s361, %s375
      %p377 = scmp.eq.s32.totalorder %s33, 0
      %p378 = por %p376, %p377
      %s379 = ssub.s32 %s34, %s46
      %s380 = ssub.s32 %s35, %s42
      %s381 = sor.u32 %s379, %s380
      %p382 = scmp.eq.s32.totalorder %s381, 0
      %s384 = sadd.s32 %s383, 1
      %s385 = scalar_select %p382, %s383, %s384
      %p388 = pneg %p382
      %p389 = scmp.eq.s32.totalorder %s27, 1
      %p390 = por %p388, %p389
      %p391 = scmp.ne.s32.totalorder %s383, %s386
      %p392 = scmp.eq.s32.totalorder %s27, 0
      %p393 = por %p391, %p392
      %p394 = scmp.ne.s32.totalorder %s383, %s386
      %p395 = scmp.eq.s32.totalorder %s32, 1
      %p396 = por %p394, %p395
      %p397 = scmp.ne.s32.totalorder %s386, %s387
      %p398 = scmp.eq.s32.totalorder %s32, 0
      %p399 = por %p397, %p398
      %p400 = scmp.ne.s32.totalorder %s386, %s387
      %p401 = scmp.eq.s32.totalorder %s33, 1
      %p402 = por %p400, %p401
      %p404 = scmp.ne.s32.totalorder %s387, %s403
      %p405 = scmp.eq.s32.totalorder %s33, 0
      %p406 = por %p404, %p405
      %p407 = scmp.le.s32.totalorder 1, %s27
      %p408 = scmp.lt.s32.totalorder %s27, 3
      %p409 = pnand %p407, %p408
      %p410 = pneg %p409
      // Predicated region
      $region9: #{tpu_custom_call.1} parent=5 // pred_check
        _
      $region10: #{tpu_custom_call.1} parent=5 // pred_check_branch
        %412 = sbr.rel (%p409) target = $region12
      $region11: #{tpu_custom_call.1} parent=5 // pred_region
        %s413 = ssub.s32 %s27, 1
        // Predicated region
        $region13: #{tpu_custom_call.1} parent=11 // pred_check
          %p414 = pneg %p93
        $region14: #{tpu_custom_call.1} parent=11 // pred_check_branch
          %416 = sbr.rel (%p414) target = $region16
        $region15: #{tpu_custom_call.1} parent=11 // pred_region
          %p417 = scmp.lt.s32.totalorder %s36, 1
          %s418 = scalar_select %p417, %s36, 1
          %s419 = smul.addr %s418, 4
          %s420 = smul.addr %s419, 4
          %s421 = scalar_lea.vmem %s1, %s420
        $region16: #{tpu_custom_call.1} parent=11 // pred_fallthru
          _
        // Predicated region
        $region17: #{tpu_custom_call.1} parent=11 // pred_check
          %p422 = pneg %p119
        $region18: #{tpu_custom_call.1} parent=11 // pred_check_branch
          %424 = sbr.rel (%p422) target = $region20
        $region19: #{tpu_custom_call.1} parent=11 // pred_region
          %426 = vsyncadd [#allocation3], 0
          %s427 = smul.addr %s36, 4
          %s428 = smul.addr %s427, 4
          %s429 = scalar_lea.hbm %s2, %s428
          %s430 = sshll.u32 %s429, 4
          %s431 = int_to_ptr.hbm [resolvable:$true] %s430
          %s432 = sshll.u32 [#allocation2], 4
          %s433 = int_to_ptr.vmem [resolvable:$true] %s432
          %438 = dma.hbm_to_vmem [thread:$0]  %s431, 256, %s433, [#allocation3], 64, 64, 4
        $region20: #{tpu_custom_call.1} parent=11 // pred_fallthru
          _
        // Predicated region
        $region21: #{tpu_custom_call.1} parent=11 // pred_check
          %p439 = pneg %p140
        $region22: #{tpu_custom_call.1} parent=11 // pred_check_branch
          %441 = sbr.rel (%p439) target = $region24
        $region23: #{tpu_custom_call.1} parent=11 // pred_region
          _
        $region24: #{tpu_custom_call.1} parent=11 // pred_fallthru
          _
        // Predicated region
        $region25: #{tpu_custom_call.1} parent=11 // pred_check
          %p442 = pneg %p161
        $region26: #{tpu_custom_call.1} parent=11 // pred_check_branch
          %444 = sbr.rel (%p442) target = $region28
        $region27: #{tpu_custom_call.1} parent=11 // pred_region
          _
        $region28: #{tpu_custom_call.1} parent=11 // pred_fallthru
          _
        // Predicated region
        $region29: #{tpu_custom_call.1} parent=11 // pred_check
          %p445 = pneg %p182
        $region30: #{tpu_custom_call.1} parent=11 // pred_check_branch
          %447 = sbr.rel (%p445) target = $region32
        $region31: #{tpu_custom_call.1} parent=11 // pred_region
          %449 = vsyncadd [#allocation6], 0
          %s450 = sshll.u32 %s5, 4
          %s451 = int_to_ptr.hbm [resolvable:$true] %s450
          %s452 = sshll.u32 [#allocation5], 4
          %s453 = int_to_ptr.vmem [resolvable:$true] %s452
          %458 = dma.hbm_to_vmem [thread:$0]  %s451, 256, %s453, [#allocation6], 64, 64, 4
        $region32: #{tpu_custom_call.1} parent=11 // pred_fallthru
          _
        // Predicated region
        $region33: #{tpu_custom_call.1} parent=11 // pred_check
          %p459 = pneg %p203
        $region34: #{tpu_custom_call.1} parent=11 // pred_check_branch
          %461 = sbr.rel (%p459) target = $region36
        $region35: #{tpu_custom_call.1} parent=11 // pred_region
          _
        $region36: #{tpu_custom_call.1} parent=11 // pred_fallthru
          _
        // Predicated region
        $region37: #{tpu_custom_call.1} parent=11 // pred_check
          %p462 = pneg %p224
        $region38: #{tpu_custom_call.1} parent=11 // pred_check_branch
          %464 = sbr.rel (%p462) target = $region40
        $region39: #{tpu_custom_call.1} parent=11 // pred_region
          %466 = vsyncadd [#allocation6], 0
          %s467 = sshll.u32 %s7, 4
          %s468 = int_to_ptr.hbm [resolvable:$true] %s467
          %s469 = sshll.u32 [#allocation7], 4
          %s470 = int_to_ptr.vmem [resolvable:$true] %s469
          %475 = dma.hbm_to_vmem [thread:$0]  %s468, 256, %s470, [#allocation6], 64, 64, 4
        $region40: #{tpu_custom_call.1} parent=11 // pred_fallthru
          _
        // Predicated region
        $region41: #{tpu_custom_call.1} parent=11 // pred_check
          %p476 = pneg %p245
        $region42: #{tpu_custom_call.1} parent=11 // pred_check_branch
          %478 = sbr.rel (%p476) target = $region44
        $region43: #{tpu_custom_call.1} parent=11 // pred_region
          _
        $region44: #{tpu_custom_call.1} parent=11 // pred_fallthru
          _
        // Predicated region
        $region45: #{tpu_custom_call.1} parent=11 // pred_check
          %p479 = pneg %p266
        $region46: #{tpu_custom_call.1} parent=11 // pred_check_branch
          %481 = sbr.rel (%p479) target = $region48
        $region47: #{tpu_custom_call.1} parent=11 // pred_region
          _
        $region48: #{tpu_custom_call.1} parent=11 // pred_fallthru
          _
        // Predicated region
        $region49: #{tpu_custom_call.1} parent=11 // pred_check
          %p482 = pneg %p287
        $region50: #{tpu_custom_call.1} parent=11 // pred_check_branch
          %484 = sbr.rel (%p482) target = $region52
        $region51: #{tpu_custom_call.1} parent=11 // pred_region
          _
        $region52: #{tpu_custom_call.1} parent=11 // pred_fallthru
          _
        // Predicated region
        $region53: #{tpu_custom_call.1} parent=11 // pred_check
          %p485 = pneg %p308
        $region54: #{tpu_custom_call.1} parent=11 // pred_check_branch
          %487 = sbr.rel (%p485) target = $region56
        $region55: #{tpu_custom_call.1} parent=11 // pred_region
          %489 = vsyncadd [#allocation9], 0
          %s490 = sshll.u32 %s11, 4
          %s491 = int_to_ptr.hbm [resolvable:$true] %s490
          %s492 = sshll.u32 [#allocation8], 4
          %s493 = int_to_ptr.vmem [resolvable:$true] %s492
          %498 = dma.hbm_to_vmem [thread:$0]  %s491, 256, %s493, [#allocation9], 64, 64, 4
        $region56: #{tpu_custom_call.1} parent=11 // pred_fallthru
          _
        // Predicated region
        $region57: #{tpu_custom_call.1} parent=11 // pred_check
          %p499 = pneg %p329
        $region58: #{tpu_custom_call.1} parent=11 // pred_check_branch
          %501 = sbr.rel (%p499) target = $region60
        $region59: #{tpu_custom_call.1} parent=11 // pred_region
          _
        $region60: #{tpu_custom_call.1} parent=11 // pred_fallthru
          _
        // Predicated region
        $region61: #{tpu_custom_call.1} parent=11 // pred_check
          %p502 = pneg %p350
        $region62: #{tpu_custom_call.1} parent=11 // pred_check_branch
          %504 = sbr.rel (%p502) target = $region64
        $region63: #{tpu_custom_call.1} parent=11 // pred_region
          _
        $region64: #{tpu_custom_call.1} parent=11 // pred_fallthru
          _
        // Predicated region
        $region65: #{tpu_custom_call.1} parent=11 // pred_check
          %p505 = pneg %p371
        $region66: #{tpu_custom_call.1} parent=11 // pred_check_branch
          %507 = sbr.rel (%p505) target = $region68
        $region67: #{tpu_custom_call.1} parent=11 // pred_region
          _
        $region68: #{tpu_custom_call.1} parent=11 // pred_fallthru
          _
      $region12: #{tpu_custom_call.1} parent=5 // pred_fallthru
        _
      %p508 = scmp.lt.s32.totalorder %s27, 2
      // Predicated region
      $region69: #{tpu_custom_call.1} parent=5 // pred_check
        %p509 = pneg %p508
      $region70: #{tpu_custom_call.1} parent=5 // pred_check_branch
        %511 = sbr.rel (%p509) target = $region72
      $region71: #{tpu_custom_call.1} parent=5 // pred_region
        // Predicated region
        $region73: #{tpu_custom_call.1} parent=71 // pred_check
          %p512 = pneg %p61
        $region74: #{tpu_custom_call.1} parent=71 // pred_check_branch
          %514 = sbr.rel (%p512) target = $region76
        $region75: #{tpu_custom_call.1} parent=71 // pred_region
          %p515 = scmp.lt.s32.totalorder %s34, 1
          %s516 = scalar_select %p515, %s34, 1
          %p517 = scmp.lt.s32.totalorder %s35, 0
          %s518 = scalar_select %p517, %s35, 0
          %s519 = sadd.s32 %s518, %s516
          %s520 = smul.addr %s519, 8
          %s521 = scalar_lea.vmem %s0, %s520
        $region76: #{tpu_custom_call.1} parent=71 // pred_fallthru
          _
      $region72: #{tpu_custom_call.1} parent=5 // pred_fallthru
        _
      %p522 = scmp.le.s32.totalorder 1, %s27
      %p523 = scmp.lt.s32.totalorder %s27, 3
      %p524 = pnand %p522, %p523
      %p525 = pneg %p524
      // Predicated region
      $region77: #{tpu_custom_call.1} parent=5 // pred_check
        _
      $region78: #{tpu_custom_call.1} parent=5 // pred_check_branch
        %527 = sbr.rel (%p524) target = $region80
      $region79: #{tpu_custom_call.1} parent=5 // pred_region
        %s528 = ssub.s32 %s27, 1
        // Predicated region
        $region81: #{tpu_custom_call.1} parent=79 // pred_check
          %p529 = pneg %p119
        $region82: #{tpu_custom_call.1} parent=79 // pred_check_branch
          %531 = sbr.rel (%p529) target = $region84
        $region83: #{tpu_custom_call.1} parent=79 // pred_region
          %533 = dma.done [#allocation3], 256
        $region84: #{tpu_custom_call.1} parent=79 // pred_fallthru
          _
        // Predicated region
        $region85: #{tpu_custom_call.1} parent=79 // pred_check
          %p534 = pneg %p182
        $region86: #{tpu_custom_call.1} parent=79 // pred_check_branch
          %536 = sbr.rel (%p534) target = $region88
        $region87: #{tpu_custom_call.1} parent=79 // pred_region
          %538 = dma.done [#allocation6], 256
        $region88: #{tpu_custom_call.1} parent=79 // pred_fallthru
          _
        // Predicated region
        $region89: #{tpu_custom_call.1} parent=79 // pred_check
          %p539 = pneg %p224
        $region90: #{tpu_custom_call.1} parent=79 // pred_check_branch
          %541 = sbr.rel (%p539) target = $region92
        $region91: #{tpu_custom_call.1} parent=79 // pred_region
          %543 = dma.done [#allocation6], 256
        $region92: #{tpu_custom_call.1} parent=79 // pred_fallthru
          _
        // Predicated region
        $region93: #{tpu_custom_call.1} parent=79 // pred_check
          %p544 = pneg %p308
        $region94: #{tpu_custom_call.1} parent=79 // pred_check_branch
          %546 = sbr.rel (%p544) target = $region96
        $region95: #{tpu_custom_call.1} parent=79 // pred_region
          %548 = dma.done [#allocation9], 256
        $region96: #{tpu_custom_call.1} parent=79 // pred_fallthru
          _
        %p549 = scmp.lt.s32.totalorder %s36, 1
        %s550 = scalar_select %p549, %s36, 1
        %p551 = scmp.lt.s32.totalorder %s37, 0
        %s552 = scalar_select %p551, %s37, 0
        %s553 = sadd.s32 %s552, %s550
        %s554 = smul.addr %s553, 8
        %s555 = scalar_lea.vmem %s0, %s554
        %p556 = pneg %p67
        %p557 = pneg %p64
        %p558 = scmp.lt.s32.totalorder %s36, 1
        %s559 = scalar_select %p558, %s36, 1
        %s560 = smul.addr %s559, 4
        %s561 = smul.addr %s560, 4
        %s562 = scalar_lea.vmem %s1, %s561
        %p563 = pneg %p93
        %p564 = pneg %p90
        %p565 = pneg %p119
        %p566 = pneg %p116
        %p567 = pneg %p140
        %p568 = pneg %p137
        %p569 = pneg %p161
        %p570 = pneg %p158
        %p571 = pneg %p182
        %p572 = pneg %p179
        %p573 = pneg %p203
        %p574 = pneg %p200
        %p575 = pneg %p224
        %p576 = pneg %p221
        %p577 = pneg %p245
        %p578 = pneg %p242
        %p579 = pneg %p266
        %p580 = pneg %p263
        %p581 = pneg %p287
        %p582 = pneg %p284
        %p583 = pneg %p308
        %p584 = pneg %p305
        %p585 = pneg %p329
        %p586 = pneg %p326
        %p587 = pneg %p350
        %p588 = pneg %p347
        %p589 = pneg %p371
        %p590 = pneg %p368
        %p591 = pneg %p399
        %p592 = pneg %p396
        %s593 = sand.u32 %s386, 1
        %s594 = scalar_lea.sflag [#allocation4], %s593
        %s595 = sand.u32 %s386, 1
        %s596 = smul.addr %s595, 8
        %s597 = scalar_lea.vmem [#allocation10], %s596
        %p598 = scmp.lt.s32.totalorder %s36, 1
        %s599 = scalar_select %p598, %s36, 1
        %p600 = scmp.lt.s32.totalorder %s37, 0
        %s601 = scalar_select %p600, %s37, 0
        %s602 = sadd.s32 %s601, %s599
        %s603 = smul.addr %s602, 8
        %s604 = scalar_lea.vmem %s0, %s603
        %p605 = scmp.lt.s32.totalorder %s36, 1
        %s606 = scalar_select %p605, %s36, 1
        %s607 = smul.addr %s606, 4
        %s608 = smul.addr %s607, 4
        %s609 = scalar_lea.vmem %s1, %s608
        %v611 = vld [vmem:[%s604] sm:$0xff]
        %v612 = vld [vmem:[%s3] sm:$0x1]
        %v613 = vld [vmem:[%s4] sm:$0x1]
        %vm614 = vcmask 261120
        %v615 = vsel %vm614, %v611, 0.0
        %616 = vadd.xlane.f32.xlu0 %v615
        %v617 = vpop.xlane.xlu0 %616
        %v618 = vrcp.pop 32.0
        %v619 = vmul.f32 32.0, %v618
        %v620 = vsub.f32 1.0, %v619
        %v621 = vmul.f32 %v618, %v620
        %v622 = vadd.f32 %v618, %v621
        %vm623 = vweird.f32 %v618
        %v624 = vsel %vm623, %v618, %v622
        %v625 = vmul.f32 %v617, %v624
        %v626 = vsub.f32 %v611, %v625
        %v627 = vmul.f32 %v626, %v626
        %v628 = vsel %vm614, %v627, 0.0
        %629 = vadd.xlane.f32.xlu0 %v628
        %v630 = vpop.xlane.xlu0 %629
        %v631 = vmul.f32 %v630, %v624
        %v632 = vadd.f32 %v631, 1e-06
        %v633 = vrsqrt.pop %v632
        %v634 = vmul.f32 %v633, %v632
        %v635 = vmul.f32 %v634, %v633
        %v636 = vmul.f32 0.5, %v635
        %v637 = vsub.f32 1.5, %v636
        %v638 = vmul.f32 %v633, %v637
        %vm639 = vweird.f32 %v632
        %vm640 = vweird.f32 %v633
        %vm641 = vmor %vm639, %vm640
        %v642 = vsel %vm641, %v633, %v638
        %v643 = vmul.f32 %v626, %v642
        %v645 = vperm.slane %v612, 0
        %v647 = vmul.f32 %v643, %v645
        %v649 = vperm.slane %v613, 0
        %v651 = vadd.f32 %v647, %v649
        %v652 = vpack.c.bf16 %v651, %v651
        %v653 = vld [vmem:[#allocation5] sm:$0xf]
        %v654 = vld [vmem:[#allocation5 + $0x4] sm:$0xf]
        %v655 = vld [vmem:[#allocation5 + $0x8] sm:$0xf]
        %v656 = vld [vmem:[#allocation5 + $0xc] sm:$0xf]
        %v657 = vld [vmem:[%s6] sm:$0x1]
        %v659 = vperm.slane %v657, 0
        %v665 = vunpack.c.l.b16 %v653
        %v666 = vunpack.c.l.b16 %v654
        %v667 = vunpack.c.l.b16 %v655
        %v668 = vunpack.c.l.b16 %v656
        %v669 = vpack.c.b16 %v666, %v665
        %v670 = vpack.c.b16 %v668, %v667
        %v674 = vsel %vm614, %v652, 0
        %676 = vmatpush.bf16.msra.mxu0 0
        %677 = vmatpush.bf16.msra.mxu0 0
        %678 = vmatpush.bf16.msra.mxu0 0
        %679 = vmatpush.bf16.msra.mxu0 0
        %680 = vmatpush.bf16.msra.mxu0 0
        %681 = vmatpush.bf16.msra.mxu0 0
        %682 = vmatpush.bf16.msra.mxu0 %v670
        %683 = vmatpush.bf16.msra.mxu0 %v669
        %684 = vmatmul.bf16.gmra.mxu0 %v674
        %v685 = vpop.f32.mrf.mxu0
        %v686 = vadd.f32 %v659, %v685
        %v687 = vpop.f32.mrf.mxu0
        %688 = vdwg.mxu0
        %v689 = vpack.c.bf16 %v686, %v686
        %691 = vrot.lane.b32.xlu0 %v689, 120
        %v692 = vpop.permute.xlu0 %691
        %693 = vrot.lane.b32.xlu0 %v689, 112
        %v694 = vpop.permute.xlu0 %693
        %695 = vrot.lane.b32.xlu0 %v689, 104
        %v696 = vpop.permute.xlu0 %695
        %v699 = vpack.i.b16 %v692, %v689
        %v700 = vshrl.u32 %v689, 16
        %v701 = vshrl.u32 %v692, 16
        %v702 = vpack.i.b16 %v701, %v700
        %v705 = vpack.i.b16 %v696, %v694
        %v706 = vshrl.u32 %v694, 16
        %v707 = vshrl.u32 %v696, 16
        %v708 = vpack.i.b16 %v707, %v706
        %v711 = vunpack.c.l.s4 1983009808
        %v712 = vunpack.c.0.s8 %v711
        %v713 = vperm.slane %v699, %v712
        %v716 = vunpack.c.l.s4 1983009808
        %v717 = vunpack.c.0.s8 %v716
        %v718 = vperm.slane %v705, %v717
        %v719 = vrot.slane %v718, 4
        %vm720 = vcmask 1047556
        %v721 = vsel %vm720, %v719, %v713
        %v722 = vrot.slane %v713, 4
        %v723 = vsel %vm720, %v718, %v722
        %v725 = vunpack.c.l.s4 1934713408
        %v726 = vunpack.c.0.s8 %v725
        %v727 = vperm.slane %v721, %v726
        %v729 = vunpack.c.l.s4 1934713408
        %v730 = vunpack.c.0.s8 %v729
        %v731 = vperm.slane %v723, %v730
        %v732 = vrot.slane %v727, 4
        %v733 = vsel %vm720, 0, %v732
        %v734 = vrot.slane %v731, 4
        %v735 = vsel %vm720, 0, %v734
        %v738 = vunpack.c.l.s4 1983009808
        %v739 = vunpack.c.0.s8 %v738
        %v740 = vperm.slane %v702, %v739
        %v743 = vunpack.c.l.s4 1983009808
        %v744 = vunpack.c.0.s8 %v743
        %v745 = vperm.slane %v708, %v744
        %v746 = vrot.slane %v745, 4
        %v747 = vsel %vm720, %v746, %v740
        %v748 = vrot.slane %v740, 4
        %v749 = vsel %vm720, %v745, %v748
        %v751 = vunpack.c.l.s4 1934713408
        %v752 = vunpack.c.0.s8 %v751
        %v753 = vperm.slane %v747, %v752
        %v755 = vunpack.c.l.s4 1934713408
        %v756 = vunpack.c.0.s8 %v755
        %v757 = vperm.slane %v749, %v756
        %v758 = vrot.slane %v753, 4
        %v759 = vsel %vm720, 0, %v758
        %v760 = vrot.slane %v757, 4
        %v761 = vsel %vm720, 0, %v760
        %v762 = vsel %vm720, %v734, %v727
        %v764 = vunpack.c.l.s4 1983009808
        %v765 = vunpack.c.0.s8 %v764
        %v766 = vperm.slane %v762, %v765
        %v767 = vrot.slane %v735, 4
        %v768 = vsel %vm720, %v767, %v733
        %v770 = vunpack.c.l.s4 1983009808
        %v771 = vunpack.c.0.s8 %v770
        %v772 = vperm.slane %v768, %v771
        %v773 = vrot.slane %v772, 4
        %v774 = vsel %vm720, %v773, %v766
        %v776 = vunpack.c.l.s4 1934713408
        %v777 = vunpack.c.0.s8 %v776
        %v778 = vperm.slane %v774, %v777
        %v779 = vrot.slane %v778, 4
        %v780 = vsel %vm720, 0, %v779
        %v781 = vsel %vm720, %v760, %v753
        %v783 = vunpack.c.l.s4 1983009808
        %v784 = vunpack.c.0.s8 %v783
        %v785 = vperm.slane %v781, %v784
        %v786 = vrot.slane %v761, 4
        %v787 = vsel %vm720, %v786, %v759
        %v789 = vunpack.c.l.s4 1983009808
        %v790 = vunpack.c.0.s8 %v789
        %v791 = vperm.slane %v787, %v790
        %v792 = vrot.slane %v791, 4
        %v793 = vsel %vm720, %v792, %v785
        %v795 = vunpack.c.l.s4 1934713408
        %v796 = vunpack.c.0.s8 %v795
        %v797 = vperm.slane %v793, %v796
        %v798 = vrot.slane %v797, 4
        %v799 = vsel %vm720, 0, %v798
        %v802 = vpack.i.b16 %v797, %v778
        %v803 = vshrl.u32 %v778, 16
        %v804 = vshrl.u32 %v797, 16
        %v805 = vpack.i.b16 %v804, %v803
        %v808 = vpack.i.b16 %v799, %v780
        %v809 = vshrl.u32 %v780, 16
        %v810 = vshrl.u32 %v799, 16
        %v811 = vpack.i.b16 %v810, %v809
        %v812 = vld [vmem:[%s609] sm:$0xf]
        %v813 = vld [vmem:[%s609 + $0x4] sm:$0xf]
        %v814 = vld [vmem:[%s609 + $0x8] sm:$0xf]
        %v815 = vld [vmem:[%s609 + $0xc] sm:$0xf]
        %v816 = vld [vmem:[#allocation2] sm:$0xf]
        %v817 = vld [vmem:[#allocation2 + $0x4] sm:$0xf]
        %v818 = vld [vmem:[#allocation2 + $0x8] sm:$0xf]
        %v819 = vld [vmem:[#allocation2 + $0xc] sm:$0xf]
        %vm820 = vcmask 64512
        %v822 = vsel %vm820, %v802, 0
        %v825 = vsel %vm820, %v812, 0
        %827 = vmatpush.bf16.xpose.msra.mxu0 0
        %828 = vmatpush.bf16.xpose.msra.mxu0 0
        %829 = vmatpush.bf16.xpose.msra.mxu0 0
        %830 = vmatpush.bf16.xpose.msra.mxu0 0
        %831 = vmatpush.bf16.xpose.msra.mxu0 0
        %832 = vmatpush.bf16.xpose.msra.mxu0 0
        %833 = vmatpush.bf16.xpose.msra.mxu0 0
        %834 = vmatpush.bf16.xpose.msra.mxu0 %v825
        %835 = vmatmul.bf16.gmra.mxu0 %v822
        %v836 = vpop.f32.mrf.mxu0
        %v837 = vadd.f32 0.0, %v836
        %v838 = vpop.f32.mrf.mxu0
        %839 = vdwg.mxu0
        %v841 = vsel %vm820, %v805, 0
        %v844 = vsel %vm820, %v813, 0
        %846 = vmatpush.bf16.xpose.msra.mxu0 0
        %847 = vmatpush.bf16.xpose.msra.mxu0 0
        %848 = vmatpush.bf16.xpose.msra.mxu0 0
        %849 = vmatpush.bf16.xpose.msra.mxu0 0
        %850 = vmatpush.bf16.xpose.msra.mxu0 0
        %851 = vmatpush.bf16.xpose.msra.mxu0 0
        %852 = vmatpush.bf16.xpose.msra.mxu0 0
        %853 = vmatpush.bf16.xpose.msra.mxu0 %v844
        %854 = vmatmul.bf16.gmra.mxu0 %v841
        %v855 = vpop.f32.mrf.mxu0
        %v856 = vadd.f32 0.0, %v855
        %v857 = vpop.f32.mrf.mxu0
        %858 = vdwg.mxu0
        %v860 = vsel %vm820, %v808, 0
        %v863 = vsel %vm820, %v814, 0
        %865 = vmatpush.bf16.xpose.msra.mxu0 0
        %866 = vmatpush.bf16.xpose.msra.mxu0 0
        %867 = vmatpush.bf16.xpose.msra.mxu0 0
        %868 = vmatpush.bf16.xpose.msra.mxu0 0
        %869 = vmatpush.bf16.xpose.msra.mxu0 0
        %870 = vmatpush.bf16.xpose.msra.mxu0 0
        %871 = vmatpush.bf16.xpose.msra.mxu0 0
        %872 = vmatpush.bf16.xpose.msra.mxu0 %v863
        %873 = vmatmul.bf16.gmra.mxu0 %v860
        %v874 = vpop.f32.mrf.mxu0
        %v875 = vadd.f32 0.0, %v874
        %v876 = vpop.f32.mrf.mxu0
        %877 = vdwg.mxu0
        %v879 = vsel %vm820, %v811, 0
        %v882 = vsel %vm820, %v815, 0
        %884 = vmatpush.bf16.xpose.msra.mxu0 0
        %885 = vmatpush.bf16.xpose.msra.mxu0 0
        %886 = vmatpush.bf16.xpose.msra.mxu0 0
        %887 = vmatpush.bf16.xpose.msra.mxu0 0
        %888 = vmatpush.bf16.xpose.msra.mxu0 0
        %889 = vmatpush.bf16.xpose.msra.mxu0 0
        %890 = vmatpush.bf16.xpose.msra.mxu0 0
        %891 = vmatpush.bf16.xpose.msra.mxu0 %v882
        %892 = vmatmul.bf16.gmra.mxu0 %v879
        %v893 = vpop.f32.mrf.mxu0
        %v894 = vadd.f32 0.0, %v893
        %v895 = vpop.f32.mrf.mxu0
        %896 = vdwg.mxu0
        %v897 = vsel %vm820, %v837, -inf
        %898 = vmax.xlane.f32.xlu0 %v897
        %v899 = vpop.xlane.xlu0 %898
        %v900 = vsel %vm820, %v856, -inf
        %901 = vmax.xlane.f32.xlu0 %v900
        %v902 = vpop.xlane.xlu0 %901
        %v903 = vsel %vm820, %v875, -inf
        %904 = vmax.xlane.f32.xlu0 %v903
        %v905 = vpop.xlane.xlu0 %904
        %v906 = vsel %vm820, %v894, -inf
        %907 = vmax.xlane.f32.xlu0 %v906
        %v908 = vpop.xlane.xlu0 %907
        %v909 = vsub.f32 %v837, %v899
        %v910 = vsub.f32 %v856, %v902
        %v911 = vsub.f32 %v875, %v905
        %v912 = vsub.f32 %v894, %v908
        %v913 = vmul.f32 %v909, 1.442695
        %v914 = vpow.pop %v913
        %v915 = vmul.f32 %v910, 1.442695
        %v916 = vpow.pop %v915
        %v917 = vmul.f32 %v911, 1.442695
        %v918 = vpow.pop %v917
        %v919 = vmul.f32 %v912, 1.442695
        %v920 = vpow.pop %v919
        %v921 = vsel %vm820, %v914, 0.0
        %922 = vadd.xlane.f32.xlu0 %v921
        %v923 = vpop.xlane.xlu0 %922
        %v924 = vsel %vm820, %v916, 0.0
        %925 = vadd.xlane.f32.xlu0 %v924
        %v926 = vpop.xlane.xlu0 %925
        %v927 = vsel %vm820, %v918, 0.0
        %928 = vadd.xlane.f32.xlu0 %v927
        %v929 = vpop.xlane.xlu0 %928
        %v930 = vsel %vm820, %v920, 0.0
        %931 = vadd.xlane.f32.xlu0 %v930
        %v932 = vpop.xlane.xlu0 %931
        %v933 = vrcp.pop %v923
        %v934 = vrcp.pop %v926
        %v935 = vrcp.pop %v929
        %v936 = vrcp.pop %v932
        %v937 = vpack.c.bf16 %v914, %v914
        %v938 = vpack.c.bf16 %v916, %v916
        %v939 = vpack.c.bf16 %v918, %v918
        %v940 = vpack.c.bf16 %v920, %v920
        %v942 = vsel %vm820, %v937, 0
        %vm944 = vcmask 1043456
        %v946 = vsel %vm944, %v816, 0
        %948 = vmatpush.bf16.msra.mxu0 0
        %949 = vmatpush.bf16.msra.mxu0 0
        %950 = vmatpush.bf16.msra.mxu0 0
        %951 = vmatpush.bf16.msra.mxu0 0
        %952 = vmatpush.bf16.msra.mxu0 0
        %953 = vmatpush.bf16.msra.mxu0 0
        %954 = vmatpush.bf16.msra.mxu0 0
        %955 = vmatpush.bf16.msra.mxu0 %v946
        %956 = vmatmul.bf16.gmra.mxu0 %v942
        %v957 = vpop.f32.mrf.mxu0
        %v958 = vadd.f32 0.0, %v957
        %v959 = vpop.f32.mrf.mxu0
        %960 = vdwg.mxu0
        %v962 = vsel %vm820, %v938, 0
        %v965 = vsel %vm944, %v817, 0
        %967 = vmatpush.bf16.msra.mxu0 0
        %968 = vmatpush.bf16.msra.mxu0 0
        %969 = vmatpush.bf16.msra.mxu0 0
        %970 = vmatpush.bf16.msra.mxu0 0
        %971 = vmatpush.bf16.msra.mxu0 0
        %972 = vmatpush.bf16.msra.mxu0 0
        %973 = vmatpush.bf16.msra.mxu0 0
        %974 = vmatpush.bf16.msra.mxu0 %v965
        %975 = vmatmul.bf16.gmra.mxu0 %v962
        %v976 = vpop.f32.mrf.mxu0
        %v977 = vadd.f32 0.0, %v976
        %v978 = vpop.f32.mrf.mxu0
        %979 = vdwg.mxu0
        %v981 = vsel %vm820, %v939, 0
        %v984 = vsel %vm944, %v818, 0
        %986 = vmatpush.bf16.msra.mxu0 0
        %987 = vmatpush.bf16.msra.mxu0 0
        %988 = vmatpush.bf16.msra.mxu0 0
        %989 = vmatpush.bf16.msra.mxu0 0
        %990 = vmatpush.bf16.msra.mxu0 0
        %991 = vmatpush.bf16.msra.mxu0 0
        %992 = vmatpush.bf16.msra.mxu0 0
        %993 = vmatpush.bf16.msra.mxu0 %v984
        %994 = vmatmul.bf16.gmra.mxu0 %v981
        %v995 = vpop.f32.mrf.mxu0
        %v996 = vadd.f32 0.0, %v995
        %v997 = vpop.f32.mrf.mxu0
        %998 = vdwg.mxu0
        %v1000 = vsel %vm820, %v940, 0
        %v1003 = vsel %vm944, %v819, 0
        %1005 = vmatpush.bf16.msra.mxu0 0
        %1006 = vmatpush.bf16.msra.mxu0 0
        %1007 = vmatpush.bf16.msra.mxu0 0
        %1008 = vmatpush.bf16.msra.mxu0 0
        %1009 = vmatpush.bf16.msra.mxu0 0
        %1010 = vmatpush.bf16.msra.mxu0 0
        %1011 = vmatpush.bf16.msra.mxu0 0
        %1012 = vmatpush.bf16.msra.mxu0 %v1003
        %1013 = vmatmul.bf16.gmra.mxu0 %v1000
        %v1014 = vpop.f32.mrf.mxu0
        %v1015 = vadd.f32 0.0, %v1014
        %v1016 = vpop.f32.mrf.mxu0
        %1017 = vdwg.mxu0
        %v1018 = vmul.f32 %v958, %v933
        %v1019 = vmul.f32 %v977, %v934
        %v1020 = vmul.f32 %v996, %v935
        %v1021 = vmul.f32 %v1015, %v936
        %v1022 = vrot.slane %v1020, 4
        %vm1023 = vcmask 1047556
        %v1024 = vsel %vm1023, %v1022, %v1018
        %v1025 = vrot.slane %v1018, 4
        %v1026 = vsel %vm1023, %v1020, %v1025
        %v1028 = vunpack.c.l.s4 1983009808
        %v1029 = vunpack.c.0.s8 %v1028
        %v1030 = vperm.slane %v1024, %v1029
        %v1032 = vunpack.c.l.s4 1983009808
        %v1033 = vunpack.c.0.s8 %v1032
        %v1034 = vperm.slane %v1026, %v1033
        %v1035 = vrot.slane %v1021, 4
        %v1036 = vsel %vm1023, %v1035, %v1019
        %v1037 = vrot.slane %v1019, 4
        %v1038 = vsel %vm1023, %v1021, %v1037
        %v1040 = vunpack.c.l.s4 1983009808
        %v1041 = vunpack.c.0.s8 %v1040
        %v1042 = vperm.slane %v1036, %v1041
        %v1044 = vunpack.c.l.s4 1983009808
        %v1045 = vunpack.c.0.s8 %v1044
        %v1046 = vperm.slane %v1038, %v1045
        %v1047 = vrot.slane %v1042, 4
        %v1048 = vsel %vm1023, %v1047, %v1030
        %v1049 = vrot.slane %v1030, 4
        %v1050 = vsel %vm1023, %v1042, %v1049
        %v1052 = vunpack.c.l.s4 1934713408
        %v1053 = vunpack.c.0.s8 %v1052
        %v1054 = vperm.slane %v1048, %v1053
        %v1056 = vunpack.c.l.s4 1934713408
        %v1057 = vunpack.c.0.s8 %v1056
        %v1058 = vperm.slane %v1050, %v1057
        %v1059 = vrot.slane %v1046, 4
        %v1060 = vsel %vm1023, %v1059, %v1034
        %v1061 = vrot.slane %v1034, 4
        %v1062 = vsel %vm1023, %v1046, %v1061
        %v1064 = vunpack.c.l.s4 1934713408
        %v1065 = vunpack.c.0.s8 %v1064
        %v1066 = vperm.slane %v1060, %v1065
        %v1068 = vunpack.c.l.s4 1934713408
        %v1069 = vunpack.c.0.s8 %v1068
        %v1070 = vperm.slane %v1062, %v1069
        %v1071 = vrot.slane %v1054, 4
        %v1072 = vsel %vm1023, 0.0, %v1071
        %v1073 = vrot.slane %v1058, 4
        %v1074 = vsel %vm1023, 0.0, %v1073
        %v1075 = vrot.slane %v1066, 4
        %v1076 = vsel %vm1023, 0.0, %v1075
        %v1077 = vrot.slane %v1070, 4
        %v1078 = vsel %vm1023, 0.0, %v1077
        %v1079 = vsel %vm1023, %v1073, %v1054
        %v1081 = vunpack.c.l.s4 1983009808
        %v1082 = vunpack.c.0.s8 %v1081
        %v1083 = vperm.slane %v1079, %v1082
        %v1084 = vrot.slane %v1074, 4
        %v1085 = vsel %vm1023, %v1084, %v1072
        %v1087 = vunpack.c.l.s4 1983009808
        %v1088 = vunpack.c.0.s8 %v1087
        %v1089 = vperm.slane %v1085, %v1088
        %v1090 = vsel %vm1023, %v1077, %v1066
        %v1092 = vunpack.c.l.s4 1983009808
        %v1093 = vunpack.c.0.s8 %v1092
        %v1094 = vperm.slane %v1090, %v1093
        %v1095 = vrot.slane %v1078, 4
        %v1096 = vsel %vm1023, %v1095, %v1076
        %v1098 = vunpack.c.l.s4 1983009808
        %v1099 = vunpack.c.0.s8 %v1098
        %v1100 = vperm.slane %v1096, %v1099
        %v1101 = vrot.slane %v1089, 4
        %v1102 = vsel %vm1023, %v1101, %v1083
        %v1103 = vrot.slane %v1083, 4
        %v1104 = vsel %vm1023, %v1089, %v1103
        %v1106 = vunpack.c.l.s4 1934713408
        %v1107 = vunpack.c.0.s8 %v1106
        %v1108 = vperm.slane %v1102, %v1107
        %v1110 = vunpack.c.l.s4 1934713408
        %v1111 = vunpack.c.0.s8 %v1110
        %v1112 = vperm.slane %v1104, %v1111
        %v1113 = vrot.slane %v1100, 4
        %v1114 = vsel %vm1023, %v1113, %v1094
        %v1115 = vrot.slane %v1094, 4
        %v1116 = vsel %vm1023, %v1100, %v1115
        %v1118 = vunpack.c.l.s4 1934713408
        %v1119 = vunpack.c.0.s8 %v1118
        %v1120 = vperm.slane %v1114, %v1119
        %v1122 = vunpack.c.l.s4 1934713408
        %v1123 = vunpack.c.0.s8 %v1122
        %v1124 = vperm.slane %v1116, %v1123
        %v1125 = vrot.slane %v1120, 4
        %v1126 = vsel %vm1023, %v1125, %v1108
        %v1127 = vrot.slane %v1108, 4
        %v1128 = vsel %vm1023, %v1120, %v1127
        %v1129 = vrot.slane %v1124, 4
        %v1130 = vsel %vm1023, %v1129, %v1112
        %v1131 = vrot.slane %v1112, 4
        %v1132 = vsel %vm1023, %v1124, %v1131
        %1134 = vrot.lane.b32.xlu0 %v1128, 8
        %v1135 = vpop.permute.xlu0 %1134
        %1138 = vrot.lane.b32.xlu0 %v1130, 16
        %v1139 = vpop.permute.xlu0 %1138
        %1142 = vrot.lane.b32.xlu0 %v1132, 24
        %v1143 = vpop.permute.xlu0 %1142
        %v1145 = vsel %vm820, %v1126, %v1135
        %vm1146 = vcmask 130048
        %v1147 = vsel %vm1146, %v1145, %v1139
        %vm1148 = vcmask 195584
        %v1149 = vsel %vm1148, %v1147, %v1143
        %v1150 = vpack.c.bf16 %v1149, %v1149
        %v1151 = vld [vmem:[#allocation7] sm:$0xf]
        %v1152 = vld [vmem:[#allocation7 + $0x4] sm:$0xf]
        %v1153 = vld [vmem:[#allocation7 + $0x8] sm:$0xf]
        %v1154 = vld [vmem:[#allocation7 + $0xc] sm:$0xf]
        %v1155 = vld [vmem:[%s8] sm:$0x1]
        %v1157 = vperm.slane %v1155, 0
        %v1163 = vunpack.c.l.b16 %v1151
        %v1164 = vunpack.c.l.b16 %v1152
        %v1165 = vunpack.c.l.b16 %v1153
        %v1166 = vunpack.c.l.b16 %v1154
        %v1167 = vpack.c.b16 %v1164, %v1163
        %v1168 = vpack.c.b16 %v1166, %v1165
        %v1172 = vsel %vm614, %v1150, 0
        %1174 = vmatpush.bf16.msra.mxu0 0
        %1175 = vmatpush.bf16.msra.mxu0 0
        %1176 = vmatpush.bf16.msra.mxu0 0
        %1177 = vmatpush.bf16.msra.mxu0 0
        %1178 = vmatpush.bf16.msra.mxu0 0
        %1179 = vmatpush.bf16.msra.mxu0 0
        %1180 = vmatpush.bf16.msra.mxu0 %v1168
        %1181 = vmatpush.bf16.msra.mxu0 %v1167
        %1182 = vmatmul.bf16.gmra.mxu0 %v1172
        %v1183 = vpop.f32.mrf.mxu0
        %v1184 = vadd.f32 %v1157, %v1183
        %v1185 = vpop.f32.mrf.mxu0
        %1186 = vdwg.mxu0
        %v1187 = vadd.f32 %v1184, %v611
        %v1188 = vld [vmem:[%s9] sm:$0x1]
        %v1189 = vld [vmem:[%s10] sm:$0x1]
        %v1190 = vsel %vm614, %v1187, 0.0
        %1191 = vadd.xlane.f32.xlu0 %v1190
        %v1192 = vpop.xlane.xlu0 %1191
        %v1193 = vmul.f32 %v1192, %v624
        %v1194 = vsub.f32 %v1187, %v1193
        %v1195 = vmul.f32 %v1194, %v1194
        %v1196 = vsel %vm614, %v1195, 0.0
        %1197 = vadd.xlane.f32.xlu0 %v1196
        %v1198 = vpop.xlane.xlu0 %1197
        %v1199 = vmul.f32 %v1198, %v624
        %v1200 = vadd.f32 %v1199, 1e-06
        %v1201 = vrsqrt.pop %v1200
        %v1202 = vmul.f32 %v1201, %v1200
        %v1203 = vmul.f32 %v1202, %v1201
        %v1204 = vmul.f32 0.5, %v1203
        %v1205 = vsub.f32 1.5, %v1204
        %v1206 = vmul.f32 %v1201, %v1205
        %vm1207 = vweird.f32 %v1200
        %vm1208 = vweird.f32 %v1201
        %vm1209 = vmor %vm1207, %vm1208
        %v1210 = vsel %vm1209, %v1201, %v1206
        %v1211 = vmul.f32 %v1194, %v1210
        %v1213 = vperm.slane %v1188, 0
        %v1215 = vmul.f32 %v1211, %v1213
        %v1217 = vperm.slane %v1189, 0
        %v1219 = vadd.f32 %v1215, %v1217
        %v1220 = vpack.c.bf16 %v1219, %v1219
        %v1221 = vld [vmem:[#allocation8] sm:$0xf]
        %v1222 = vld [vmem:[#allocation8 + $0x4] sm:$0xf]
        %v1223 = vld [vmem:[#allocation8 + $0x8] sm:$0xf]
        %v1224 = vld [vmem:[#allocation8 + $0xc] sm:$0xf]
        %v1225 = vld [vmem:[%s12] sm:$0x1]
        %v1227 = vperm.slane %v1225, 0
        %v1233 = vunpack.c.l.b16 %v1221
        %v1234 = vunpack.c.l.b16 %v1222
        %v1235 = vunpack.c.l.b16 %v1223
        %v1236 = vunpack.c.l.b16 %v1224
        %v1237 = vpack.c.b16 %v1234, %v1233
        %v1238 = vpack.c.b16 %v1236, %v1235
        %v1242 = vsel %vm614, %v1220, 0
        %1244 = vmatpush.bf16.msra.mxu0 0
        %1245 = vmatpush.bf16.msra.mxu0 0
        %1246 = vmatpush.bf16.msra.mxu0 0
        %1247 = vmatpush.bf16.msra.mxu0 0
        %1248 = vmatpush.bf16.msra.mxu0 0
        %1249 = vmatpush.bf16.msra.mxu0 0
        %1250 = vmatpush.bf16.msra.mxu0 %v1238
        %1251 = vmatpush.bf16.msra.mxu0 %v1237
        %1252 = vmatmul.bf16.gmra.mxu0 %v1242
        %v1253 = vpop.f32.mrf.mxu0
        %v1254 = vadd.f32 %v1227, %v1253
        %v1255 = vpop.f32.mrf.mxu0
        %1256 = vdwg.mxu0
        %v1257 = vmul.f32 %v1254, 0.5
        %v1258 = vrcp.pop 1.4142135
        %v1259 = vmul.f32 1.4142135, %v1258
        %v1260 = vsub.f32 1.0, %v1259
        %v1261 = vmul.f32 %v1258, %v1260
        %v1262 = vadd.f32 %v1258, %v1261
        %vm1263 = vweird.f32 %v1258
        %v1264 = vsel %vm1263, %v1258, %v1262
        %v1265 = vmul.f32 %v1254, %v1264
        %v1266 = vmul.f32 %v1265, %v1265
        %v1267 = vmin.f32 16.0, %v1266
        %v1268 = vmul.f32 %v1267, 2.1237322e-06
        %v1269 = vadd.f32 %v1268, 0.00028619796
        %v1270 = vmul.f32 %v1267, %v1269
        %v1271 = vadd.f32 %v1270, 0.0036580483
        %v1272 = vmul.f32 %v1267, %v1271
        %v1273 = vadd.f32 %v1272, 0.05243302
        %v1274 = vmul.f32 %v1267, %v1273
        %v1275 = vadd.f32 %v1274, 0.18741608
        %v1276 = vmul.f32 %v1267, %v1275
        %v1277 = vadd.f32 %v1276, 1.1283791
        %v1278 = vmul.f32 %v1265, %v1277
        %v1279 = vmul.f32 %v1267, 3.8918573e-05
        %v1280 = vadd.f32 %v1279, 0.001143296
        %v1281 = vmul.f32 %v1267, %v1280
        %v1282 = vadd.f32 %v1281, 0.014752088
        %v1283 = vmul.f32 %v1267, %v1282
        %v1284 = vadd.f32 %v1283, 0.112945676
        %v1285 = vmul.f32 %v1267, %v1284
        %v1286 = vadd.f32 %v1285, 0.4994258
        %v1287 = vmul.f32 %v1267, %v1286
        %v1288 = vadd.f32 %v1287, 1.0
        %v1289 = vrcp.pop %v1288
        %v1290 = vmul.f32 %v1288, %v1289
        %v1291 = vsub.f32 1.0, %v1290
        %v1292 = vmul.f32 %v1289, %v1291
        %v1293 = vadd.f32 %v1289, %v1292
        %vm1294 = vweird.f32 %v1288
        %vm1295 = vweird.f32 %v1289
        %vm1296 = vmor %vm1294, %vm1295
        %v1297 = vsel %vm1296, %v1289, %v1293
        %v1298 = vand.u32 2147483647, %v1288
        %vm1299 = vcmp.eq.f32.partialorder %v1298, 8.507059e+37
        %v1300 = vand.u32 %v1288, 2147483648
        %v1301 = vor.u32 1.1754944e-38, %v1300
        %v1302 = vsel %vm1299, %v1301, %v1297
        %v1303 = vmul.f32 %v1278, %v1302
        %v1304 = vmin.f32 %v1303, 1.0
        %v1305 = vmax.f32 %v1304, -1.0
        %v1306 = vadd.f32 %v1305, 1.0
        %v1307 = vmul.f32 %v1257, %v1306
        %v1308 = vpack.c.bf16 %v1307, %v1307
        %v1309 = vld [vmem:[%s13] sm:$0xf]
        %v1310 = vld [vmem:[%s13 + $0x4] sm:$0xf]
        %v1311 = vld [vmem:[%s13 + $0x8] sm:$0xf]
        %v1312 = vld [vmem:[%s13 + $0xc] sm:$0xf]
        %v1313 = vld [vmem:[%s13 + $0x10] sm:$0xf]
        %v1314 = vld [vmem:[%s13 + $0x14] sm:$0xf]
        %v1315 = vld [vmem:[%s13 + $0x18] sm:$0xf]
        %v1316 = vld [vmem:[%s13 + $0x1c] sm:$0xf]
        %v1317 = vld [vmem:[%s14] sm:$0x1]
        %v1319 = vperm.slane %v1317, 0
        %v1329 = vunpack.c.l.b16 %v1309
        %v1330 = vunpack.c.l.b16 %v1310
        %v1331 = vunpack.c.l.b16 %v1311
        %v1332 = vunpack.c.l.b16 %v1312
        %v1333 = vunpack.c.l.b16 %v1313
        %v1334 = vunpack.c.l.b16 %v1314
        %v1335 = vunpack.c.l.b16 %v1315
        %v1336 = vunpack.c.l.b16 %v1316
        %v1337 = vpack.c.b16 %v1330, %v1329
        %v1338 = vpack.c.b16 %v1332, %v1331
        %v1339 = vpack.c.b16 %v1334, %v1333
        %v1340 = vpack.c.b16 %v1336, %v1335
        %vm1345 = vcmask 523264
        %v1347 = vsel %vm1345, %v1308, 0
        %1349 = vmatpush.bf16.msra.mxu0 0
        %1350 = vmatpush.bf16.msra.mxu0 0
        %1351 = vmatpush.bf16.msra.mxu0 0
        %1352 = vmatpush.bf16.msra.mxu0 0
        %1353 = vmatpush.bf16.msra.mxu0 %v1340
        %1354 = vmatpush.bf16.msra.mxu0 %v1339
        %1355 = vmatpush.bf16.msra.mxu0 %v1338
        %1356 = vmatpush.bf16.msra.mxu0 %v1337
        %1357 = vmatmul.bf16.gmra.mxu0 %v1347
        %v1358 = vpop.f32.mrf.mxu0
        %v1359 = vadd.f32 %v1319, %v1358
        %v1360 = vpop.f32.mrf.mxu0
        %1361 = vdwg.mxu0
        %v1362 = vadd.f32 %v1187, %v1359
        %1363 = vst.msk [vmem:[%s597] sm:$0xff] %vm614, %v1362
        %s1364 = sand.u32 %s386, 1
        %s1365 = scalar_lea.sflag [#allocation4], %s1364
        %s1366 = sand.u32 %s386, 1
        %s1367 = smul.addr %s1366, 8
        %s1368 = scalar_lea.vmem [#allocation10], %s1367
        // Predicated region
        $region97: #{tpu_custom_call.1} parent=79 // pred_check
          %p1369 = pneg %p396
        $region98: #{tpu_custom_call.1} parent=79 // pred_check_branch
          %1371 = sbr.rel (%p1369) target = $region100
        $region99: #{tpu_custom_call.1} parent=79 // pred_region
          %1373 = vsyncadd %s1365, 0
          %s1374 = sadd.s32 %s37, %s36
          %s1375 = smul.addr %s1374, 8
          %s1376 = scalar_lea.hbm %s15, %s1375
          %s1378 = sshll.u32 %s1368, 4
          %s1379 = int_to_ptr.vmem [resolvable:$true] %s1378
          %s1380 = sshll.u32 %s1376, 4
          %s1381 = int_to_ptr.hbm [resolvable:$true] %s1380
          %1383 = dma.vmem_to_hbm [thread:$0]  %s1379, 128, %s1381, %s1365
        $region100: #{tpu_custom_call.1} parent=79 // pred_fallthru
          _
      $region80: #{tpu_custom_call.1} parent=5 // pred_fallthru
        _
      %p1384 = scmp.le.s32.totalorder 2, %s27
      // Predicated region
      $region101: #{tpu_custom_call.1} parent=5 // pred_check
        %p1385 = pneg %p1384
      $region102: #{tpu_custom_call.1} parent=5 // pred_check_branch
        %1387 = sbr.rel (%p1385) target = $region104
      $region103: #{tpu_custom_call.1} parent=5 // pred_region
        %s1388 = ssub.s32 %s27, 2
        // Predicated region
        $region105: #{tpu_custom_call.1} parent=103 // pred_check
          %p1389 = pneg %p402
        $region106: #{tpu_custom_call.1} parent=103 // pred_check_branch
          %1391 = sbr.rel (%p1389) target = $region108
        $region107: #{tpu_custom_call.1} parent=103 // pred_region
          %s1392 = sand.u32 %s387, 1
          %s1393 = scalar_lea.sflag [#allocation4], %s1392
          %s1394 = sand.u32 %s387, 1
          %s1395 = smul.addr %s1394, 8
          %s1396 = scalar_lea.vmem [#allocation10], %s1395
          %1398 = dma.done %s1393, 128
        $region108: #{tpu_custom_call.1} parent=103 // pred_fallthru
          _
      $region104: #{tpu_custom_call.1} parent=5 // pred_fallthru
        _
    $region6: #{tpu_custom_call.1} parent=1 // loop_footer
      %s31 = sadd.s32 1, %s27
    $region7: #{tpu_custom_call.1} parent=1 // loop_footer_branch
      %26 = sbr.rel target = $region3
    $region8: #{tpu_custom_call.1} parent=1 // loop_exit
      _
    %1399 = vsyncpa [#allocation3], 1
    %s1400 = scalar_lea.sflag [#allocation3], 1
    %1401 = vsyncpa %s1400, 1
    %1402 = vsyncpa [#allocation6], 1
    %1403 = vsyncpa [#allocation9], 1
    %1404 = vsyncpa [#allocation4], 1
    %s1405 = scalar_lea.sflag [#allocation4], 1
    %1406 = vsyncpa %s1405, 1

// kernel: tpu_custom_call.1
$region0: #{tpu_custom_call.1}
  #allocation0 [shape = 'u32[]', space=smem, size = 0x4, offset = 0x4, fixed_abs, tag = 'smem constant byte address 0x4 - core index']
  #allocation1 [shape = 'u32[72,128]{1,0:T(1,128)}', space=vmem, size = 0x9000, scoped, tag = 'internal scratch']
  %s0 = inlined_call_operand.vmem [shape: f32[2,8,32], index: 0, kind: input, shape index: {}]
  %s1 = inlined_call_operand.vmem [shape: bf16[2,4,8,8], index: 1, kind: input, shape index: {}]
  %s2 = inlined_call_operand.hbm [shape: bf16[2,4,8,8], index: 2, kind: input, shape index: {}]
  %s3 = inlined_call_operand.vmem [shape: f32[1,32], index: 3, kind: input, shape index: {}]
  %s4 = inlined_call_operand.vmem [shape: f32[1,32], index: 4, kind: input, shape index: {}]
  %s5 = inlined_call_operand.hbm [shape: bf16[32,32], index: 5, kind: input, shape index: {}]
  %s6 = inlined_call_operand.vmem [shape: f32[1,32], index: 6, kind: input, shape index: {}]
  %s7 = inlined_call_operand.hbm [shape: bf16[32,32], index: 7, kind: input, shape index: {}]
  %s8 = inlined_call_operand.vmem [shape: f32[1,32], index: 8, kind: input, shape index: {}]
  %s9 = inlined_call_operand.vmem [shape: f32[1,32], index: 9, kind: input, shape index: {}]
  %s10 = inlined_call_operand.vmem [shape: f32[1,32], index: 10, kind: input, shape index: {}]
  %s11 = inlined_call_operand.hbm [shape: bf16[32,64], index: 11, kind: input, shape index: {}]
  %s12 = inlined_call_operand.vmem [shape: f32[1,64], index: 12, kind: input, shape index: {}]
  %s13 = inlined_call_operand.vmem [shape: bf16[64,32], index: 13, kind: input, shape index: {}]
  %s14 = inlined_call_operand.vmem [shape: f32[1,32], index: 14, kind: input, shape index: {}]
  %s15 = inlined_call_operand.hbm [shape: f32[2,8,32], index: 15, kind: output, shape index: {}]
  %s16 = sld [smem:[#allocation0]]
  $region109: #{tpu_custom_call.1} parent=0
    _
  %s18 = ssub.s32 1, %s16
  %s19 = scalar_select 0, %s18, %s16
  $region1: #{tpu_custom_call.1} parent=0
    #allocation2 [shape = 'u8[16384]{0}', space=vmem, size = 0x4000, scoped, tag = 'input window, operand 2']
    #allocation3 [shape = 's32[2]{0}', space=sflag, size = 0x8, scoped, tag = 'scoped memory for tpu_custom_call.1']
    #allocation4 [shape = 's32[2]{0}', space=sflag, size = 0x8, scoped, tag = 'scoped memory for tpu_custom_call.1']
    #allocation5 [shape = 'u8[8192]{0}', space=vmem, size = 0x2000, scoped, tag = 'input window, operand 5, single buffered']
    #allocation6 [shape = 's32[1]{0}', space=sflag, size = 0x4, scoped, tag = 'scoped memory for tpu_custom_call.1']
    #allocation7 [shape = 'u8[8192]{0}', space=vmem, size = 0x2000, scoped, tag = 'input window, operand 7, single buffered']
    #allocation8 [shape = 'u8[8192]{0}', space=vmem, size = 0x2000, scoped, tag = 'input window, operand 11, single buffered']
    #allocation9 [shape = 's32[1]{0}', space=sflag, size = 0x4, scoped, tag = 'scoped memory for tpu_custom_call.1']
    #allocation10 [shape = 'u8[8192]{0}', space=vmem, size = 0x2000, scoped, tag = 'output window, operand 0']
    %20 = vsyncpa [#allocation3], 0
    %s21 = scalar_lea.sflag [#allocation3], 1
    %22 = vsyncpa %s21, 0
    %23 = vsyncpa [#allocation6], 0
    %24 = vsyncpa [#allocation9], 0
    %25 = vsyncpa [#allocation4], 0
    %s26 = scalar_lea.sflag [#allocation4], 1
    %27 = vsyncpa %s26, 0
    loop: start=0, step=1, limit=4
    $region2: #{tpu_custom_call.1} parent=1 // loop_pre_header
      _
    $region3: #{tpu_custom_call.1} parent=1 // loop_header
      %s29 = sphi 0, %s33
      %p30 = scmp.ge.s32.totalorder %s29, 4
      %s36 = sphi 0, %s48
      %s37 = sphi 0, %s44
      %s38 = sphi 0, %s36
      %s39 = sphi 0, %s37
      %s40 = sphi 0, %s38
      %s41 = sphi 0, %s39
      %s53 = sphi 0, %s55
      %s56 = sphi 0, %s53
      %s57 = sphi 0, %s56
      %s73 = sphi 0, %s57
      %s79 = sphi 0, %s81
      %s82 = sphi 0, %s79
      %s83 = sphi 0, %s82
      %s99 = sphi 0, %s83
      %s105 = sphi 0, %s107
      %s108 = sphi 0, %s105
      %s109 = sphi 0, %s108
      %s125 = sphi 0, %s109
      %s129 = sphi 0, %s129
      %s131 = sphi 0, %s129
      %s132 = sphi 0, %s131
      %s146 = sphi 0, %s132
      %s150 = sphi 0, %s150
      %s152 = sphi 0, %s150
      %s153 = sphi 0, %s152
      %s167 = sphi 0, %s153
      %s171 = sphi 0, %s171
      %s173 = sphi 0, %s171
      %s174 = sphi 0, %s173
      %s188 = sphi 0, %s174
      %s192 = sphi 0, %s192
      %s194 = sphi 0, %s192
      %s195 = sphi 0, %s194
      %s209 = sphi 0, %s195
      %s213 = sphi 0, %s213
      %s215 = sphi 0, %s213
      %s216 = sphi 0, %s215
      %s230 = sphi 0, %s216
      %s234 = sphi 0, %s234
      %s236 = sphi 0, %s234
      %s237 = sphi 0, %s236
      %s251 = sphi 0, %s237
      %s255 = sphi 0, %s255
      %s257 = sphi 0, %s255
      %s258 = sphi 0, %s257
      %s272 = sphi 0, %s258
      %s276 = sphi 0, %s276
      %s278 = sphi 0, %s276
      %s279 = sphi 0, %s278
      %s293 = sphi 0, %s279
      %s297 = sphi 0, %s297
      %s299 = sphi 0, %s297
      %s300 = sphi 0, %s299
      %s314 = sphi 0, %s300
      %s318 = sphi 0, %s318
      %s320 = sphi 0, %s318
      %s321 = sphi 0, %s320
      %s335 = sphi 0, %s321
      %s339 = sphi 0, %s339
      %s341 = sphi 0, %s339
      %s342 = sphi 0, %s341
      %s356 = sphi 0, %s342
      %s360 = sphi 0, %s360
      %s362 = sphi 0, %s360
      %s363 = sphi 0, %s362
      %s377 = sphi 0, %s363
      %s385 = sphi 0, %s387
      %s388 = sphi 0, %s385
      %s389 = sphi 0, %s388
      %s405 = sphi 0, %s389
    $region4: #{tpu_custom_call.1} parent=1 // loop_header_branch
      %32 = sbr.rel (%p30) target = $region8
    $region5: #{tpu_custom_call.1} parent=1 // loop_body
      %s34 = ssub.s32 %s29, 1
      %s35 = ssub.s32 %s29, 2
      %s42 = sadd.s32 1, %s37
      %p43 = scmp.ge.s32.totalorder %s42, 1
      %s44 = scalar_select %p43, 0, %s42
      %s45 = sadd.s32 1, %s36
      %s46 = scalar_select %p43, %s45, %s36
      %p47 = scmp.ge.s32.totalorder %s46, 2
      %s48 = scalar_select %p47, 0, %s46
      %s49 = ssub.s32 %s36, %s48
      %s50 = ssub.s32 %s37, %s44
      %s51 = sor.u32 %s49, %s50
      %p52 = scmp.eq.s32.totalorder %s51, 0
      %s54 = sadd.s32 %s53, 1
      %s55 = scalar_select %p52, %s53, %s54
      %p58 = pneg %p52
      %p59 = scmp.eq.s32.totalorder %s29, 1
      %p60 = por %p58, %p59
      %p61 = scmp.ne.s32.totalorder %s53, %s56
      %p62 = scmp.eq.s32.totalorder %s29, 0
      %p63 = por %p61, %p62
      %p64 = scmp.ne.s32.totalorder %s53, %s56
      %p65 = scmp.eq.s32.totalorder %s34, 1
      %p66 = por %p64, %p65
      %p67 = scmp.ne.s32.totalorder %s56, %s57
      %p68 = scmp.eq.s32.totalorder %s34, 0
      %p69 = por %p67, %p68
      %p70 = scmp.ne.s32.totalorder %s56, %s57
      %p71 = scmp.eq.s32.totalorder %s35, 1
      %p72 = por %p70, %p71
      %p74 = scmp.ne.s32.totalorder %s57, %s73
      %p75 = scmp.eq.s32.totalorder %s35, 0
      %p76 = por %p74, %p75
      %s77 = ssub.s32 %s36, %s48
      %p78 = scmp.eq.s32.totalorder %s77, 0
      %s80 = sadd.s32 %s79, 1
      %s81 = scalar_select %p78, %s79, %s80
      %p84 = pneg %p78
      %p85 = scmp.eq.s32.totalorder %s29, 1
      %p86 = por %p84, %p85
      %p87 = scmp.ne.s32.totalorder %s79, %s82
      %p88 = scmp.eq.s32.totalorder %s29, 0
      %p89 = por %p87, %p88
      %p90 = scmp.ne.s32.totalorder %s79, %s82
      %p91 = scmp.eq.s32.totalorder %s34, 1
      %p92 = por %p90, %p91
      %p93 = scmp.ne.s32.totalorder %s82, %s83
      %p94 = scmp.eq.s32.totalorder %s34, 0
      %p95 = por %p93, %p94
      %p96 = scmp.ne.s32.totalorder %s82, %s83
      %p97 = scmp.eq.s32.totalorder %s35, 1
      %p98 = por %p96, %p97
      %p100 = scmp.ne.s32.totalorder %s83, %s99
      %p101 = scmp.eq.s32.totalorder %s35, 0
      %p102 = por %p100, %p101
      %s103 = ssub.s32 %s36, %s48
      %p104 = scmp.eq.s32.totalorder %s103, 0
      %s106 = sadd.s32 %s105, 1
      %s107 = scalar_select %p104, %s105, %s106
      %p110 = pneg %p104
      %p111 = scmp.eq.s32.totalorder %s29, 1
      %p112 = por %p110, %p111
      %p113 = scmp.ne.s32.totalorder %s105, %s108
      %p114 = scmp.eq.s32.totalorder %s29, 0
      %p115 = por %p113, %p114
      %p116 = scmp.ne.s32.totalorder %s105, %s108
      %p117 = scmp.eq.s32.totalorder %s34, 1
      %p118 = por %p116, %p117
      %p119 = scmp.ne.s32.totalorder %s108, %s109
      %p120 = scmp.eq.s32.totalorder %s34, 0
      %p121 = por %p119, %p120
      %p122 = scmp.ne.s32.totalorder %s108, %s109
      %p123 = scmp.eq.s32.totalorder %s35, 1
      %p124 = por %p122, %p123
      %p126 = scmp.ne.s32.totalorder %s109, %s125
      %p127 = scmp.eq.s32.totalorder %s35, 0
      %p128 = por %p126, %p127
      %s130 = sadd.s32 %s129, 1
      %p133 = scmp.eq.s32.totalorder %s29, 1
      %p134 = scmp.ne.s32.totalorder %s129, %s131
      %p135 = scmp.eq.s32.totalorder %s29, 0
      %p136 = por %p134, %p135
      %p137 = scmp.ne.s32.totalorder %s129, %s131
      %p138 = scmp.eq.s32.totalorder %s34, 1
      %p139 = por %p137, %p138
      %p140 = scmp.ne.s32.totalorder %s131, %s132
      %p141 = scmp.eq.s32.totalorder %s34, 0
      %p142 = por %p140, %p141
      %p143 = scmp.ne.s32.totalorder %s131, %s132
      %p144 = scmp.eq.s32.totalorder %s35, 1
      %p145 = por %p143, %p144
      %p147 = scmp.ne.s32.totalorder %s132, %s146
      %p148 = scmp.eq.s32.totalorder %s35, 0
      %p149 = por %p147, %p148
      %s151 = sadd.s32 %s150, 1
      %p154 = scmp.eq.s32.totalorder %s29, 1
      %p155 = scmp.ne.s32.totalorder %s150, %s152
      %p156 = scmp.eq.s32.totalorder %s29, 0
      %p157 = por %p155, %p156
      %p158 = scmp.ne.s32.totalorder %s150, %s152
      %p159 = scmp.eq.s32.totalorder %s34, 1
      %p160 = por %p158, %p159
      %p161 = scmp.ne.s32.totalorder %s152, %s153
      %p162 = scmp.eq.s32.totalorder %s34, 0
      %p163 = por %p161, %p162
      %p164 = scmp.ne.s32.totalorder %s152, %s153
      %p165 = scmp.eq.s32.totalorder %s35, 1
      %p166 = por %p164, %p165
      %p168 = scmp.ne.s32.totalorder %s153, %s167
      %p169 = scmp.eq.s32.totalorder %s35, 0
      %p170 = por %p168, %p169
      %s172 = sadd.s32 %s171, 1
      %p175 = scmp.eq.s32.totalorder %s29, 1
      %p176 = scmp.ne.s32.totalorder %s171, %s173
      %p177 = scmp.eq.s32.totalorder %s29, 0
      %p178 = por %p176, %p177
      %p179 = scmp.ne.s32.totalorder %s171, %s173
      %p180 = scmp.eq.s32.totalorder %s34, 1
      %p181 = por %p179, %p180
      %p182 = scmp.ne.s32.totalorder %s173, %s174
      %p183 = scmp.eq.s32.totalorder %s34, 0
      %p184 = por %p182, %p183
      %p185 = scmp.ne.s32.totalorder %s173, %s174
      %p186 = scmp.eq.s32.totalorder %s35, 1
      %p187 = por %p185, %p186
      %p189 = scmp.ne.s32.totalorder %s174, %s188
      %p190 = scmp.eq.s32.totalorder %s35, 0
      %p191 = por %p189, %p190
      %s193 = sadd.s32 %s192, 1
      %p196 = scmp.eq.s32.totalorder %s29, 1
      %p197 = scmp.ne.s32.totalorder %s192, %s194
      %p198 = scmp.eq.s32.totalorder %s29, 0
      %p199 = por %p197, %p198
      %p200 = scmp.ne.s32.totalorder %s192, %s194
      %p201 = scmp.eq.s32.totalorder %s34, 1
      %p202 = por %p200, %p201
      %p203 = scmp.ne.s32.totalorder %s194, %s195
      %p204 = scmp.eq.s32.totalorder %s34, 0
      %p205 = por %p203, %p204
      %p206 = scmp.ne.s32.totalorder %s194, %s195
      %p207 = scmp.eq.s32.totalorder %s35, 1
      %p208 = por %p206, %p207
      %p210 = scmp.ne.s32.totalorder %s195, %s209
      %p211 = scmp.eq.s32.totalorder %s35, 0
      %p212 = por %p210, %p211
      %s214 = sadd.s32 %s213, 1
      %p217 = scmp.eq.s32.totalorder %s29, 1
      %p218 = scmp.ne.s32.totalorder %s213, %s215
      %p219 = scmp.eq.s32.totalorder %s29, 0
      %p220 = por %p218, %p219
      %p221 = scmp.ne.s32.totalorder %s213, %s215
      %p222 = scmp.eq.s32.totalorder %s34, 1
      %p223 = por %p221, %p222
      %p224 = scmp.ne.s32.totalorder %s215, %s216
      %p225 = scmp.eq.s32.totalorder %s34, 0
      %p226 = por %p224, %p225
      %p227 = scmp.ne.s32.totalorder %s215, %s216
      %p228 = scmp.eq.s32.totalorder %s35, 1
      %p229 = por %p227, %p228
      %p231 = scmp.ne.s32.totalorder %s216, %s230
      %p232 = scmp.eq.s32.totalorder %s35, 0
      %p233 = por %p231, %p232
      %s235 = sadd.s32 %s234, 1
      %p238 = scmp.eq.s32.totalorder %s29, 1
      %p239 = scmp.ne.s32.totalorder %s234, %s236
      %p240 = scmp.eq.s32.totalorder %s29, 0
      %p241 = por %p239, %p240
      %p242 = scmp.ne.s32.totalorder %s234, %s236
      %p243 = scmp.eq.s32.totalorder %s34, 1
      %p244 = por %p242, %p243
      %p245 = scmp.ne.s32.totalorder %s236, %s237
      %p246 = scmp.eq.s32.totalorder %s34, 0
      %p247 = por %p245, %p246
      %p248 = scmp.ne.s32.totalorder %s236, %s237
      %p249 = scmp.eq.s32.totalorder %s35, 1
      %p250 = por %p248, %p249
      %p252 = scmp.ne.s32.totalorder %s237, %s251
      %p253 = scmp.eq.s32.totalorder %s35, 0
      %p254 = por %p252, %p253
      %s256 = sadd.s32 %s255, 1
      %p259 = scmp.eq.s32.totalorder %s29, 1
      %p260 = scmp.ne.s32.totalorder %s255, %s257
      %p261 = scmp.eq.s32.totalorder %s29, 0
      %p262 = por %p260, %p261
      %p263 = scmp.ne.s32.totalorder %s255, %s257
      %p264 = scmp.eq.s32.totalorder %s34, 1
      %p265 = por %p263, %p264
      %p266 = scmp.ne.s32.totalorder %s257, %s258
      %p267 = scmp.eq.s32.totalorder %s34, 0
      %p268 = por %p266, %p267
      %p269 = scmp.ne.s32.totalorder %s257, %s258
      %p270 = scmp.eq.s32.totalorder %s35, 1
      %p271 = por %p269, %p270
      %p273 = scmp.ne.s32.totalorder %s258, %s272
      %p274 = scmp.eq.s32.totalorder %s35, 0
      %p275 = por %p273, %p274
      %s277 = sadd.s32 %s276, 1
      %p280 = scmp.eq.s32.totalorder %s29, 1
      %p281 = scmp.ne.s32.totalorder %s276, %s278
      %p282 = scmp.eq.s32.totalorder %s29, 0
      %p283 = por %p281, %p282
      %p284 = scmp.ne.s32.totalorder %s276, %s278
      %p285 = scmp.eq.s32.totalorder %s34, 1
      %p286 = por %p284, %p285
      %p287 = scmp.ne.s32.totalorder %s278, %s279
      %p288 = scmp.eq.s32.totalorder %s34, 0
      %p289 = por %p287, %p288
      %p290 = scmp.ne.s32.totalorder %s278, %s279
      %p291 = scmp.eq.s32.totalorder %s35, 1
      %p292 = por %p290, %p291
      %p294 = scmp.ne.s32.totalorder %s279, %s293
      %p295 = scmp.eq.s32.totalorder %s35, 0
      %p296 = por %p294, %p295
      %s298 = sadd.s32 %s297, 1
      %p301 = scmp.eq.s32.totalorder %s29, 1
      %p302 = scmp.ne.s32.totalorder %s297, %s299
      %p303 = scmp.eq.s32.totalorder %s29, 0
      %p304 = por %p302, %p303
      %p305 = scmp.ne.s32.totalorder %s297, %s299
      %p306 = scmp.eq.s32.totalorder %s34, 1
      %p307 = por %p305, %p306
      %p308 = scmp.ne.s32.totalorder %s299, %s300
      %p309 = scmp.eq.s32.totalorder %s34, 0
      %p310 = por %p308, %p309
      %p311 = scmp.ne.s32.totalorder %s299, %s300
      %p312 = scmp.eq.s32.totalorder %s35, 1
      %p313 = por %p311, %p312
      %p315 = scmp.ne.s32.totalorder %s300, %s314
      %p316 = scmp.eq.s32.totalorder %s35, 0
      %p317 = por %p315, %p316
      %s319 = sadd.s32 %s318, 1
      %p322 = scmp.eq.s32.totalorder %s29, 1
      %p323 = scmp.ne.s32.totalorder %s318, %s320
      %p324 = scmp.eq.s32.totalorder %s29, 0
      %p325 = por %p323, %p324
      %p326 = scmp.ne.s32.totalorder %s318, %s320
      %p327 = scmp.eq.s32.totalorder %s34, 1
      %p328 = por %p326, %p327
      %p329 = scmp.ne.s32.totalorder %s320, %s321
      %p330 = scmp.eq.s32.totalorder %s34, 0
      %p331 = por %p329, %p330
      %p332 = scmp.ne.s32.totalorder %s320, %s321
      %p333 = scmp.eq.s32.totalorder %s35, 1
      %p334 = por %p332, %p333
      %p336 = scmp.ne.s32.totalorder %s321, %s335
      %p337 = scmp.eq.s32.totalorder %s35, 0
      %p338 = por %p336, %p337
      %s340 = sadd.s32 %s339, 1
      %p343 = scmp.eq.s32.totalorder %s29, 1
      %p344 = scmp.ne.s32.totalorder %s339, %s341
      %p345 = scmp.eq.s32.totalorder %s29, 0
      %p346 = por %p344, %p345
      %p347 = scmp.ne.s32.totalorder %s339, %s341
      %p348 = scmp.eq.s32.totalorder %s34, 1
      %p349 = por %p347, %p348
      %p350 = scmp.ne.s32.totalorder %s341, %s342
      %p351 = scmp.eq.s32.totalorder %s34, 0
      %p352 = por %p350, %p351
      %p353 = scmp.ne.s32.totalorder %s341, %s342
      %p354 = scmp.eq.s32.totalorder %s35, 1
      %p355 = por %p353, %p354
      %p357 = scmp.ne.s32.totalorder %s342, %s356
      %p358 = scmp.eq.s32.totalorder %s35, 0
      %p359 = por %p357, %p358
      %s361 = sadd.s32 %s360, 1
      %p364 = scmp.eq.s32.totalorder %s29, 1
      %p365 = scmp.ne.s32.totalorder %s360, %s362
      %p366 = scmp.eq.s32.totalorder %s29, 0
      %p367 = por %p365, %p366
      %p368 = scmp.ne.s32.totalorder %s360, %s362
      %p369 = scmp.eq.s32.totalorder %s34, 1
      %p370 = por %p368, %p369
      %p371 = scmp.ne.s32.totalorder %s362, %s363
      %p372 = scmp.eq.s32.totalorder %s34, 0
      %p373 = por %p371, %p372
      %p374 = scmp.ne.s32.totalorder %s362, %s363
      %p375 = scmp.eq.s32.totalorder %s35, 1
      %p376 = por %p374, %p375
      %p378 = scmp.ne.s32.totalorder %s363, %s377
      %p379 = scmp.eq.s32.totalorder %s35, 0
      %p380 = por %p378, %p379
      %s381 = ssub.s32 %s36, %s48
      %s382 = ssub.s32 %s37, %s44
      %s383 = sor.u32 %s381, %s382
      %p384 = scmp.eq.s32.totalorder %s383, 0
      %s386 = sadd.s32 %s385, 1
      %s387 = scalar_select %p384, %s385, %s386
      %p390 = pneg %p384
      %p391 = scmp.eq.s32.totalorder %s29, 1
      %p392 = por %p390, %p391
      %p393 = scmp.ne.s32.totalorder %s385, %s388
      %p394 = scmp.eq.s32.totalorder %s29, 0
      %p395 = por %p393, %p394
      %p396 = scmp.ne.s32.totalorder %s385, %s388
      %p397 = scmp.eq.s32.totalorder %s34, 1
      %p398 = por %p396, %p397
      %p399 = scmp.ne.s32.totalorder %s388, %s389
      %p400 = scmp.eq.s32.totalorder %s34, 0
      %p401 = por %p399, %p400
      %p402 = scmp.ne.s32.totalorder %s388, %s389
      %p403 = scmp.eq.s32.totalorder %s35, 1
      %p404 = por %p402, %p403
      %p406 = scmp.ne.s32.totalorder %s389, %s405
      %p407 = scmp.eq.s32.totalorder %s35, 0
      %p408 = por %p406, %p407
      %p409 = scmp.le.s32.totalorder 1, %s29
      %p410 = scmp.lt.s32.totalorder %s29, 3
      %p411 = pnand %p409, %p410
      %p412 = pneg %p411
      // Predicated region
      $region9: #{tpu_custom_call.1} parent=5 // pred_check
        _
      $region10: #{tpu_custom_call.1} parent=5 // pred_check_branch
        %414 = sbr.rel (%p411) target = $region12
      $region11: #{tpu_custom_call.1} parent=5 // pred_region
        %s415 = ssub.s32 %s29, 1
        // Predicated region
        $region13: #{tpu_custom_call.1} parent=11 // pred_check
          %p416 = pneg %p142
        $region14: #{tpu_custom_call.1} parent=11 // pred_check_branch
          %418 = sbr.rel (%p416) target = $region16
        $region15: #{tpu_custom_call.1} parent=11 // pred_region
          _
        $region16: #{tpu_custom_call.1} parent=11 // pred_fallthru
          _
        // Predicated region
        $region17: #{tpu_custom_call.1} parent=11 // pred_check
          %p419 = pneg %p163
        $region18: #{tpu_custom_call.1} parent=11 // pred_check_branch
          %421 = sbr.rel (%p419) target = $region20
        $region19: #{tpu_custom_call.1} parent=11 // pred_region
          _
        $region20: #{tpu_custom_call.1} parent=11 // pred_fallthru
          _
        // Predicated region
        $region21: #{tpu_custom_call.1} parent=11 // pred_check
          %p422 = pneg %p184
        $region22: #{tpu_custom_call.1} parent=11 // pred_check_branch
          %424 = sbr.rel (%p422) target = $region24
        $region23: #{tpu_custom_call.1} parent=11 // pred_region
          %426 = vsyncadd [#allocation6], 0
          %s427 = sshll.u32 %s5, 4
          %s428 = int_to_ptr.hbm [resolvable:$true] %s427
          %s429 = sshll.u32 [#allocation5], 4
          %s430 = int_to_ptr.vmem [resolvable:$true] %s429
          %435 = dma.hbm_to_vmem [thread:$0]  %s428, 256, %s430, [#allocation6], 64, 64, 4
        $region24: #{tpu_custom_call.1} parent=11 // pred_fallthru
          _
        // Predicated region
        $region25: #{tpu_custom_call.1} parent=11 // pred_check
          %p436 = pneg %p205
        $region26: #{tpu_custom_call.1} parent=11 // pred_check_branch
          %438 = sbr.rel (%p436) target = $region28
        $region27: #{tpu_custom_call.1} parent=11 // pred_region
          _
        $region28: #{tpu_custom_call.1} parent=11 // pred_fallthru
          _
        // Predicated region
        $region29: #{tpu_custom_call.1} parent=11 // pred_check
          %p439 = pneg %p226
        $region30: #{tpu_custom_call.1} parent=11 // pred_check_branch
          %441 = sbr.rel (%p439) target = $region32
        $region31: #{tpu_custom_call.1} parent=11 // pred_region
          %443 = vsyncadd [#allocation6], 0
          %s444 = sshll.u32 %s7, 4
          %s445 = int_to_ptr.hbm [resolvable:$true] %s444
          %s446 = sshll.u32 [#allocation7], 4
          %s447 = int_to_ptr.vmem [resolvable:$true] %s446
          %452 = dma.hbm_to_vmem [thread:$0]  %s445, 256, %s447, [#allocation6], 64, 64, 4
        $region32: #{tpu_custom_call.1} parent=11 // pred_fallthru
          _
        // Predicated region
        $region33: #{tpu_custom_call.1} parent=11 // pred_check
          %p453 = pneg %p247
        $region34: #{tpu_custom_call.1} parent=11 // pred_check_branch
          %455 = sbr.rel (%p453) target = $region36
        $region35: #{tpu_custom_call.1} parent=11 // pred_region
          _
        $region36: #{tpu_custom_call.1} parent=11 // pred_fallthru
          _
        // Predicated region
        $region37: #{tpu_custom_call.1} parent=11 // pred_check
          %p456 = pneg %p268
        $region38: #{tpu_custom_call.1} parent=11 // pred_check_branch
          %458 = sbr.rel (%p456) target = $region40
        $region39: #{tpu_custom_call.1} parent=11 // pred_region
          _
        $region40: #{tpu_custom_call.1} parent=11 // pred_fallthru
          _
        // Predicated region
        $region41: #{tpu_custom_call.1} parent=11 // pred_check
          %p459 = pneg %p289
        $region42: #{tpu_custom_call.1} parent=11 // pred_check_branch
          %461 = sbr.rel (%p459) target = $region44
        $region43: #{tpu_custom_call.1} parent=11 // pred_region
          _
        $region44: #{tpu_custom_call.1} parent=11 // pred_fallthru
          _
        // Predicated region
        $region45: #{tpu_custom_call.1} parent=11 // pred_check
          %p462 = pneg %p310
        $region46: #{tpu_custom_call.1} parent=11 // pred_check_branch
          %464 = sbr.rel (%p462) target = $region48
        $region47: #{tpu_custom_call.1} parent=11 // pred_region
          %466 = vsyncadd [#allocation9], 0
          %s467 = sshll.u32 %s11, 4
          %s468 = int_to_ptr.hbm [resolvable:$true] %s467
          %s469 = sshll.u32 [#allocation8], 4
          %s470 = int_to_ptr.vmem [resolvable:$true] %s469
          %475 = dma.hbm_to_vmem [thread:$0]  %s468, 256, %s470, [#allocation9], 64, 64, 4
        $region48: #{tpu_custom_call.1} parent=11 // pred_fallthru
          _
        // Predicated region
        $region49: #{tpu_custom_call.1} parent=11 // pred_check
          %p476 = pneg %p331
        $region50: #{tpu_custom_call.1} parent=11 // pred_check_branch
          %478 = sbr.rel (%p476) target = $region52
        $region51: #{tpu_custom_call.1} parent=11 // pred_region
          _
        $region52: #{tpu_custom_call.1} parent=11 // pred_fallthru
          _
        // Predicated region
        $region53: #{tpu_custom_call.1} parent=11 // pred_check
          %p479 = pneg %p352
        $region54: #{tpu_custom_call.1} parent=11 // pred_check_branch
          %481 = sbr.rel (%p479) target = $region56
        $region55: #{tpu_custom_call.1} parent=11 // pred_region
          _
        $region56: #{tpu_custom_call.1} parent=11 // pred_fallthru
          _
        // Predicated region
        $region57: #{tpu_custom_call.1} parent=11 // pred_check
          %p482 = pneg %p373
        $region58: #{tpu_custom_call.1} parent=11 // pred_check_branch
          %484 = sbr.rel (%p482) target = $region60
        $region59: #{tpu_custom_call.1} parent=11 // pred_region
          _
        $region60: #{tpu_custom_call.1} parent=11 // pred_fallthru
          _
      $region12: #{tpu_custom_call.1} parent=5 // pred_fallthru
        _
      %p485 = scmp.lt.s32.totalorder %s29, 2
      // Predicated region
      $region61: #{tpu_custom_call.1} parent=5 // pred_check
        %p486 = pneg %p485
      $region62: #{tpu_custom_call.1} parent=5 // pred_check_branch
        %488 = sbr.rel (%p486) target = $region64
      $region63: #{tpu_custom_call.1} parent=5 // pred_region
        // Predicated region
        $region65: #{tpu_custom_call.1} parent=63 // pred_check
          %p489 = pneg %p63
        $region66: #{tpu_custom_call.1} parent=63 // pred_check_branch
          %491 = sbr.rel (%p489) target = $region68
        $region67: #{tpu_custom_call.1} parent=63 // pred_region
          %p492 = scmp.lt.s32.totalorder %s36, 1
          %s493 = scalar_select %p492, %s36, 1
          %p494 = scmp.lt.s32.totalorder %s37, 0
          %s495 = scalar_select %p494, %s37, 0
          %s496 = sadd.s32 %s495, %s493
          %s497 = smul.addr %s496, 8
          %s498 = scalar_lea.vmem %s0, %s497
        $region68: #{tpu_custom_call.1} parent=63 // pred_fallthru
          _
        // Predicated region
        $region69: #{tpu_custom_call.1} parent=63 // pred_check
          %p499 = pneg %p89
        $region70: #{tpu_custom_call.1} parent=63 // pred_check_branch
          %501 = sbr.rel (%p499) target = $region72
        $region71: #{tpu_custom_call.1} parent=63 // pred_region
          %p502 = scmp.lt.s32.totalorder %s36, 1
          %s503 = scalar_select %p502, %s36, 1
          %s504 = smul.addr %s503, 4
          %s505 = smul.addr %s504, 4
          %s506 = scalar_lea.vmem %s1, %s505
        $region72: #{tpu_custom_call.1} parent=63 // pred_fallthru
          _
        // Predicated region
        $region73: #{tpu_custom_call.1} parent=63 // pred_check
          %p507 = pneg %p115
        $region74: #{tpu_custom_call.1} parent=63 // pred_check_branch
          %509 = sbr.rel (%p507) target = $region76
        $region75: #{tpu_custom_call.1} parent=63 // pred_region
          %s510 = sand.u32 %s105, 1
          %s511 = scalar_lea.sflag [#allocation3], %s510
          %s512 = sand.u32 %s105, 1
          %s513 = smul.addr %s512, 16
          %s514 = scalar_lea.vmem [#allocation2], %s513
          %516 = vsyncadd %s511, 0
          %s517 = smul.addr %s36, 4
          %s518 = smul.addr %s517, 4
          %s519 = scalar_lea.hbm %s2, %s518
          %s520 = sshll.u32 %s519, 4
          %s521 = int_to_ptr.hbm [resolvable:$true] %s520
          %s522 = sshll.u32 %s514, 4
          %s523 = int_to_ptr.vmem [resolvable:$true] %s522
          %528 = dma.hbm_to_vmem [thread:$0]  %s521, 256, %s523, %s511, 64, 64, 4
        $region76: #{tpu_custom_call.1} parent=63 // pred_fallthru
          _
      $region64: #{tpu_custom_call.1} parent=5 // pred_fallthru
        _
      %p529 = scmp.le.s32.totalorder 1, %s29
      %p530 = scmp.lt.s32.totalorder %s29, 3
      %p531 = pnand %p529, %p530
      %p532 = pneg %p531
      // Predicated region
      $region77: #{tpu_custom_call.1} parent=5 // pred_check
        _
      $region78: #{tpu_custom_call.1} parent=5 // pred_check_branch
        %534 = sbr.rel (%p531) target = $region80
      $region79: #{tpu_custom_call.1} parent=5 // pred_region
        %s535 = ssub.s32 %s29, 1
        %s536 = sand.u32 %s108, 1
        %s537 = scalar_lea.sflag [#allocation3], %s536
        %s538 = sand.u32 %s108, 1
        %s539 = smul.addr %s538, 16
        %s540 = scalar_lea.vmem [#allocation2], %s539
        // Predicated region
        $region81: #{tpu_custom_call.1} parent=79 // pred_check
          %p541 = pneg %p121
        $region82: #{tpu_custom_call.1} parent=79 // pred_check_branch
          %543 = sbr.rel (%p541) target = $region84
        $region83: #{tpu_custom_call.1} parent=79 // pred_region
          %545 = dma.done %s537, 256
        $region84: #{tpu_custom_call.1} parent=79 // pred_fallthru
          _
        // Predicated region
        $region85: #{tpu_custom_call.1} parent=79 // pred_check
          %p546 = pneg %p184
        $region86: #{tpu_custom_call.1} parent=79 // pred_check_branch
          %548 = sbr.rel (%p546) target = $region88
        $region87: #{tpu_custom_call.1} parent=79 // pred_region
          %550 = dma.done [#allocation6], 256
        $region88: #{tpu_custom_call.1} parent=79 // pred_fallthru
          _
        // Predicated region
        $region89: #{tpu_custom_call.1} parent=79 // pred_check
          %p551 = pneg %p226
        $region90: #{tpu_custom_call.1} parent=79 // pred_check_branch
          %553 = sbr.rel (%p551) target = $region92
        $region91: #{tpu_custom_call.1} parent=79 // pred_region
          %555 = dma.done [#allocation6], 256
        $region92: #{tpu_custom_call.1} parent=79 // pred_fallthru
          _
        // Predicated region
        $region93: #{tpu_custom_call.1} parent=79 // pred_check
          %p556 = pneg %p310
        $region94: #{tpu_custom_call.1} parent=79 // pred_check_branch
          %558 = sbr.rel (%p556) target = $region96
        $region95: #{tpu_custom_call.1} parent=79 // pred_region
          %560 = dma.done [#allocation9], 256
        $region96: #{tpu_custom_call.1} parent=79 // pred_fallthru
          _
        %p561 = scmp.lt.s32.totalorder %s38, 1
        %s562 = scalar_select %p561, %s38, 1
        %p563 = scmp.lt.s32.totalorder %s39, 0
        %s564 = scalar_select %p563, %s39, 0
        %s565 = sadd.s32 %s564, %s562
        %s566 = smul.addr %s565, 8
        %s567 = scalar_lea.vmem %s0, %s566
        %p568 = pneg %p69
        %p569 = pneg %p66
        %p570 = scmp.lt.s32.totalorder %s38, 1
        %s571 = scalar_select %p570, %s38, 1
        %s572 = smul.addr %s571, 4
        %s573 = smul.addr %s572, 4
        %s574 = scalar_lea.vmem %s1, %s573
        %p575 = pneg %p95
        %p576 = pneg %p92
        %s577 = sand.u32 %s108, 1
        %s578 = scalar_lea.sflag [#allocation3], %s577
        %s579 = sand.u32 %s108, 1
        %s580 = smul.addr %s579, 16
        %s581 = scalar_lea.vmem [#allocation2], %s580
        %p582 = pneg %p121
        %p583 = pneg %p118
        %p584 = pneg %p142
        %p585 = pneg %p139
        %p586 = pneg %p163
        %p587 = pneg %p160
        %p588 = pneg %p184
        %p589 = pneg %p181
        %p590 = pneg %p205
        %p591 = pneg %p202
        %p592 = pneg %p226
        %p593 = pneg %p223
        %p594 = pneg %p247
        %p595 = pneg %p244
        %p596 = pneg %p268
        %p597 = pneg %p265
        %p598 = pneg %p289
        %p599 = pneg %p286
        %p600 = pneg %p310
        %p601 = pneg %p307
        %p602 = pneg %p331
        %p603 = pneg %p328
        %p604 = pneg %p352
        %p605 = pneg %p349
        %p606 = pneg %p373
        %p607 = pneg %p370
        %p608 = pneg %p401
        %p609 = pneg %p398
        %s610 = sand.u32 %s388, 1
        %s611 = scalar_lea.sflag [#allocation4], %s610
        %s612 = sand.u32 %s388, 1
        %s613 = smul.addr %s612, 8
        %s614 = scalar_lea.vmem [#allocation10], %s613
        %p615 = scmp.lt.s32.totalorder %s38, 1
        %s616 = scalar_select %p615, %s38, 1
        %p617 = scmp.lt.s32.totalorder %s39, 0
        %s618 = scalar_select %p617, %s39, 0
        %s619 = sadd.s32 %s618, %s616
        %s620 = smul.addr %s619, 8
        %s621 = scalar_lea.vmem %s0, %s620
        %p622 = scmp.lt.s32.totalorder %s38, 1
        %s623 = scalar_select %p622, %s38, 1
        %s624 = smul.addr %s623, 4
        %s625 = smul.addr %s624, 4
        %s626 = scalar_lea.vmem %s1, %s625
        %v628 = vld [vmem:[%s621] sm:$0xff]
        %v629 = vld [vmem:[%s3] sm:$0x1]
        %v630 = vld [vmem:[%s4] sm:$0x1]
        %vm631 = vcmask 261120
        %v632 = vsel %vm631, %v628, 0.0
        %633 = vadd.xlane.f32.xlu0 %v632
        %v634 = vpop.xlane.xlu0 %633
        %v635 = vrcp.pop 32.0
        %v636 = vmul.f32 32.0, %v635
        %v637 = vsub.f32 1.0, %v636
        %v638 = vmul.f32 %v635, %v637
        %v639 = vadd.f32 %v635, %v638
        %vm640 = vweird.f32 %v635
        %v641 = vsel %vm640, %v635, %v639
        %v642 = vmul.f32 %v634, %v641
        %v643 = vsub.f32 %v628, %v642
        %v644 = vmul.f32 %v643, %v643
        %v645 = vsel %vm631, %v644, 0.0
        %646 = vadd.xlane.f32.xlu0 %v645
        %v647 = vpop.xlane.xlu0 %646
        %v648 = vmul.f32 %v647, %v641
        %v649 = vadd.f32 %v648, 1e-06
        %v650 = vrsqrt.pop %v649
        %v651 = vmul.f32 %v650, %v649
        %v652 = vmul.f32 %v651, %v650
        %v653 = vmul.f32 0.5, %v652
        %v654 = vsub.f32 1.5, %v653
        %v655 = vmul.f32 %v650, %v654
        %vm656 = vweird.f32 %v649
        %vm657 = vweird.f32 %v650
        %vm658 = vmor %vm656, %vm657
        %v659 = vsel %vm658, %v650, %v655
        %v660 = vmul.f32 %v643, %v659
        %v662 = vperm.slane %v629, 0
        %v664 = vmul.f32 %v660, %v662
        %v666 = vperm.slane %v630, 0
        %v668 = vadd.f32 %v664, %v666
        %v669 = vpack.c.bf16 %v668, %v668
        %v670 = vld [vmem:[#allocation5] sm:$0xf]
        %v671 = vld [vmem:[#allocation5 + $0x4] sm:$0xf]
        %v672 = vld [vmem:[#allocation5 + $0x8] sm:$0xf]
        %v673 = vld [vmem:[#allocation5 + $0xc] sm:$0xf]
        %v674 = vld [vmem:[%s6] sm:$0x1]
        %v676 = vperm.slane %v674, 0
        %v682 = vunpack.c.l.b16 %v670
        %v683 = vunpack.c.l.b16 %v671
        %v684 = vunpack.c.l.b16 %v672
        %v685 = vunpack.c.l.b16 %v673
        %v686 = vpack.c.b16 %v683, %v682
        %v687 = vpack.c.b16 %v685, %v684
        %v691 = vsel %vm631, %v669, 0
        %693 = vmatpush.bf16.msra.mxu0 0
        %694 = vmatpush.bf16.msra.mxu0 0
        %695 = vmatpush.bf16.msra.mxu0 0
        %696 = vmatpush.bf16.msra.mxu0 0
        %697 = vmatpush.bf16.msra.mxu0 0
        %698 = vmatpush.bf16.msra.mxu0 0
        %699 = vmatpush.bf16.msra.mxu0 %v687
        %700 = vmatpush.bf16.msra.mxu0 %v686
        %701 = vmatmul.bf16.gmra.mxu0 %v691
        %v702 = vpop.f32.mrf.mxu0
        %v703 = vadd.f32 %v676, %v702
        %v704 = vpop.f32.mrf.mxu0
        %705 = vdwg.mxu0
        %v706 = vpack.c.bf16 %v703, %v703
        %708 = vrot.lane.b32.xlu0 %v706, 120
        %v709 = vpop.permute.xlu0 %708
        %710 = vrot.lane.b32.xlu0 %v706, 112
        %v711 = vpop.permute.xlu0 %710
        %712 = vrot.lane.b32.xlu0 %v706, 104
        %v713 = vpop.permute.xlu0 %712
        %v716 = vpack.i.b16 %v709, %v706
        %v717 = vshrl.u32 %v706, 16
        %v718 = vshrl.u32 %v709, 16
        %v719 = vpack.i.b16 %v718, %v717
        %v722 = vpack.i.b16 %v713, %v711
        %v723 = vshrl.u32 %v711, 16
        %v724 = vshrl.u32 %v713, 16
        %v725 = vpack.i.b16 %v724, %v723
        %v728 = vunpack.c.l.s4 1983009808
        %v729 = vunpack.c.0.s8 %v728
        %v730 = vperm.slane %v716, %v729
        %v733 = vunpack.c.l.s4 1983009808
        %v734 = vunpack.c.0.s8 %v733
        %v735 = vperm.slane %v722, %v734
        %v736 = vrot.slane %v735, 4
        %vm737 = vcmask 1047556
        %v738 = vsel %vm737, %v736, %v730
        %v739 = vrot.slane %v730, 4
        %v740 = vsel %vm737, %v735, %v739
        %v742 = vunpack.c.l.s4 1934713408
        %v743 = vunpack.c.0.s8 %v742
        %v744 = vperm.slane %v738, %v743
        %v746 = vunpack.c.l.s4 1934713408
        %v747 = vunpack.c.0.s8 %v746
        %v748 = vperm.slane %v740, %v747
        %v749 = vrot.slane %v744, 4
        %v750 = vsel %vm737, 0, %v749
        %v751 = vrot.slane %v748, 4
        %v752 = vsel %vm737, 0, %v751
        %v755 = vunpack.c.l.s4 1983009808
        %v756 = vunpack.c.0.s8 %v755
        %v757 = vperm.slane %v719, %v756
        %v760 = vunpack.c.l.s4 1983009808
        %v761 = vunpack.c.0.s8 %v760
        %v762 = vperm.slane %v725, %v761
        %v763 = vrot.slane %v762, 4
        %v764 = vsel %vm737, %v763, %v757
        %v765 = vrot.slane %v757, 4
        %v766 = vsel %vm737, %v762, %v765
        %v768 = vunpack.c.l.s4 1934713408
        %v769 = vunpack.c.0.s8 %v768
        %v770 = vperm.slane %v764, %v769
        %v772 = vunpack.c.l.s4 1934713408
        %v773 = vunpack.c.0.s8 %v772
        %v774 = vperm.slane %v766, %v773
        %v775 = vrot.slane %v770, 4
        %v776 = vsel %vm737, 0, %v775
        %v777 = vrot.slane %v774, 4
        %v778 = vsel %vm737, 0, %v777
        %v779 = vsel %vm737, %v751, %v744
        %v781 = vunpack.c.l.s4 1983009808
        %v782 = vunpack.c.0.s8 %v781
        %v783 = vperm.slane %v779, %v782
        %v784 = vrot.slane %v752, 4
        %v785 = vsel %vm737, %v784, %v750
        %v787 = vunpack.c.l.s4 1983009808
        %v788 = vunpack.c.0.s8 %v787
        %v789 = vperm.slane %v785, %v788
        %v790 = vrot.slane %v789, 4
        %v791 = vsel %vm737, %v790, %v783
        %v793 = vunpack.c.l.s4 1934713408
        %v794 = vunpack.c.0.s8 %v793
        %v795 = vperm.slane %v791, %v794
        %v796 = vrot.slane %v795, 4
        %v797 = vsel %vm737, 0, %v796
        %v798 = vsel %vm737, %v777, %v770
        %v800 = vunpack.c.l.s4 1983009808
        %v801 = vunpack.c.0.s8 %v800
        %v802 = vperm.slane %v798, %v801
        %v803 = vrot.slane %v778, 4
        %v804 = vsel %vm737, %v803, %v776
        %v806 = vunpack.c.l.s4 1983009808
        %v807 = vunpack.c.0.s8 %v806
        %v808 = vperm.slane %v804, %v807
        %v809 = vrot.slane %v808, 4
        %v810 = vsel %vm737, %v809, %v802
        %v812 = vunpack.c.l.s4 1934713408
        %v813 = vunpack.c.0.s8 %v812
        %v814 = vperm.slane %v810, %v813
        %v815 = vrot.slane %v814, 4
        %v816 = vsel %vm737, 0, %v815
        %v819 = vpack.i.b16 %v814, %v795
        %v820 = vshrl.u32 %v795, 16
        %v821 = vshrl.u32 %v814, 16
        %v822 = vpack.i.b16 %v821, %v820
        %v825 = vpack.i.b16 %v816, %v797
        %v826 = vshrl.u32 %v797, 16
        %v827 = vshrl.u32 %v816, 16
        %v828 = vpack.i.b16 %v827, %v826
        %v829 = vld [vmem:[%s626] sm:$0xf]
        %v830 = vld [vmem:[%s626 + $0x4] sm:$0xf]
        %v831 = vld [vmem:[%s626 + $0x8] sm:$0xf]
        %v832 = vld [vmem:[%s626 + $0xc] sm:$0xf]
        %v833 = vld [vmem:[%s540] sm:$0xf]
        %v834 = vld [vmem:[%s540 + $0x4] sm:$0xf]
        %v835 = vld [vmem:[%s540 + $0x8] sm:$0xf]
        %v836 = vld [vmem:[%s540 + $0xc] sm:$0xf]
        %vm837 = vcmask 64512
        %v839 = vsel %vm837, %v819, 0
        %v842 = vsel %vm837, %v829, 0
        %844 = vmatpush.bf16.xpose.msra.mxu0 0
        %845 = vmatpush.bf16.xpose.msra.mxu0 0
        %846 = vmatpush.bf16.xpose.msra.mxu0 0
        %847 = vmatpush.bf16.xpose.msra.mxu0 0
        %848 = vmatpush.bf16.xpose.msra.mxu0 0
        %849 = vmatpush.bf16.xpose.msra.mxu0 0
        %850 = vmatpush.bf16.xpose.msra.mxu0 0
        %851 = vmatpush.bf16.xpose.msra.mxu0 %v842
        %852 = vmatmul.bf16.gmra.mxu0 %v839
        %v853 = vpop.f32.mrf.mxu0
        %v854 = vadd.f32 0.0, %v853
        %v855 = vpop.f32.mrf.mxu0
        %856 = vdwg.mxu0
        %v858 = vsel %vm837, %v822, 0
        %v861 = vsel %vm837, %v830, 0
        %863 = vmatpush.bf16.xpose.msra.mxu0 0
        %864 = vmatpush.bf16.xpose.msra.mxu0 0
        %865 = vmatpush.bf16.xpose.msra.mxu0 0
        %866 = vmatpush.bf16.xpose.msra.mxu0 0
        %867 = vmatpush.bf16.xpose.msra.mxu0 0
        %868 = vmatpush.bf16.xpose.msra.mxu0 0
        %869 = vmatpush.bf16.xpose.msra.mxu0 0
        %870 = vmatpush.bf16.xpose.msra.mxu0 %v861
        %871 = vmatmul.bf16.gmra.mxu0 %v858
        %v872 = vpop.f32.mrf.mxu0
        %v873 = vadd.f32 0.0, %v872
        %v874 = vpop.f32.mrf.mxu0
        %875 = vdwg.mxu0
        %v877 = vsel %vm837, %v825, 0
        %v880 = vsel %vm837, %v831, 0
        %882 = vmatpush.bf16.xpose.msra.mxu0 0
        %883 = vmatpush.bf16.xpose.msra.mxu0 0
        %884 = vmatpush.bf16.xpose.msra.mxu0 0
        %885 = vmatpush.bf16.xpose.msra.mxu0 0
        %886 = vmatpush.bf16.xpose.msra.mxu0 0
        %887 = vmatpush.bf16.xpose.msra.mxu0 0
        %888 = vmatpush.bf16.xpose.msra.mxu0 0
        %889 = vmatpush.bf16.xpose.msra.mxu0 %v880
        %890 = vmatmul.bf16.gmra.mxu0 %v877
        %v891 = vpop.f32.mrf.mxu0
        %v892 = vadd.f32 0.0, %v891
        %v893 = vpop.f32.mrf.mxu0
        %894 = vdwg.mxu0
        %v896 = vsel %vm837, %v828, 0
        %v899 = vsel %vm837, %v832, 0
        %901 = vmatpush.bf16.xpose.msra.mxu0 0
        %902 = vmatpush.bf16.xpose.msra.mxu0 0
        %903 = vmatpush.bf16.xpose.msra.mxu0 0
        %904 = vmatpush.bf16.xpose.msra.mxu0 0
        %905 = vmatpush.bf16.xpose.msra.mxu0 0
        %906 = vmatpush.bf16.xpose.msra.mxu0 0
        %907 = vmatpush.bf16.xpose.msra.mxu0 0
        %908 = vmatpush.bf16.xpose.msra.mxu0 %v899
        %909 = vmatmul.bf16.gmra.mxu0 %v896
        %v910 = vpop.f32.mrf.mxu0
        %v911 = vadd.f32 0.0, %v910
        %v912 = vpop.f32.mrf.mxu0
        %913 = vdwg.mxu0
        %v914 = vsel %vm837, %v854, -inf
        %915 = vmax.xlane.f32.xlu0 %v914
        %v916 = vpop.xlane.xlu0 %915
        %v917 = vsel %vm837, %v873, -inf
        %918 = vmax.xlane.f32.xlu0 %v917
        %v919 = vpop.xlane.xlu0 %918
        %v920 = vsel %vm837, %v892, -inf
        %921 = vmax.xlane.f32.xlu0 %v920
        %v922 = vpop.xlane.xlu0 %921
        %v923 = vsel %vm837, %v911, -inf
        %924 = vmax.xlane.f32.xlu0 %v923
        %v925 = vpop.xlane.xlu0 %924
        %v926 = vsub.f32 %v854, %v916
        %v927 = vsub.f32 %v873, %v919
        %v928 = vsub.f32 %v892, %v922
        %v929 = vsub.f32 %v911, %v925
        %v930 = vmul.f32 %v926, 1.442695
        %v931 = vpow.pop %v930
        %v932 = vmul.f32 %v927, 1.442695
        %v933 = vpow.pop %v932
        %v934 = vmul.f32 %v928, 1.442695
        %v935 = vpow.pop %v934
        %v936 = vmul.f32 %v929, 1.442695
        %v937 = vpow.pop %v936
        %v938 = vsel %vm837, %v931, 0.0
        %939 = vadd.xlane.f32.xlu0 %v938
        %v940 = vpop.xlane.xlu0 %939
        %v941 = vsel %vm837, %v933, 0.0
        %942 = vadd.xlane.f32.xlu0 %v941
        %v943 = vpop.xlane.xlu0 %942
        %v944 = vsel %vm837, %v935, 0.0
        %945 = vadd.xlane.f32.xlu0 %v944
        %v946 = vpop.xlane.xlu0 %945
        %v947 = vsel %vm837, %v937, 0.0
        %948 = vadd.xlane.f32.xlu0 %v947
        %v949 = vpop.xlane.xlu0 %948
        %v950 = vrcp.pop %v940
        %v951 = vrcp.pop %v943
        %v952 = vrcp.pop %v946
        %v953 = vrcp.pop %v949
        %v954 = vpack.c.bf16 %v931, %v931
        %v955 = vpack.c.bf16 %v933, %v933
        %v956 = vpack.c.bf16 %v935, %v935
        %v957 = vpack.c.bf16 %v937, %v937
        %v959 = vsel %vm837, %v954, 0
        %vm961 = vcmask 1043456
        %v963 = vsel %vm961, %v833, 0
        %965 = vmatpush.bf16.msra.mxu0 0
        %966 = vmatpush.bf16.msra.mxu0 0
        %967 = vmatpush.bf16.msra.mxu0 0
        %968 = vmatpush.bf16.msra.mxu0 0
        %969 = vmatpush.bf16.msra.mxu0 0
        %970 = vmatpush.bf16.msra.mxu0 0
        %971 = vmatpush.bf16.msra.mxu0 0
        %972 = vmatpush.bf16.msra.mxu0 %v963
        %973 = vmatmul.bf16.gmra.mxu0 %v959
        %v974 = vpop.f32.mrf.mxu0
        %v975 = vadd.f32 0.0, %v974
        %v976 = vpop.f32.mrf.mxu0
        %977 = vdwg.mxu0
        %v979 = vsel %vm837, %v955, 0
        %v982 = vsel %vm961, %v834, 0
        %984 = vmatpush.bf16.msra.mxu0 0
        %985 = vmatpush.bf16.msra.mxu0 0
        %986 = vmatpush.bf16.msra.mxu0 0
        %987 = vmatpush.bf16.msra.mxu0 0
        %988 = vmatpush.bf16.msra.mxu0 0
        %989 = vmatpush.bf16.msra.mxu0 0
        %990 = vmatpush.bf16.msra.mxu0 0
        %991 = vmatpush.bf16.msra.mxu0 %v982
        %992 = vmatmul.bf16.gmra.mxu0 %v979
        %v993 = vpop.f32.mrf.mxu0
        %v994 = vadd.f32 0.0, %v993
        %v995 = vpop.f32.mrf.mxu0
        %996 = vdwg.mxu0
        %v998 = vsel %vm837, %v956, 0
        %v1001 = vsel %vm961, %v835, 0
        %1003 = vmatpush.bf16.msra.mxu0 0
        %1004 = vmatpush.bf16.msra.mxu0 0
        %1005 = vmatpush.bf16.msra.mxu0 0
        %1006 = vmatpush.bf16.msra.mxu0 0
        %1007 = vmatpush.bf16.msra.mxu0 0
        %1008 = vmatpush.bf16.msra.mxu0 0
        %1009 = vmatpush.bf16.msra.mxu0 0
        %1010 = vmatpush.bf16.msra.mxu0 %v1001
        %1011 = vmatmul.bf16.gmra.mxu0 %v998
        %v1012 = vpop.f32.mrf.mxu0
        %v1013 = vadd.f32 0.0, %v1012
        %v1014 = vpop.f32.mrf.mxu0
        %1015 = vdwg.mxu0
        %v1017 = vsel %vm837, %v957, 0
        %v1020 = vsel %vm961, %v836, 0
        %1022 = vmatpush.bf16.msra.mxu0 0
        %1023 = vmatpush.bf16.msra.mxu0 0
        %1024 = vmatpush.bf16.msra.mxu0 0
        %1025 = vmatpush.bf16.msra.mxu0 0
        %1026 = vmatpush.bf16.msra.mxu0 0
        %1027 = vmatpush.bf16.msra.mxu0 0
        %1028 = vmatpush.bf16.msra.mxu0 0
        %1029 = vmatpush.bf16.msra.mxu0 %v1020
        %1030 = vmatmul.bf16.gmra.mxu0 %v1017
        %v1031 = vpop.f32.mrf.mxu0
        %v1032 = vadd.f32 0.0, %v1031
        %v1033 = vpop.f32.mrf.mxu0
        %1034 = vdwg.mxu0
        %v1035 = vmul.f32 %v975, %v950
        %v1036 = vmul.f32 %v994, %v951
        %v1037 = vmul.f32 %v1013, %v952
        %v1038 = vmul.f32 %v1032, %v953
        %v1039 = vrot.slane %v1037, 4
        %vm1040 = vcmask 1047556
        %v1041 = vsel %vm1040, %v1039, %v1035
        %v1042 = vrot.slane %v1035, 4
        %v1043 = vsel %vm1040, %v1037, %v1042
        %v1045 = vunpack.c.l.s4 1983009808
        %v1046 = vunpack.c.0.s8 %v1045
        %v1047 = vperm.slane %v1041, %v1046
        %v1049 = vunpack.c.l.s4 1983009808
        %v1050 = vunpack.c.0.s8 %v1049
        %v1051 = vperm.slane %v1043, %v1050
        %v1052 = vrot.slane %v1038, 4
        %v1053 = vsel %vm1040, %v1052, %v1036
        %v1054 = vrot.slane %v1036, 4
        %v1055 = vsel %vm1040, %v1038, %v1054
        %v1057 = vunpack.c.l.s4 1983009808
        %v1058 = vunpack.c.0.s8 %v1057
        %v1059 = vperm.slane %v1053, %v1058
        %v1061 = vunpack.c.l.s4 1983009808
        %v1062 = vunpack.c.0.s8 %v1061
        %v1063 = vperm.slane %v1055, %v1062
        %v1064 = vrot.slane %v1059, 4
        %v1065 = vsel %vm1040, %v1064, %v1047
        %v1066 = vrot.slane %v1047, 4
        %v1067 = vsel %vm1040, %v1059, %v1066
        %v1069 = vunpack.c.l.s4 1934713408
        %v1070 = vunpack.c.0.s8 %v1069
        %v1071 = vperm.slane %v1065, %v1070
        %v1073 = vunpack.c.l.s4 1934713408
        %v1074 = vunpack.c.0.s8 %v1073
        %v1075 = vperm.slane %v1067, %v1074
        %v1076 = vrot.slane %v1063, 4
        %v1077 = vsel %vm1040, %v1076, %v1051
        %v1078 = vrot.slane %v1051, 4
        %v1079 = vsel %vm1040, %v1063, %v1078
        %v1081 = vunpack.c.l.s4 1934713408
        %v1082 = vunpack.c.0.s8 %v1081
        %v1083 = vperm.slane %v1077, %v1082
        %v1085 = vunpack.c.l.s4 1934713408
        %v1086 = vunpack.c.0.s8 %v1085
        %v1087 = vperm.slane %v1079, %v1086
        %v1088 = vrot.slane %v1071, 4
        %v1089 = vsel %vm1040, 0.0, %v1088
        %v1090 = vrot.slane %v1075, 4
        %v1091 = vsel %vm1040, 0.0, %v1090
        %v1092 = vrot.slane %v1083, 4
        %v1093 = vsel %vm1040, 0.0, %v1092
        %v1094 = vrot.slane %v1087, 4
        %v1095 = vsel %vm1040, 0.0, %v1094
        %v1096 = vsel %vm1040, %v1090, %v1071
        %v1098 = vunpack.c.l.s4 1983009808
        %v1099 = vunpack.c.0.s8 %v1098
        %v1100 = vperm.slane %v1096, %v1099
        %v1101 = vrot.slane %v1091, 4
        %v1102 = vsel %vm1040, %v1101, %v1089
        %v1104 = vunpack.c.l.s4 1983009808
        %v1105 = vunpack.c.0.s8 %v1104
        %v1106 = vperm.slane %v1102, %v1105
        %v1107 = vsel %vm1040, %v1094, %v1083
        %v1109 = vunpack.c.l.s4 1983009808
        %v1110 = vunpack.c.0.s8 %v1109
        %v1111 = vperm.slane %v1107, %v1110
        %v1112 = vrot.slane %v1095, 4
        %v1113 = vsel %vm1040, %v1112, %v1093
        %v1115 = vunpack.c.l.s4 1983009808
        %v1116 = vunpack.c.0.s8 %v1115
        %v1117 = vperm.slane %v1113, %v1116
        %v1118 = vrot.slane %v1106, 4
        %v1119 = vsel %vm1040, %v1118, %v1100
        %v1120 = vrot.slane %v1100, 4
        %v1121 = vsel %vm1040, %v1106, %v1120
        %v1123 = vunpack.c.l.s4 1934713408
        %v1124 = vunpack.c.0.s8 %v1123
        %v1125 = vperm.slane %v1119, %v1124
        %v1127 = vunpack.c.l.s4 1934713408
        %v1128 = vunpack.c.0.s8 %v1127
        %v1129 = vperm.slane %v1121, %v1128
        %v1130 = vrot.slane %v1117, 4
        %v1131 = vsel %vm1040, %v1130, %v1111
        %v1132 = vrot.slane %v1111, 4
        %v1133 = vsel %vm1040, %v1117, %v1132
        %v1135 = vunpack.c.l.s4 1934713408
        %v1136 = vunpack.c.0.s8 %v1135
        %v1137 = vperm.slane %v1131, %v1136
        %v1139 = vunpack.c.l.s4 1934713408
        %v1140 = vunpack.c.0.s8 %v1139
        %v1141 = vperm.slane %v1133, %v1140
        %v1142 = vrot.slane %v1137, 4
        %v1143 = vsel %vm1040, %v1142, %v1125
        %v1144 = vrot.slane %v1125, 4
        %v1145 = vsel %vm1040, %v1137, %v1144
        %v1146 = vrot.slane %v1141, 4
        %v1147 = vsel %vm1040, %v1146, %v1129
        %v1148 = vrot.slane %v1129, 4
        %v1149 = vsel %vm1040, %v1141, %v1148
        %1151 = vrot.lane.b32.xlu0 %v1145, 8
        %v1152 = vpop.permute.xlu0 %1151
        %1155 = vrot.lane.b32.xlu0 %v1147, 16
        %v1156 = vpop.permute.xlu0 %1155
        %1159 = vrot.lane.b32.xlu0 %v1149, 24
        %v1160 = vpop.permute.xlu0 %1159
        %v1162 = vsel %vm837, %v1143, %v1152
        %vm1163 = vcmask 130048
        %v1164 = vsel %vm1163, %v1162, %v1156
        %vm1165 = vcmask 195584
        %v1166 = vsel %vm1165, %v1164, %v1160
        %v1167 = vpack.c.bf16 %v1166, %v1166
        %v1168 = vld [vmem:[#allocation7] sm:$0xf]
        %v1169 = vld [vmem:[#allocation7 + $0x4] sm:$0xf]
        %v1170 = vld [vmem:[#allocation7 + $0x8] sm:$0xf]
        %v1171 = vld [vmem:[#allocation7 + $0xc] sm:$0xf]
        %v1172 = vld [vmem:[%s8] sm:$0x1]
        %v1174 = vperm.slane %v1172, 0
        %v1180 = vunpack.c.l.b16 %v1168
        %v1181 = vunpack.c.l.b16 %v1169
        %v1182 = vunpack.c.l.b16 %v1170
        %v1183 = vunpack.c.l.b16 %v1171
        %v1184 = vpack.c.b16 %v1181, %v1180
        %v1185 = vpack.c.b16 %v1183, %v1182
        %v1189 = vsel %vm631, %v1167, 0
        %1191 = vmatpush.bf16.msra.mxu0 0
        %1192 = vmatpush.bf16.msra.mxu0 0
        %1193 = vmatpush.bf16.msra.mxu0 0
        %1194 = vmatpush.bf16.msra.mxu0 0
        %1195 = vmatpush.bf16.msra.mxu0 0
        %1196 = vmatpush.bf16.msra.mxu0 0
        %1197 = vmatpush.bf16.msra.mxu0 %v1185
        %1198 = vmatpush.bf16.msra.mxu0 %v1184
        %1199 = vmatmul.bf16.gmra.mxu0 %v1189
        %v1200 = vpop.f32.mrf.mxu0
        %v1201 = vadd.f32 %v1174, %v1200
        %v1202 = vpop.f32.mrf.mxu0
        %1203 = vdwg.mxu0
        %v1204 = vadd.f32 %v1201, %v628
        %v1205 = vld [vmem:[%s9] sm:$0x1]
        %v1206 = vld [vmem:[%s10] sm:$0x1]
        %v1207 = vsel %vm631, %v1204, 0.0
        %1208 = vadd.xlane.f32.xlu0 %v1207
        %v1209 = vpop.xlane.xlu0 %1208
        %v1210 = vmul.f32 %v1209, %v641
        %v1211 = vsub.f32 %v1204, %v1210
        %v1212 = vmul.f32 %v1211, %v1211
        %v1213 = vsel %vm631, %v1212, 0.0
        %1214 = vadd.xlane.f32.xlu0 %v1213
        %v1215 = vpop.xlane.xlu0 %1214
        %v1216 = vmul.f32 %v1215, %v641
        %v1217 = vadd.f32 %v1216, 1e-06
        %v1218 = vrsqrt.pop %v1217
        %v1219 = vmul.f32 %v1218, %v1217
        %v1220 = vmul.f32 %v1219, %v1218
        %v1221 = vmul.f32 0.5, %v1220
        %v1222 = vsub.f32 1.5, %v1221
        %v1223 = vmul.f32 %v1218, %v1222
        %vm1224 = vweird.f32 %v1217
        %vm1225 = vweird.f32 %v1218
        %vm1226 = vmor %vm1224, %vm1225
        %v1227 = vsel %vm1226, %v1218, %v1223
        %v1228 = vmul.f32 %v1211, %v1227
        %v1230 = vperm.slane %v1205, 0
        %v1232 = vmul.f32 %v1228, %v1230
        %v1234 = vperm.slane %v1206, 0
        %v1236 = vadd.f32 %v1232, %v1234
        %v1237 = vpack.c.bf16 %v1236, %v1236
        %v1238 = vld [vmem:[#allocation8] sm:$0xf]
        %v1239 = vld [vmem:[#allocation8 + $0x4] sm:$0xf]
        %v1240 = vld [vmem:[#allocation8 + $0x8] sm:$0xf]
        %v1241 = vld [vmem:[#allocation8 + $0xc] sm:$0xf]
        %v1242 = vld [vmem:[%s12] sm:$0x1]
        %v1244 = vperm.slane %v1242, 0
        %v1250 = vunpack.c.l.b16 %v1238
        %v1251 = vunpack.c.l.b16 %v1239
        %v1252 = vunpack.c.l.b16 %v1240
        %v1253 = vunpack.c.l.b16 %v1241
        %v1254 = vpack.c.b16 %v1251, %v1250
        %v1255 = vpack.c.b16 %v1253, %v1252
        %v1259 = vsel %vm631, %v1237, 0
        %1261 = vmatpush.bf16.msra.mxu0 0
        %1262 = vmatpush.bf16.msra.mxu0 0
        %1263 = vmatpush.bf16.msra.mxu0 0
        %1264 = vmatpush.bf16.msra.mxu0 0
        %1265 = vmatpush.bf16.msra.mxu0 0
        %1266 = vmatpush.bf16.msra.mxu0 0
        %1267 = vmatpush.bf16.msra.mxu0 %v1255
        %1268 = vmatpush.bf16.msra.mxu0 %v1254
        %1269 = vmatmul.bf16.gmra.mxu0 %v1259
        %v1270 = vpop.f32.mrf.mxu0
        %v1271 = vadd.f32 %v1244, %v1270
        %v1272 = vpop.f32.mrf.mxu0
        %1273 = vdwg.mxu0
        %v1274 = vmul.f32 %v1271, 0.5
        %v1275 = vrcp.pop 1.4142135
        %v1276 = vmul.f32 1.4142135, %v1275
        %v1277 = vsub.f32 1.0, %v1276
        %v1278 = vmul.f32 %v1275, %v1277
        %v1279 = vadd.f32 %v1275, %v1278
        %vm1280 = vweird.f32 %v1275
        %v1281 = vsel %vm1280, %v1275, %v1279
        %v1282 = vmul.f32 %v1271, %v1281
        %v1283 = vmul.f32 %v1282, %v1282
        %v1284 = vmin.f32 16.0, %v1283
        %v1285 = vmul.f32 %v1284, 2.1237322e-06
        %v1286 = vadd.f32 %v1285, 0.00028619796
        %v1287 = vmul.f32 %v1284, %v1286
        %v1288 = vadd.f32 %v1287, 0.0036580483
        %v1289 = vmul.f32 %v1284, %v1288
        %v1290 = vadd.f32 %v1289, 0.05243302
        %v1291 = vmul.f32 %v1284, %v1290
        %v1292 = vadd.f32 %v1291, 0.18741608
        %v1293 = vmul.f32 %v1284, %v1292
        %v1294 = vadd.f32 %v1293, 1.1283791
        %v1295 = vmul.f32 %v1282, %v1294
        %v1296 = vmul.f32 %v1284, 3.8918573e-05
        %v1297 = vadd.f32 %v1296, 0.001143296
        %v1298 = vmul.f32 %v1284, %v1297
        %v1299 = vadd.f32 %v1298, 0.014752088
        %v1300 = vmul.f32 %v1284, %v1299
        %v1301 = vadd.f32 %v1300, 0.112945676
        %v1302 = vmul.f32 %v1284, %v1301
        %v1303 = vadd.f32 %v1302, 0.4994258
        %v1304 = vmul.f32 %v1284, %v1303
        %v1305 = vadd.f32 %v1304, 1.0
        %v1306 = vrcp.pop %v1305
        %v1307 = vmul.f32 %v1305, %v1306
        %v1308 = vsub.f32 1.0, %v1307
        %v1309 = vmul.f32 %v1306, %v1308
        %v1310 = vadd.f32 %v1306, %v1309
        %vm1311 = vweird.f32 %v1305
        %vm1312 = vweird.f32 %v1306
        %vm1313 = vmor %vm1311, %vm1312
        %v1314 = vsel %vm1313, %v1306, %v1310
        %v1315 = vand.u32 2147483647, %v1305
        %vm1316 = vcmp.eq.f32.partialorder %v1315, 8.507059e+37
        %v1317 = vand.u32 %v1305, 2147483648
        %v1318 = vor.u32 1.1754944e-38, %v1317
        %v1319 = vsel %vm1316, %v1318, %v1314
        %v1320 = vmul.f32 %v1295, %v1319
        %v1321 = vmin.f32 %v1320, 1.0
        %v1322 = vmax.f32 %v1321, -1.0
        %v1323 = vadd.f32 %v1322, 1.0
        %v1324 = vmul.f32 %v1274, %v1323
        %v1325 = vpack.c.bf16 %v1324, %v1324
        %v1326 = vld [vmem:[%s13] sm:$0xf]
        %v1327 = vld [vmem:[%s13 + $0x4] sm:$0xf]
        %v1328 = vld [vmem:[%s13 + $0x8] sm:$0xf]
        %v1329 = vld [vmem:[%s13 + $0xc] sm:$0xf]
        %v1330 = vld [vmem:[%s13 + $0x10] sm:$0xf]
        %v1331 = vld [vmem:[%s13 + $0x14] sm:$0xf]
        %v1332 = vld [vmem:[%s13 + $0x18] sm:$0xf]
        %v1333 = vld [vmem:[%s13 + $0x1c] sm:$0xf]
        %v1334 = vld [vmem:[%s14] sm:$0x1]
        %v1336 = vperm.slane %v1334, 0
        %v1346 = vunpack.c.l.b16 %v1326
        %v1347 = vunpack.c.l.b16 %v1327
        %v1348 = vunpack.c.l.b16 %v1328
        %v1349 = vunpack.c.l.b16 %v1329
        %v1350 = vunpack.c.l.b16 %v1330
        %v1351 = vunpack.c.l.b16 %v1331
        %v1352 = vunpack.c.l.b16 %v1332
        %v1353 = vunpack.c.l.b16 %v1333
        %v1354 = vpack.c.b16 %v1347, %v1346
        %v1355 = vpack.c.b16 %v1349, %v1348
        %v1356 = vpack.c.b16 %v1351, %v1350
        %v1357 = vpack.c.b16 %v1353, %v1352
        %vm1362 = vcmask 523264
        %v1364 = vsel %vm1362, %v1325, 0
        %1366 = vmatpush.bf16.msra.mxu0 0
        %1367 = vmatpush.bf16.msra.mxu0 0
        %1368 = vmatpush.bf16.msra.mxu0 0
        %1369 = vmatpush.bf16.msra.mxu0 0
        %1370 = vmatpush.bf16.msra.mxu0 %v1357
        %1371 = vmatpush.bf16.msra.mxu0 %v1356
        %1372 = vmatpush.bf16.msra.mxu0 %v1355
        %1373 = vmatpush.bf16.msra.mxu0 %v1354
        %1374 = vmatmul.bf16.gmra.mxu0 %v1364
        %v1375 = vpop.f32.mrf.mxu0
        %v1376 = vadd.f32 %v1336, %v1375
        %v1377 = vpop.f32.mrf.mxu0
        %1378 = vdwg.mxu0
        %v1379 = vadd.f32 %v1204, %v1376
        %1380 = vst.msk [vmem:[%s614] sm:$0xff] %vm631, %v1379
        %s1381 = sand.u32 %s388, 1
        %s1382 = scalar_lea.sflag [#allocation4], %s1381
        %s1383 = sand.u32 %s388, 1
        %s1384 = smul.addr %s1383, 8
        %s1385 = scalar_lea.vmem [#allocation10], %s1384
        // Predicated region
        $region97: #{tpu_custom_call.1} parent=79 // pred_check
          %p1386 = pneg %p398
        $region98: #{tpu_custom_call.1} parent=79 // pred_check_branch
          %1388 = sbr.rel (%p1386) target = $region100
        $region99: #{tpu_custom_call.1} parent=79 // pred_region
          %1390 = vsyncadd %s1382, 0
          %s1391 = sadd.s32 %s39, %s38
          %s1392 = smul.addr %s1391, 8
          %s1393 = scalar_lea.hbm %s15, %s1392
          %s1395 = sshll.u32 %s1385, 4
          %s1396 = int_to_ptr.vmem [resolvable:$true] %s1395
          %s1397 = sshll.u32 %s1393, 4
          %s1398 = int_to_ptr.hbm [resolvable:$true] %s1397
          %1400 = dma.vmem_to_hbm [thread:$0]  %s1396, 128, %s1398, %s1382
        $region100: #{tpu_custom_call.1} parent=79 // pred_fallthru
          _
      $region80: #{tpu_custom_call.1} parent=5 // pred_fallthru
        _
      %p1401 = scmp.le.s32.totalorder 2, %s29
      // Predicated region
      $region101: #{tpu_custom_call.1} parent=5 // pred_check
        %p1402 = pneg %p1401
      $region102: #{tpu_custom_call.1} parent=5 // pred_check_branch
        %1404 = sbr.rel (%p1402) target = $region104
      $region103: #{tpu_custom_call.1} parent=5 // pred_region
        %s1405 = ssub.s32 %s29, 2
        // Predicated region
        $region105: #{tpu_custom_call.1} parent=103 // pred_check
          %p1406 = pneg %p404
        $region106: #{tpu_custom_call.1} parent=103 // pred_check_branch
          %1408 = sbr.rel (%p1406) target = $region108
        $region107: #{tpu_custom_call.1} parent=103 // pred_region
          %s1409 = sand.u32 %s389, 1
          %s1410 = scalar_lea.sflag [#allocation4], %s1409
          %s1411 = sand.u32 %s389, 1
          %s1412 = smul.addr %s1411, 8
          %s1413 = scalar_lea.vmem [#allocation10], %s1412
          %1415 = dma.done %s1410, 128
        $region108: #{tpu_custom_call.1} parent=103 // pred_fallthru
          _
      $region104: #{tpu_custom_call.1} parent=5 // pred_fallthru
        _
    $region6: #{tpu_custom_call.1} parent=1 // loop_footer
      %s33 = sadd.s32 1, %s29
    $region7: #{tpu_custom_call.1} parent=1 // loop_footer_branch
      %28 = sbr.rel target = $region3
    $region8: #{tpu_custom_call.1} parent=1 // loop_exit
      _
    %1416 = vsyncpa [#allocation3], 1
    %s1417 = scalar_lea.sflag [#allocation3], 1
    %1418 = vsyncpa %s1417, 1
    %1419 = vsyncpa [#allocation6], 1
    %1420 = vsyncpa [#allocation9], 1
    %1421 = vsyncpa [#allocation4], 1
    %s1422 = scalar_lea.sflag [#allocation4], 1
    %1423 = vsyncpa %s1422, 1

</llo_original>
